<compile_context>
chip_gen: v7x
topology: tpu7x:2x2x1
jax: 0.10.0
libtpu: 0.0.40
codegen_flags: <defaults>
</compile_context>

<pallas_src>
import jax
import jax.numpy as jnp
from jax.experimental import pallas as pl
from jax.experimental.pallas import tpu as pltpu

# --- small, module-consistent shapes -----------------------------------------
B         = 2
C         = 128             # stands in for inchannels4 = 1024
N_HEADS   = 8
HC        = C // N_HEADS    # per-head key/value channels
T, H, W   = 2, 4, 4
S         = T * H * W       # flattened spatio-temporal positions
CLASS_NB  = 16              # stands in for class_nb = 101
CLASS_PAD = 128             # lane-dense padded classifier width
LN_EPS    = 1e-5
INV_C     = 1.0 / C
INV_S     = 1.0 / S

BF16 = jnp.bfloat16
F32  = jnp.float32


# --- kernel (one batch element per grid step) ---------------------------------
def transfusion_head_kernel(
    x_rgb_ref, x_flow_ref,            # (1, S, C) per-batch blocks, f32
    head_mask_ref,                    # (C, C) f32 block-diagonal head mask
    wqkv_r_ref, bqkv_r_ref,           # (C, 3C) bf16, (1, 3C) f32
    wrep_r_ref, brep_r_ref,           # (C, C)  bf16, (1, C)  f32
    wqkv_f_ref, bqkv_f_ref,
    wrep_f_ref, brep_f_ref,
    w1_ref, b1_ref,                   # PositionwiseConv w1
    w2_ref, b2_ref,                   # PositionwiseConv w2
    ln_g_ref, ln_b_ref,               # (1, C) f32
    lin_w_ref, lin_b_ref,             # (C, CLASS_PAD) bf16, (1, CLASS_PAD) f32
    out_ref,                          # (1, 1, CLASS_PAD) f32
):
    head_mask = head_mask_ref[...]                 # (C, C) 0/1 in f32
    head_mask_bf = head_mask.astype(BF16)          # exact (values are 0/1)

    def efficient_attention(x, wqkv, bqkv, wrep, brep):
        # x: (S, C) f32 — one stream of one batch element.
        x_bf = x.astype(BF16)

        # Fused Q/K/V projection: one lane-dense (S, C) x (C, 3C) bf16 MXU pass.
        qkv = jnp.dot(x_bf, wqkv, preferred_element_type=F32) + bqkv   # (S, 3C)
        q = qkv[:, 0 * C:1 * C]
        k = qkv[:, 1 * C:2 * C]
        v = qkv[:, 2 * C:3 * C]

        # K softmax over positions (torch dim=2): per-channel, exact reciprocal
        # (tiny, off the MXU critical path).
        k_max = jnp.max(k, axis=0, keepdims=True)
        e_k = jnp.exp(k - k_max)
        k_sm = e_k / jnp.sum(e_k, axis=0, keepdims=True)               # (S, C)

        # Q softmax over its head's channels (torch dim=1): shift by the per-row
        # global max (shift-invariant => identical result); per-head
        # denominators via one e_q @ block_diag(ones) matmul.
        q_max = jnp.max(q, axis=-1, keepdims=True)
        e_q = jnp.exp(q - q_max)                                        # (S, C)
        denom = jnp.dot(e_q.astype(BF16), head_mask_bf,
                        preferred_element_type=F32)                     # (S, C)
        q_sm = e_q * pl.reciprocal(denom, approx=True)

        # Context: k_sm^T @ v, (C,S)x(S,C); the block-diagonal mask kills
        # cross-head terms, so this equals the 8 per-head (HC x HC) matmuls.
        ctx = jax.lax.dot_general(
            k_sm.astype(BF16), v.astype(BF16),
            dimension_numbers=(((0,), (0,)), ((), ())),
            preferred_element_type=F32)                                 # (C, C)
        ctx = ctx * head_mask
        att = jnp.dot(q_sm.astype(BF16), ctx.astype(BF16),
                      preferred_element_type=F32)                       # (S, C)

        # Reprojection + residual (kept flat / lane-dense, no scratch round-trip).
        rep = jnp.dot(att.astype(BF16), wrep, preferred_element_type=F32) + brep
        return rep + x                                                  # (S, C)

    x_rgb = x_rgb_ref[0]                                                # (S, C)
    x_flow = x_flow_ref[0]

    rgb_out = efficient_attention(x_rgb, wqkv_r_ref[...], bqkv_r_ref[...],
                                  wrep_r_ref[...], brep_r_ref[...])
    flow_out = efficient_attention(x_flow, wqkv_f_ref[...], bqkv_f_ref[...],
                                   wrep_f_ref[...], brep_f_ref[...])
    add_attn = rgb_out + flow_out                                       # (S, C)

    # PositionwiseConv: conv1x1 -> ReLU -> conv1x1, residual, LayerNorm over C.
    h1 = jnp.maximum(
        jnp.dot(add_attn.astype(BF16), w1_ref[...],
                preferred_element_type=F32) + b1_ref[...], 0.0)
    h2 = jnp.dot(h1.astype(BF16), w2_ref[...],
                 preferred_element_type=F32) + b2_ref[...]
    res = h2 + add_attn
    mu = jnp.sum(res, axis=-1, keepdims=True) * INV_C
    cen = res - mu
    var = jnp.sum(cen * cen, axis=-1, keepdims=True) * INV_C
    ffn = cen * jax.lax.rsqrt(var + LN_EPS) * ln_g_ref[...] + ln_b_ref[...]

    # AdaptiveAvgPool3d((1,1,1)) == mean over all T*H*W positions, then the
    # padded, lane-dense classifier matmul.
    pooled = jnp.sum(ffn, axis=0, keepdims=True) * INV_S                # (1, C)
    logits = jnp.dot(pooled.astype(BF16), lin_w_ref[...],
                     preferred_element_type=F32) + lin_b_ref[...]       # (1, CLASS_PAD)
    out_ref[0] = logits


# --- host-side parameter plumbing ---------------------------------------------
def prepare_params(p):
    """Layout plumbing (no math): PyTorch (Cout, Cin) conv weights -> (Cin, Cout)
    bf16 matmul operands, fuse Q/K/V into one (C, 3C) matrix, pad the classifier
    to 128 lanes, precompute the block-diagonal head mask on the host."""
    def t(w):
        return jnp.transpose(w)

    out = {}
    for tag, wkey, bkey in (('r', 'attn_r_w', 'attn_r_b'),
                            ('f', 'attn_f_w', 'attn_f_b')):
        w4, b4 = p[wkey], p[bkey]
        out[f'wqkv_{tag}'] = jnp.concatenate(
            [t(w4[0]), t(w4[1]), t(w4[2])], axis=1).astype(BF16)
        out[f'bqkv_{tag}'] = jnp.concatenate([b4[0], b4[1], b4[2]])[None, :].astype(F32)
        out[f'wrep_{tag}'] = t(w4[3]).astype(BF16)
        out[f'brep_{tag}'] = b4[3][None, :].astype(F32)
    out['w1'] = t(p['ffn_w'][0]).astype(BF16)
    out['b1'] = p['ffn_b'][0][None, :].astype(F32)
    out['w2'] = t(p['ffn_w'][1]).astype(BF16)
    out['b2'] = p['ffn_b'][1][None, :].astype(F32)
    out['ln_g'] = p['ln_g'].astype(F32)
    out['ln_b'] = p['ln_b'].astype(F32)
    lw = jnp.zeros((C, CLASS_PAD), F32).at[:, :CLASS_NB].set(t(p['lin_w']))
    lb = jnp.zeros((1, CLASS_PAD), F32).at[:, :CLASS_NB].set(p['lin_b'][0])
    out['lin_w_pad'] = lw.astype(BF16)
    out['lin_b_pad'] = lb
    head = jnp.arange(C, dtype=jnp.int32) // HC
    out['head_mask'] = (head[:, None] == head[None, :]).astype(F32)
    return out


def _cost_estimate(args):
    per_stream = (2 * S * C * (3 * C)   # fused QKV projection
                  + 2 * S * C * C       # q-softmax denominators
                  + 2 * C * S * C       # context
                  + 2 * S * C * C       # attended values
                  + 2 * S * C * C)      # reprojection
    per_batch = 2 * per_stream + 2 * (2 * S * C * C) + 2 * C * CLASS_PAD
    flops = B * per_batch
    transcendentals = B * (2 * 2 * S * C + S * C + S)   # exps + approx recip + rsqrt
    bytes_accessed = sum(int(a.nbytes) for a in args) + B * CLASS_PAD * 4
    return pl.CostEstimate(flops=flops, transcendentals=transcendentals,
                           bytes_accessed=bytes_accessed)


# --- wrapper -------------------------------------------------------------------
def transfusion_head(x_rgb, x_flow, params):
    kp = prepare_params(params)
    args = (x_rgb, x_flow, kp['head_mask'],
            kp['wqkv_r'], kp['bqkv_r'], kp['wrep_r'], kp['brep_r'],
            kp['wqkv_f'], kp['bqkv_f'], kp['wrep_f'], kp['brep_f'],
            kp['w1'], kp['b1'], kp['w2'], kp['b2'],
            kp['ln_g'], kp['ln_b'],
            kp['lin_w_pad'], kp['lin_b_pad'])

    def resident(a):
        # Full-array VMEM-resident block; same block index every grid step so it
        # is DMA'd once and reused.  (At production size these become streamed
        # BlockSpecs — see TODO at the top of the file.)
        zeros = (0,) * a.ndim
        return pl.BlockSpec(a.shape, lambda b, _z=zeros: _z)

    in_specs = ([pl.BlockSpec((1, S, C), lambda b: (b, 0, 0)),
                 pl.BlockSpec((1, S, C), lambda b: (b, 0, 0))]
                + [resident(a) for a in args[2:]])

    out_pad = pl.pallas_call(
        transfusion_head_kernel,
        out_shape=jax.ShapeDtypeStruct((B, 1, CLASS_PAD), jnp.float32),
        grid=(B,),
        in_specs=in_specs,
        out_specs=pl.BlockSpec((1, 1, CLASS_PAD), lambda b: (b, 0, 0)),
        compiler_params=pltpu.CompilerParams(
            dimension_semantics=("parallel",),
            vmem_limit_bytes=32 * 1024 * 1024),
        cost_estimate=_cost_estimate(args),
    )(*args)
    return out_pad.reshape(B, CLASS_PAD)[:, :CLASS_NB]


# --- pure-JAX f32 reference (same math, for a smoke check) ----------------------
def ref_forward(x_rgb, x_flow, p):
    def conv1x1(x, w, b):
        return jnp.einsum('bsc,dc->bsd', x, w) + b[None, None, :]

    def eff_attn(x, w4, b4):
        q = conv1x1(x, w4[0], b4[0]); k = conv1x1(x, w4[1], b4[1]); v = conv1x1(x, w4[2], b4[2])
        heads = []
        for h in range(N_HEADS):
            lo, hi = h * HC, (h + 1) * HC
            k_sm = jax.nn.softmax(k[:, :, lo:hi], axis=1)
            q_sm = jax.nn.softmax(q[:, :, lo:hi], axis=2)
            ctx = jnp.einsum('bsk,bsv->bkv', k_sm, v[:, :, lo:hi])
            heads.append(jnp.einsum('bsk,bkv->bsv', q_sm, ctx))
        agg = jnp.concatenate(heads, axis=-1)
        return conv1x1(agg, w4[3], b4[3]) + x

    add_attn = eff_attn(x_rgb, p['attn_r_w'], p['attn_r_b']) + \
               eff_attn(x_flow, p['attn_f_w'], p['attn_f_b'])
    h1 = jax.nn.relu(conv1x1(add_attn, p['ffn_w'][0], p['ffn_b'][0]))
    res = conv1x1(h1, p['ffn_w'][1], p['ffn_b'][1]) + add_attn
    mu = res.mean(-1, keepdims=True)
    var = ((res - mu) ** 2).mean(-1, keepdims=True)
    ffn_out = (res - mu) / jnp.sqrt(var + LN_EPS) * p['ln_g'][0] + p['ln_b'][0]
    pooled = ffn_out.mean(axis=1)
    return pooled @ p['lin_w'].T + p['lin_b'][0]


# --- main -----------------------------------------------------------------------
if __name__ == "__main__":
    key = jax.random.PRNGKey(0)
    ks = jax.random.split(key, 12)

    # Stand-in for the (external) I3D mixed_5c feature maps, NCDHW like PyTorch.
    x_rgb_ncdhw = jax.random.normal(ks[0], (B, C, T, H, W), jnp.float32)
    x_flow_ncdhw = jax.random.normal(ks[1], (B, C, T, H, W), jnp.float32)

    # Glue: NCDHW -> channels-last (B, S, C), S flattened in (T, H, W) order.
    def to_bsc(x):
        return jnp.transpose(x, (0, 2, 3, 4, 1)).reshape(B, S, C)

    x_rgb = to_bsc(x_rgb_ncdhw)
    x_flow = to_bsc(x_flow_ncdhw)

    sc = 0.05
    params = {
        'attn_r_w': jax.random.normal(ks[2], (4, C, C), jnp.float32) * sc,
        'attn_r_b': jax.random.normal(ks[3], (4, C), jnp.float32) * sc,
        'attn_f_w': jax.random.normal(ks[4], (4, C, C), jnp.float32) * sc,
        'attn_f_b': jax.random.normal(ks[5], (4, C), jnp.float32) * sc,
        'ffn_w':    jax.random.normal(ks[6], (2, C, C), jnp.float32) * sc,
        'ffn_b':    jax.random.normal(ks[7], (2, C), jnp.float32) * sc,
        'ln_g':     jnp.ones((1, C), jnp.float32),      # LayerNorm default init
        'ln_b':     jnp.zeros((1, C), jnp.float32),
        'lin_w':    jax.random.normal(ks[8], (CLASS_NB, C), jnp.float32) * sc,
        'lin_b':    jax.random.normal(ks[9], (1, CLASS_NB), jnp.float32) * sc,
    }

    out = transfusion_head(x_rgb, x_flow, params)
    out = jax.block_until_ready(out)

    ref = ref_forward(x_rgb, x_flow, params)
    assert out.shape == (B, CLASS_NB)
    assert jnp.allclose(out, ref, rtol=5e-2, atol=5e-2), "mismatch vs. reference"

    print("KERNEL_OK")
</pallas_src>

<mosaic_0001>
module attributes {stable_mosaic.version = 11 : i64} {
  func.func @transfusion_head_kernel(%arg0: i32, %arg1: memref<1x32x128xf32, #tpu.memory_space<vmem>>, %arg2: memref<1x32x128xf32, #tpu.memory_space<vmem>>, %arg3: memref<128x128xf32, #tpu.memory_space<vmem>>, %arg4: memref<128x384xbf16, #tpu.memory_space<vmem>>, %arg5: memref<1x384xf32, #tpu.memory_space<vmem>>, %arg6: memref<128x128xbf16, #tpu.memory_space<vmem>>, %arg7: memref<1x128xf32, #tpu.memory_space<vmem>>, %arg8: memref<128x384xbf16, #tpu.memory_space<vmem>>, %arg9: memref<1x384xf32, #tpu.memory_space<vmem>>, %arg10: memref<128x128xbf16, #tpu.memory_space<vmem>>, %arg11: memref<1x128xf32, #tpu.memory_space<vmem>>, %arg12: memref<128x128xbf16, #tpu.memory_space<vmem>>, %arg13: memref<1x128xf32, #tpu.memory_space<vmem>>, %arg14: memref<128x128xbf16, #tpu.memory_space<vmem>>, %arg15: memref<1x128xf32, #tpu.memory_space<vmem>>, %arg16: memref<1x128xf32, #tpu.memory_space<vmem>>, %arg17: memref<1x128xf32, #tpu.memory_space<vmem>>, %arg18: memref<128x128xbf16, #tpu.memory_space<vmem>>, %arg19: memref<1x128xf32, #tpu.memory_space<vmem>>, %arg20: memref<1x1x128xf32, #tpu.memory_space<vmem>>) attributes {dimension_semantics = [#tpu.dimension_semantics<parallel>], iteration_bounds = array<i64: 2>, scalar_prefetch = 0 : i64, scratch_operands = 0 : i64, tpu.core_type = #tpu.core_type<tc>, window_params = [{transform_indices = @transform_0, window_bounds = array<i64: 1, 32, 128>}, {transform_indices = @transform_1, window_bounds = array<i64: 1, 32, 128>}, {pipeline_mode = #tpu.pipeline_mode<synchronous>, transform_indices = @transform_2, window_bounds = array<i64: 128, 128>}, {pipeline_mode = #tpu.pipeline_mode<synchronous>, transform_indices = @transform_3, window_bounds = array<i64: 128, 384>}, {pipeline_mode = #tpu.pipeline_mode<synchronous>, transform_indices = @transform_4, window_bounds = array<i64: 1, 384>}, {pipeline_mode = #tpu.pipeline_mode<synchronous>, transform_indices = @transform_5, window_bounds = array<i64: 128, 128>}, {pipeline_mode = #tpu.pipeline_mode<synchronous>, transform_indices = @transform_6, window_bounds = array<i64: 1, 128>}, {pipeline_mode = #tpu.pipeline_mode<synchronous>, transform_indices = @transform_7, window_bounds = array<i64: 128, 384>}, {pipeline_mode = #tpu.pipeline_mode<synchronous>, transform_indices = @transform_8, window_bounds = array<i64: 1, 384>}, {pipeline_mode = #tpu.pipeline_mode<synchronous>, transform_indices = @transform_9, window_bounds = array<i64: 128, 128>}, {pipeline_mode = #tpu.pipeline_mode<synchronous>, transform_indices = @transform_10, window_bounds = array<i64: 1, 128>}, {pipeline_mode = #tpu.pipeline_mode<synchronous>, transform_indices = @transform_11, window_bounds = array<i64: 128, 128>}, {pipeline_mode = #tpu.pipeline_mode<synchronous>, transform_indices = @transform_12, window_bounds = array<i64: 1, 128>}, {pipeline_mode = #tpu.pipeline_mode<synchronous>, transform_indices = @transform_13, window_bounds = array<i64: 128, 128>}, {pipeline_mode = #tpu.pipeline_mode<synchronous>, transform_indices = @transform_14, window_bounds = array<i64: 1, 128>}, {pipeline_mode = #tpu.pipeline_mode<synchronous>, transform_indices = @transform_15, window_bounds = array<i64: 1, 128>}, {pipeline_mode = #tpu.pipeline_mode<synchronous>, transform_indices = @transform_16, window_bounds = array<i64: 1, 128>}, {pipeline_mode = #tpu.pipeline_mode<synchronous>, transform_indices = @transform_17, window_bounds = array<i64: 128, 128>}, {pipeline_mode = #tpu.pipeline_mode<synchronous>, transform_indices = @transform_18, window_bounds = array<i64: 1, 128>}, {transform_indices = @transform_19, window_bounds = array<i64: 1, 1, 128>}]} {
    %c0 = arith.constant 0 : index
    %c0_0 = arith.constant 0 : index
    %0 = vector.load %arg3[%c0, %c0_0] : memref<128x128xf32, #tpu.memory_space<vmem>>, vector<128x128xf32>
    %1 = arith.truncf %0 : vector<128x128xf32> to vector<128x128xbf16>
    %c0_1 = arith.constant 0 : index
    %c0_2 = arith.constant 0 : index
    %c0_3 = arith.constant 0 : index
    %2 = vector.load %arg1[%c0_1, %c0_2, %c0_3] : memref<1x32x128xf32, #tpu.memory_space<vmem>>, vector<1x32x128xf32>
    %3 = vector.shape_cast %2 : vector<1x32x128xf32> to vector<32x128xf32>
    %c0_4 = arith.constant 0 : index
    %c0_5 = arith.constant 0 : index
    %c0_6 = arith.constant 0 : index
    %4 = vector.load %arg2[%c0_4, %c0_5, %c0_6] : memref<1x32x128xf32, #tpu.memory_space<vmem>>, vector<1x32x128xf32>
    %5 = vector.shape_cast %4 : vector<1x32x128xf32> to vector<32x128xf32>
    %c0_7 = arith.constant 0 : index
    %c0_8 = arith.constant 0 : index
    %6 = vector.load %arg4[%c0_7, %c0_8] : memref<128x384xbf16, #tpu.memory_space<vmem>>, vector<128x384xbf16>
    %c0_9 = arith.constant 0 : index
    %c0_10 = arith.constant 0 : index
    %7 = vector.load %arg5[%c0_9, %c0_10] : memref<1x384xf32, #tpu.memory_space<vmem>>, vector<1x384xf32>
    %c0_11 = arith.constant 0 : index
    %c0_12 = arith.constant 0 : index
    %8 = vector.load %arg6[%c0_11, %c0_12] : memref<128x128xbf16, #tpu.memory_space<vmem>>, vector<128x128xbf16>
    %c0_13 = arith.constant 0 : index
    %c0_14 = arith.constant 0 : index
    %9 = vector.load %arg7[%c0_13, %c0_14] : memref<1x128xf32, #tpu.memory_space<vmem>>, vector<1x128xf32>
    %10 = arith.truncf %3 : vector<32x128xf32> to vector<32x128xbf16>
    %cst = arith.constant dense<0.000000e+00> : vector<32x384xf32>
    %11 = tpu.matmul %10, %6, %cst {dimension_numbers = #tpu.dot_dimension_numbers<[1], [0], [0], [1], [0, 0, 1, 1], [], []>} : vector<32x128xbf16>, vector<128x384xbf16>, vector<32x384xf32> -> vector<32x384xf32>
    %12 = vector.broadcast %7 : vector<1x384xf32> to vector<32x384xf32>
    %13 = arith.addf %11, %12 : vector<32x384xf32>
    %14 = vector.extract_strided_slice %13 {offsets = [0, 0], sizes = [32, 128], strides = [1, 1]} : vector<32x384xf32> to vector<32x128xf32>
    %15 = vector.extract_strided_slice %13 {offsets = [0, 128], sizes = [32, 128], strides = [1, 1]} : vector<32x384xf32> to vector<32x128xf32>
    %16 = vector.extract_strided_slice %13 {offsets = [0, 256], sizes = [32, 128], strides = [1, 1]} : vector<32x384xf32> to vector<32x128xf32>
    %cst_15 = arith.constant dense<0xFF800000> : vector<128xf32>
    %17 = vector.multi_reduction <maximumf>, %15, %cst_15 [0] : vector<32x128xf32> to vector<128xf32>
    %18 = vector.shape_cast %17 : vector<128xf32> to vector<1x128xf32>
    %19 = vector.broadcast %18 : vector<1x128xf32> to vector<32x128xf32>
    %20 = arith.subf %15, %19 : vector<32x128xf32>
    %21 = math.exp %20 : vector<32x128xf32>
    %cst_16 = arith.constant dense<0.000000e+00> : vector<128xf32>
    %22 = vector.multi_reduction <add>, %21, %cst_16 [0] : vector<32x128xf32> to vector<128xf32>
    %23 = vector.shape_cast %22 : vector<128xf32> to vector<1x128xf32>
    %24 = vector.broadcast %23 : vector<1x128xf32> to vector<32x128xf32>
    %25 = arith.divf %21, %24 : vector<32x128xf32>
    %cst_17 = arith.constant dense<0xFF800000> : vector<32xf32>
    %26 = vector.multi_reduction <maximumf>, %14, %cst_17 [1] : vector<32x128xf32> to vector<32xf32>
    %27 = vector.shape_cast %26 : vector<32xf32> to vector<32x1xf32>
    %28 = vector.broadcast %27 : vector<32x1xf32> to vector<32x128xf32>
    %29 = arith.subf %14, %28 : vector<32x128xf32>
    %30 = math.exp %29 : vector<32x128xf32>
    %31 = arith.truncf %30 : vector<32x128xf32> to vector<32x128xbf16>
    %cst_18 = arith.constant dense<0.000000e+00> : vector<32x128xf32>
    %32 = tpu.matmul %31, %1, %cst_18 {dimension_numbers = #tpu.dot_dimension_numbers<[1], [0], [0], [1], [0, 0, 1, 1], [], []>} : vector<32x128xbf16>, vector<128x128xbf16>, vector<32x128xf32> -> vector<32x128xf32>
    %33 = tpu.reciprocal %32 {approx = true} : vector<32x128xf32> -> vector<32x128xf32>
    %34 = arith.mulf %30, %33 : vector<32x128xf32>
    %35 = arith.truncf %25 : vector<32x128xf32> to vector<32x128xbf16>
    %36 = arith.truncf %16 : vector<32x128xf32> to vector<32x128xbf16>
    %cst_19 = arith.constant dense<0.000000e+00> : vector<128x128xf32>
    %37 = tpu.matmul %35, %36, %cst_19 {dimension_numbers = #tpu.dot_dimension_numbers<[0], [0], [1], [1], [0, 1, 1, 1], [], []>} : vector<32x128xbf16>, vector<32x128xbf16>, vector<128x128xf32> -> vector<128x128xf32>
    %38 = arith.mulf %37, %0 : vector<128x128xf32>
    %39 = arith.truncf %34 : vector<32x128xf32> to vector<32x128xbf16>
    %40 = arith.truncf %38 : vector<128x128xf32> to vector<128x128xbf16>
    %cst_20 = arith.constant dense<0.000000e+00> : vector<32x128xf32>
    %41 = tpu.matmul %39, %40, %cst_20 {dimension_numbers = #tpu.dot_dimension_numbers<[1], [0], [0], [1], [0, 0, 1, 1], [], []>} : vector<32x128xbf16>, vector<128x128xbf16>, vector<32x128xf32> -> vector<32x128xf32>
    %42 = arith.truncf %41 : vector<32x128xf32> to vector<32x128xbf16>
    %cst_21 = arith.constant dense<0.000000e+00> : vector<32x128xf32>
    %43 = tpu.matmul %42, %8, %cst_21 {dimension_numbers = #tpu.dot_dimension_numbers<[1], [0], [0], [1], [0, 0, 1, 1], [], []>} : vector<32x128xbf16>, vector<128x128xbf16>, vector<32x128xf32> -> vector<32x128xf32>
    %44 = vector.broadcast %9 : vector<1x128xf32> to vector<32x128xf32>
    %45 = arith.addf %43, %44 : vector<32x128xf32>
    %46 = arith.addf %45, %3 : vector<32x128xf32>
    %c0_22 = arith.constant 0 : index
    %c0_23 = arith.constant 0 : index
    %47 = vector.load %arg8[%c0_22, %c0_23] : memref<128x384xbf16, #tpu.memory_space<vmem>>, vector<128x384xbf16>
    %c0_24 = arith.constant 0 : index
    %c0_25 = arith.constant 0 : index
    %48 = vector.load %arg9[%c0_24, %c0_25] : memref<1x384xf32, #tpu.memory_space<vmem>>, vector<1x384xf32>
    %c0_26 = arith.constant 0 : index
    %c0_27 = arith.constant 0 : index
    %49 = vector.load %arg10[%c0_26, %c0_27] : memref<128x128xbf16, #tpu.memory_space<vmem>>, vector<128x128xbf16>
    %c0_28 = arith.constant 0 : index
    %c0_29 = arith.constant 0 : index
    %50 = vector.load %arg11[%c0_28, %c0_29] : memref<1x128xf32, #tpu.memory_space<vmem>>, vector<1x128xf32>
    %51 = arith.truncf %5 : vector<32x128xf32> to vector<32x128xbf16>
    %cst_30 = arith.constant dense<0.000000e+00> : vector<32x384xf32>
    %52 = tpu.matmul %51, %47, %cst_30 {dimension_numbers = #tpu.dot_dimension_numbers<[1], [0], [0], [1], [0, 0, 1, 1], [], []>} : vector<32x128xbf16>, vector<128x384xbf16>, vector<32x384xf32> -> vector<32x384xf32>
    %53 = vector.broadcast %48 : vector<1x384xf32> to vector<32x384xf32>
    %54 = arith.addf %52, %53 : vector<32x384xf32>
    %55 = vector.extract_strided_slice %54 {offsets = [0, 0], sizes = [32, 128], strides = [1, 1]} : vector<32x384xf32> to vector<32x128xf32>
    %56 = vector.extract_strided_slice %54 {offsets = [0, 128], sizes = [32, 128], strides = [1, 1]} : vector<32x384xf32> to vector<32x128xf32>
    %57 = vector.extract_strided_slice %54 {offsets = [0, 256], sizes = [32, 128], strides = [1, 1]} : vector<32x384xf32> to vector<32x128xf32>
    %cst_31 = arith.constant dense<0xFF800000> : vector<128xf32>
    %58 = vector.multi_reduction <maximumf>, %56, %cst_31 [0] : vector<32x128xf32> to vector<128xf32>
    %59 = vector.shape_cast %58 : vector<128xf32> to vector<1x128xf32>
    %60 = vector.broadcast %59 : vector<1x128xf32> to vector<32x128xf32>
    %61 = arith.subf %56, %60 : vector<32x128xf32>
    %62 = math.exp %61 : vector<32x128xf32>
    %cst_32 = arith.constant dense<0.000000e+00> : vector<128xf32>
    %63 = vector.multi_reduction <add>, %62, %cst_32 [0] : vector<32x128xf32> to vector<128xf32>
    %64 = vector.shape_cast %63 : vector<128xf32> to vector<1x128xf32>
    %65 = vector.broadcast %64 : vector<1x128xf32> to vector<32x128xf32>
    %66 = arith.divf %62, %65 : vector<32x128xf32>
    %cst_33 = arith.constant dense<0xFF800000> : vector<32xf32>
    %67 = vector.multi_reduction <maximumf>, %55, %cst_33 [1] : vector<32x128xf32> to vector<32xf32>
    %68 = vector.shape_cast %67 : vector<32xf32> to vector<32x1xf32>
    %69 = vector.broadcast %68 : vector<32x1xf32> to vector<32x128xf32>
    %70 = arith.subf %55, %69 : vector<32x128xf32>
    %71 = math.exp %70 : vector<32x128xf32>
    %72 = arith.truncf %71 : vector<32x128xf32> to vector<32x128xbf16>
    %cst_34 = arith.constant dense<0.000000e+00> : vector<32x128xf32>
    %73 = tpu.matmul %72, %1, %cst_34 {dimension_numbers = #tpu.dot_dimension_numbers<[1], [0], [0], [1], [0, 0, 1, 1], [], []>} : vector<32x128xbf16>, vector<128x128xbf16>, vector<32x128xf32> -> vector<32x128xf32>
    %74 = tpu.reciprocal %73 {approx = true} : vector<32x128xf32> -> vector<32x128xf32>
    %75 = arith.mulf %71, %74 : vector<32x128xf32>
    %76 = arith.truncf %66 : vector<32x128xf32> to vector<32x128xbf16>
    %77 = arith.truncf %57 : vector<32x128xf32> to vector<32x128xbf16>
    %cst_35 = arith.constant dense<0.000000e+00> : vector<128x128xf32>
    %78 = tpu.matmul %76, %77, %cst_35 {dimension_numbers = #tpu.dot_dimension_numbers<[0], [0], [1], [1], [0, 1, 1, 1], [], []>} : vector<32x128xbf16>, vector<32x128xbf16>, vector<128x128xf32> -> vector<128x128xf32>
    %79 = arith.mulf %78, %0 : vector<128x128xf32>
    %80 = arith.truncf %75 : vector<32x128xf32> to vector<32x128xbf16>
    %81 = arith.truncf %79 : vector<128x128xf32> to vector<128x128xbf16>
    %cst_36 = arith.constant dense<0.000000e+00> : vector<32x128xf32>
    %82 = tpu.matmul %80, %81, %cst_36 {dimension_numbers = #tpu.dot_dimension_numbers<[1], [0], [0], [1], [0, 0, 1, 1], [], []>} : vector<32x128xbf16>, vector<128x128xbf16>, vector<32x128xf32> -> vector<32x128xf32>
    %83 = arith.truncf %82 : vector<32x128xf32> to vector<32x128xbf16>
    %cst_37 = arith.constant dense<0.000000e+00> : vector<32x128xf32>
    %84 = tpu.matmul %83, %49, %cst_37 {dimension_numbers = #tpu.dot_dimension_numbers<[1], [0], [0], [1], [0, 0, 1, 1], [], []>} : vector<32x128xbf16>, vector<128x128xbf16>, vector<32x128xf32> -> vector<32x128xf32>
    %85 = vector.broadcast %50 : vector<1x128xf32> to vector<32x128xf32>
    %86 = arith.addf %84, %85 : vector<32x128xf32>
    %87 = arith.addf %86, %5 : vector<32x128xf32>
    %88 = arith.addf %46, %87 : vector<32x128xf32>
    %89 = arith.truncf %88 : vector<32x128xf32> to vector<32x128xbf16>
    %c0_38 = arith.constant 0 : index
    %c0_39 = arith.constant 0 : index
    %90 = vector.load %arg12[%c0_38, %c0_39] : memref<128x128xbf16, #tpu.memory_space<vmem>>, vector<128x128xbf16>
    %cst_40 = arith.constant dense<0.000000e+00> : vector<32x128xf32>
    %91 = tpu.matmul %89, %90, %cst_40 {dimension_numbers = #tpu.dot_dimension_numbers<[1], [0], [0], [1], [0, 0, 1, 1], [], []>} : vector<32x128xbf16>, vector<128x128xbf16>, vector<32x128xf32> -> vector<32x128xf32>
    %c0_41 = arith.constant 0 : index
    %c0_42 = arith.constant 0 : index
    %92 = vector.load %arg13[%c0_41, %c0_42] : memref<1x128xf32, #tpu.memory_space<vmem>>, vector<1x128xf32>
    %93 = vector.broadcast %92 : vector<1x128xf32> to vector<32x128xf32>
    %94 = arith.addf %91, %93 : vector<32x128xf32>
    %cst_43 = arith.constant 0.000000e+00 : f32
    %95 = vector.broadcast %cst_43 : f32 to vector<32x128xf32>
    %96 = arith.maximumf %94, %95 : vector<32x128xf32>
    %97 = arith.truncf %96 : vector<32x128xf32> to vector<32x128xbf16>
    %c0_44 = arith.constant 0 : index
    %c0_45 = arith.constant 0 : index
    %98 = vector.load %arg14[%c0_44, %c0_45] : memref<128x128xbf16, #tpu.memory_space<vmem>>, vector<128x128xbf16>
    %cst_46 = arith.constant dense<0.000000e+00> : vector<32x128xf32>
    %99 = tpu.matmul %97, %98, %cst_46 {dimension_numbers = #tpu.dot_dimension_numbers<[1], [0], [0], [1], [0, 0, 1, 1], [], []>} : vector<32x128xbf16>, vector<128x128xbf16>, vector<32x128xf32> -> vector<32x128xf32>
    %c0_47 = arith.constant 0 : index
    %c0_48 = arith.constant 0 : index
    %100 = vector.load %arg15[%c0_47, %c0_48] : memref<1x128xf32, #tpu.memory_space<vmem>>, vector<1x128xf32>
    %101 = vector.broadcast %100 : vector<1x128xf32> to vector<32x128xf32>
    %102 = arith.addf %99, %101 : vector<32x128xf32>
    %103 = arith.addf %102, %88 : vector<32x128xf32>
    %cst_49 = arith.constant dense<0.000000e+00> : vector<32xf32>
    %104 = vector.multi_reduction <add>, %103, %cst_49 [1] : vector<32x128xf32> to vector<32xf32>
    %105 = vector.shape_cast %104 : vector<32xf32> to vector<32x1xf32>
    %cst_50 = arith.constant 7.812500e-03 : f32
    %106 = vector.broadcast %cst_50 : f32 to vector<32x1xf32>
    %107 = arith.mulf %105, %106 : vector<32x1xf32>
    %108 = vector.broadcast %107 : vector<32x1xf32> to vector<32x128xf32>
    %109 = arith.subf %103, %108 : vector<32x128xf32>
    %110 = arith.mulf %109, %109 : vector<32x128xf32>
    %cst_51 = arith.constant dense<0.000000e+00> : vector<32xf32>
    %111 = vector.multi_reduction <add>, %110, %cst_51 [1] : vector<32x128xf32> to vector<32xf32>
    %112 = vector.shape_cast %111 : vector<32xf32> to vector<32x1xf32>
    %cst_52 = arith.constant 7.812500e-03 : f32
    %113 = vector.broadcast %cst_52 : f32 to vector<32x1xf32>
    %114 = arith.mulf %112, %113 : vector<32x1xf32>
    %cst_53 = arith.constant 9.99999974E-6 : f32
    %115 = vector.broadcast %cst_53 : f32 to vector<32x1xf32>
    %116 = arith.addf %114, %115 : vector<32x1xf32>
    %117 = math.rsqrt %116 : vector<32x1xf32>
    %118 = vector.broadcast %117 : vector<32x1xf32> to vector<32x128xf32>
    %119 = arith.mulf %109, %118 : vector<32x128xf32>
    %c0_54 = arith.constant 0 : index
    %c0_55 = arith.constant 0 : index
    %120 = vector.load %arg16[%c0_54, %c0_55] : memref<1x128xf32, #tpu.memory_space<vmem>>, vector<1x128xf32>
    %121 = vector.broadcast %120 : vector<1x128xf32> to vector<32x128xf32>
    %122 = arith.mulf %119, %121 : vector<32x128xf32>
    %c0_56 = arith.constant 0 : index
    %c0_57 = arith.constant 0 : index
    %123 = vector.load %arg17[%c0_56, %c0_57] : memref<1x128xf32, #tpu.memory_space<vmem>>, vector<1x128xf32>
    %124 = vector.broadcast %123 : vector<1x128xf32> to vector<32x128xf32>
    %125 = arith.addf %122, %124 : vector<32x128xf32>
    %cst_58 = arith.constant dense<0.000000e+00> : vector<128xf32>
    %126 = vector.multi_reduction <add>, %125, %cst_58 [0] : vector<32x128xf32> to vector<128xf32>
    %127 = vector.shape_cast %126 : vector<128xf32> to vector<1x128xf32>
    %cst_59 = arith.constant 3.125000e-02 : f32
    %128 = vector.broadcast %cst_59 : f32 to vector<1x128xf32>
    %129 = arith.mulf %127, %128 : vector<1x128xf32>
    %130 = arith.truncf %129 : vector<1x128xf32> to vector<1x128xbf16>
    %c0_60 = arith.constant 0 : index
    %c0_61 = arith.constant 0 : index
    %131 = vector.load %arg18[%c0_60, %c0_61] : memref<128x128xbf16, #tpu.memory_space<vmem>>, vector<128x128xbf16>
    %cst_62 = arith.constant dense<0.000000e+00> : vector<1x128xf32>
    %132 = tpu.matmul %130, %131, %cst_62 {dimension_numbers = #tpu.dot_dimension_numbers<[1], [0], [0], [1], [0, 0, 1, 1], [], []>} : vector<1x128xbf16>, vector<128x128xbf16>, vector<1x128xf32> -> vector<1x128xf32>
    %c0_63 = arith.constant 0 : index
    %c0_64 = arith.constant 0 : index
    %133 = vector.load %arg19[%c0_63, %c0_64] : memref<1x128xf32, #tpu.memory_space<vmem>>, vector<1x128xf32>
    %134 = arith.addf %132, %133 : vector<1x128xf32>
    %c0_65 = arith.constant 0 : index
    %c0_66 = arith.constant 0 : index
    %c0_67 = arith.constant 0 : index
    %135 = vector.load %arg20[%c0_65, %c0_66, %c0_67] : memref<1x1x128xf32, #tpu.memory_space<vmem>>, vector<1x1x128xf32>
    %136 = vector.shape_cast %135 : vector<1x1x128xf32> to vector<1x128xf32>
    %137 = vector.shape_cast %134 : vector<1x128xf32> to vector<1x1x128xf32>
    tpu.vector_store %arg20[%c0_65, %c0_66, %c0_67], %137 {strides = array<i32>} : memref<1x1x128xf32, #tpu.memory_space<vmem>>, vector<1x1x128xf32>,
    return
  }
  func.func @transform_0(%arg0: i32) -> (i32, i32, i32) {
    %c0_i32 = arith.constant 0 : i32
    %c0_i32_0 = arith.constant 0 : i32
    %c0_i32_1 = arith.constant 0 : i32
    return %arg0, %c0_i32, %c0_i32_0 : i32, i32, i32
  }
  func.func @transform_1(%arg0: i32) -> (i32, i32, i32) {
    %c0_i32 = arith.constant 0 : i32
    %c0_i32_0 = arith.constant 0 : i32
    %c0_i32_1 = arith.constant 0 : i32
    return %arg0, %c0_i32, %c0_i32_0 : i32, i32, i32
  }
  func.func @transform_2(%arg0: i32) -> (i32, i32) {
    %c0_i32 = arith.constant 0 : i32
    %c0_i32_0 = arith.constant 0 : i32
    %c0_i32_1 = arith.constant 0 : i32
    return %c0_i32, %c0_i32_0 : i32, i32
  }
  func.func @transform_3(%arg0: i32) -> (i32, i32) {
    %c0_i32 = arith.constant 0 : i32
    %c0_i32_0 = arith.constant 0 : i32
    %c0_i32_1 = arith.constant 0 : i32
    return %c0_i32, %c0_i32_0 : i32, i32
  }
  func.func @transform_4(%arg0: i32) -> (i32, i32) {
    %c0_i32 = arith.constant 0 : i32
    %c0_i32_0 = arith.constant 0 : i32
    %c0_i32_1 = arith.constant 0 : i32
    return %c0_i32, %c0_i32_0 : i32, i32
  }
  func.func @transform_5(%arg0: i32) -> (i32, i32) {
    %c0_i32 = arith.constant 0 : i32
    %c0_i32_0 = arith.constant 0 : i32
    %c0_i32_1 = arith.constant 0 : i32
    return %c0_i32, %c0_i32_0 : i32, i32
  }
  func.func @transform_6(%arg0: i32) -> (i32, i32) {
    %c0_i32 = arith.constant 0 : i32
    %c0_i32_0 = arith.constant 0 : i32
    %c0_i32_1 = arith.constant 0 : i32
    return %c0_i32, %c0_i32_0 : i32, i32
  }
  func.func @transform_7(%arg0: i32) -> (i32, i32) {
    %c0_i32 = arith.constant 0 : i32
    %c0_i32_0 = arith.constant 0 : i32
    %c0_i32_1 = arith.constant 0 : i32
    return %c0_i32, %c0_i32_0 : i32, i32
  }
  func.func @transform_8(%arg0: i32) -> (i32, i32) {
    %c0_i32 = arith.constant 0 : i32
    %c0_i32_0 = arith.constant 0 : i32
    %c0_i32_1 = arith.constant 0 : i32
    return %c0_i32, %c0_i32_0 : i32, i32
  }
  func.func @transform_9(%arg0: i32) -> (i32, i32) {
    %c0_i32 = arith.constant 0 : i32
    %c0_i32_0 = arith.constant 0 : i32
    %c0_i32_1 = arith.constant 0 : i32
    return %c0_i32, %c0_i32_0 : i32, i32
  }
  func.func @transform_10(%arg0: i32) -> (i32, i32) {
    %c0_i32 = arith.constant 0 : i32
    %c0_i32_0 = arith.constant 0 : i32
    %c0_i32_1 = arith.constant 0 : i32
    return %c0_i32, %c0_i32_0 : i32, i32
  }
  func.func @transform_11(%arg0: i32) -> (i32, i32) {
    %c0_i32 = arith.constant 0 : i32
    %c0_i32_0 = arith.constant 0 : i32
    %c0_i32_1 = arith.constant 0 : i32
    return %c0_i32, %c0_i32_0 : i32, i32
  }
  func.func @transform_12(%arg0: i32) -> (i32, i32) {
    %c0_i32 = arith.constant 0 : i32
    %c0_i32_0 = arith.constant 0 : i32
    %c0_i32_1 = arith.constant 0 : i32
    return %c0_i32, %c0_i32_0 : i32, i32
  }
  func.func @transform_13(%arg0: i32) -> (i32, i32) {
    %c0_i32 = arith.constant 0 : i32
    %c0_i32_0 = arith.constant 0 : i32
    %c0_i32_1 = arith.constant 0 : i32
    return %c0_i32, %c0_i32_0 : i32, i32
  }
  func.func @transform_14(%arg0: i32) -> (i32, i32) {
    %c0_i32 = arith.constant 0 : i32
    %c0_i32_0 = arith.constant 0 : i32
    %c0_i32_1 = arith.constant 0 : i32
    return %c0_i32, %c0_i32_0 : i32, i32
  }
  func.func @transform_15(%arg0: i32) -> (i32, i32) {
    %c0_i32 = arith.constant 0 : i32
    %c0_i32_0 = arith.constant 0 : i32
    %c0_i32_1 = arith.constant 0 : i32
    return %c0_i32, %c0_i32_0 : i32, i32
  }
  func.func @transform_16(%arg0: i32) -> (i32, i32) {
    %c0_i32 = arith.constant 0 : i32
    %c0_i32_0 = arith.constant 0 : i32
    %c0_i32_1 = arith.constant 0 : i32
    return %c0_i32, %c0_i32_0 : i32, i32
  }
  func.func @transform_17(%arg0: i32) -> (i32, i32) {
    %c0_i32 = arith.constant 0 : i32
    %c0_i32_0 = arith.constant 0 : i32
    %c0_i32_1 = arith.constant 0 : i32
    return %c0_i32, %c0_i32_0 : i32, i32
  }
  func.func @transform_18(%arg0: i32) -> (i32, i32) {
    %c0_i32 = arith.constant 0 : i32
    %c0_i32_0 = arith.constant 0 : i32
    %c0_i32_1 = arith.constant 0 : i32
    return %c0_i32, %c0_i32_0 : i32, i32
  }
  func.func @transform_19(%arg0: i32) -> (i32, i32, i32) {
    %c0_i32 = arith.constant 0 : i32
    %c0_i32_0 = arith.constant 0 : i32
    %c0_i32_1 = arith.constant 0 : i32
    return %arg0, %c0_i32, %c0_i32_0 : i32, i32, i32
  }
}

</mosaic_0001>

<llo_original>
// kernel: tpu_custom_call.1
$region0: #{tpu_custom_call.1}
  #allocation0 [shape = 'u32[]', space=smem, size = 0x4, offset = 0x4, fixed_abs, tag = 'smem constant byte address 0x4 - core index']
  #allocation1 [shape = 'u32[144,128]{1,0:T(1,128)}', space=vmem, size = 0x12000, scoped, tag = 'internal scratch']
  %s0 = inlined_call_operand.hbm [shape: f32[2,32,128], index: 0, kind: input, shape index: {}]
  %s1 = inlined_call_operand.hbm [shape: f32[2,32,128], index: 1, kind: input, shape index: {}]
  %s2 = inlined_call_operand.hbm [shape: f32[128,128], index: 2, kind: input, shape index: {}]
  %s3 = inlined_call_operand.hbm [shape: bf16[128,384], index: 3, kind: input, shape index: {}]
  %s4 = inlined_call_operand.hbm [shape: f32[1,384], index: 4, kind: input, shape index: {}]
  %s5 = inlined_call_operand.hbm [shape: bf16[128,128], index: 5, kind: input, shape index: {}]
  %s6 = inlined_call_operand.hbm [shape: f32[1,128], index: 6, kind: input, shape index: {}]
  %s7 = inlined_call_operand.hbm [shape: bf16[128,384], index: 7, kind: input, shape index: {}]
  %s8 = inlined_call_operand.hbm [shape: f32[1,384], index: 8, kind: input, shape index: {}]
  %s9 = inlined_call_operand.hbm [shape: bf16[128,128], index: 9, kind: input, shape index: {}]
  %s10 = inlined_call_operand.hbm [shape: f32[1,128], index: 10, kind: input, shape index: {}]
  %s11 = inlined_call_operand.hbm [shape: bf16[128,128], index: 11, kind: input, shape index: {}]
  %s12 = inlined_call_operand.hbm [shape: f32[1,128], index: 12, kind: input, shape index: {}]
  %s13 = inlined_call_operand.hbm [shape: bf16[128,128], index: 13, kind: input, shape index: {}]
  %s14 = inlined_call_operand.hbm [shape: f32[1,128], index: 14, kind: input, shape index: {}]
  %s15 = inlined_call_operand.hbm [shape: f32[1,128], index: 15, kind: input, shape index: {}]
  %s16 = inlined_call_operand.hbm [shape: f32[1,128], index: 16, kind: input, shape index: {}]
  %s17 = inlined_call_operand.vmem [shape: bf16[128,128], index: 17, kind: input, shape index: {}]
  %s18 = inlined_call_operand.vmem [shape: f32[1,128], index: 18, kind: input, shape index: {}]
  %s19 = inlined_call_operand.hbm [shape: f32[2,1,128], index: 19, kind: output, shape index: {}]
  %s20 = sld [smem:[#allocation0]]
  $region177: #{tpu_custom_call.1} parent=0
    _
  %s22 = ssub.s32 1, %s20
  %s23 = scalar_select 0, %s22, %s20
  $region1: #{tpu_custom_call.1} parent=0
    #allocation2 [shape = 'u8[32768]{0}', space=vmem, size = 0x8000, scoped, tag = 'input window, operand 0']
    #allocation3 [shape = 's32[2]{0}', space=sflag, size = 0x8, scoped, tag = 'scoped memory for tpu_custom_call.1']
    #allocation4 [shape = 's32[2]{0}', space=sflag, size = 0x8, scoped, tag = 'scoped memory for tpu_custom_call.1']
    #allocation5 [shape = 'u8[32768]{0}', space=vmem, size = 0x8000, scoped, tag = 'input window, operand 1']
    #allocation6 [shape = 's32[2]{0}', space=sflag, size = 0x8, scoped, tag = 'scoped memory for tpu_custom_call.1']
    #allocation7 [shape = 'u8[65536]{0}', space=vmem, size = 0x10000, scoped, tag = 'input window, operand 2, single buffered']
    #allocation8 [shape = 'u8[98304]{0}', space=vmem, size = 0x18000, scoped, tag = 'input window, operand 3, single buffered']
    #allocation9 [shape = 's32[1]{0}', space=sflag, size = 0x4, scoped, tag = 'scoped memory for tpu_custom_call.1']
    #allocation10 [shape = 'u8[1536]{0}', space=vmem, size = 0x800, scoped, tag = 'input window, operand 4, single buffered']
    #allocation11 [shape = 'u8[32768]{0}', space=vmem, size = 0x8000, scoped, tag = 'input window, operand 5, single buffered']
    #allocation12 [shape = 's32[1]{0}', space=sflag, size = 0x4, scoped, tag = 'scoped memory for tpu_custom_call.1']
    #allocation13 [shape = 'u8[512]{0}', space=vmem, size = 0x400, scoped, tag = 'input window, operand 6, single buffered']
    #allocation14 [shape = 'u8[98304]{0}', space=vmem, size = 0x18000, scoped, tag = 'input window, operand 7, single buffered']
    #allocation15 [shape = 's32[1]{0}', space=sflag, size = 0x4, scoped, tag = 'scoped memory for tpu_custom_call.1']
    #allocation16 [shape = 'u8[1536]{0}', space=vmem, size = 0x800, scoped, tag = 'input window, operand 8, single buffered']
    #allocation17 [shape = 'u8[32768]{0}', space=vmem, size = 0x8000, scoped, tag = 'input window, operand 9, single buffered']
    #allocation18 [shape = 's32[1]{0}', space=sflag, size = 0x4, scoped, tag = 'scoped memory for tpu_custom_call.1']
    #allocation19 [shape = 'u8[512]{0}', space=vmem, size = 0x400, scoped, tag = 'input window, operand 10, single buffered']
    #allocation20 [shape = 'u8[32768]{0}', space=vmem, size = 0x8000, scoped, tag = 'input window, operand 11, single buffered']
    #allocation21 [shape = 's32[1]{0}', space=sflag, size = 0x4, scoped, tag = 'scoped memory for tpu_custom_call.1']
    #allocation22 [shape = 'u8[512]{0}', space=vmem, size = 0x400, scoped, tag = 'input window, operand 12, single buffered']
    #allocation23 [shape = 'u8[32768]{0}', space=vmem, size = 0x8000, scoped, tag = 'input window, operand 13, single buffered']
    #allocation24 [shape = 's32[1]{0}', space=sflag, size = 0x4, scoped, tag = 'scoped memory for tpu_custom_call.1']
    #allocation25 [shape = 'u8[512]{0}', space=vmem, size = 0x400, scoped, tag = 'input window, operand 14, single buffered']
    #allocation26 [shape = 'u8[512]{0}', space=vmem, size = 0x400, scoped, tag = 'input window, operand 15, single buffered']
    #allocation27 [shape = 's32[1]{0}', space=sflag, size = 0x4, scoped, tag = 'scoped memory for tpu_custom_call.1']
    #allocation28 [shape = 'u8[512]{0}', space=vmem, size = 0x400, scoped, tag = 'input window, operand 16, single buffered']
    #allocation29 [shape = 'u8[1024]{0}', space=vmem, size = 0x400, scoped, tag = 'output window, operand 0']
    %24 = vsyncpa [#allocation3], 0
    %s25 = scalar_lea.sflag [#allocation3], 1
    %26 = vsyncpa %s25, 0
    %27 = vsyncpa [#allocation6], 0
    %s28 = scalar_lea.sflag [#allocation6], 1
    %29 = vsyncpa %s28, 0
    %30 = vsyncpa [#allocation9], 0
    %31 = vsyncpa [#allocation12], 0
    %32 = vsyncpa [#allocation15], 0
    %33 = vsyncpa [#allocation18], 0
    %34 = vsyncpa [#allocation21], 0
    %35 = vsyncpa [#allocation24], 0
    %36 = vsyncpa [#allocation27], 0
    %37 = vsyncpa [#allocation4], 0
    %s38 = scalar_lea.sflag [#allocation4], 1
    %39 = vsyncpa %s38, 0
    loop: start=0, step=1, limit=4
    $region2: #{tpu_custom_call.1} parent=1 // loop_pre_header
      _
    $region3: #{tpu_custom_call.1} parent=1 // loop_header
      %s41 = sphi 0, %s45
      %p42 = scmp.ge.s32.totalorder %s41, 4
      %s51 = sphi 0, %s53
      %s54 = sphi 0, %s51
      %s55 = sphi 0, %s54
      %s71 = sphi 0, %s55
      %s77 = sphi 0, %s79
      %s80 = sphi 0, %s77
      %s81 = sphi 0, %s80
      %s97 = sphi 0, %s81
      %s101 = sphi 0, %s101
      %s103 = sphi 0, %s101
      %s104 = sphi 0, %s103
      %s118 = sphi 0, %s104
      %s122 = sphi 0, %s122
      %s124 = sphi 0, %s122
      %s125 = sphi 0, %s124
      %s139 = sphi 0, %s125
      %s143 = sphi 0, %s143
      %s145 = sphi 0, %s143
      %s146 = sphi 0, %s145
      %s160 = sphi 0, %s146
      %s164 = sphi 0, %s164
      %s166 = sphi 0, %s164
      %s167 = sphi 0, %s166
      %s181 = sphi 0, %s167
      %s185 = sphi 0, %s185
      %s187 = sphi 0, %s185
      %s188 = sphi 0, %s187
      %s202 = sphi 0, %s188
      %s206 = sphi 0, %s206
      %s208 = sphi 0, %s206
      %s209 = sphi 0, %s208
      %s223 = sphi 0, %s209
      %s227 = sphi 0, %s227
      %s229 = sphi 0, %s227
      %s230 = sphi 0, %s229
      %s244 = sphi 0, %s230
      %s248 = sphi 0, %s248
      %s250 = sphi 0, %s248
      %s251 = sphi 0, %s250
      %s265 = sphi 0, %s251
      %s269 = sphi 0, %s269
      %s271 = sphi 0, %s269
      %s272 = sphi 0, %s271
      %s286 = sphi 0, %s272
      %s290 = sphi 0, %s290
      %s292 = sphi 0, %s290
      %s293 = sphi 0, %s292
      %s307 = sphi 0, %s293
      %s311 = sphi 0, %s311
      %s313 = sphi 0, %s311
      %s314 = sphi 0, %s313
      %s328 = sphi 0, %s314
      %s332 = sphi 0, %s332
      %s334 = sphi 0, %s332
      %s335 = sphi 0, %s334
      %s349 = sphi 0, %s335
      %s353 = sphi 0, %s353
      %s355 = sphi 0, %s353
      %s356 = sphi 0, %s355
      %s370 = sphi 0, %s356
      %s374 = sphi 0, %s374
      %s376 = sphi 0, %s374
      %s377 = sphi 0, %s376
      %s391 = sphi 0, %s377
      %s395 = sphi 0, %s395
      %s397 = sphi 0, %s395
      %s398 = sphi 0, %s397
      %s412 = sphi 0, %s398
      %s416 = sphi 0, %s416
      %s418 = sphi 0, %s416
      %s419 = sphi 0, %s418
      %s433 = sphi 0, %s419
      %s437 = sphi 0, %s437
      %s439 = sphi 0, %s437
      %s440 = sphi 0, %s439
      %s454 = sphi 0, %s440
      %s460 = sphi 0, %s462
      %s463 = sphi 0, %s460
      %s464 = sphi 0, %s463
      %s480 = sphi 0, %s464
    $region4: #{tpu_custom_call.1} parent=1 // loop_header_branch
      %44 = sbr.rel (%p42) target = $region8
    $region5: #{tpu_custom_call.1} parent=1 // loop_body
      %s46 = ssub.s32 %s41, 1
      %s47 = ssub.s32 %s41, 2
      %s48 = sadd.s32 %s41, 1
      %s49 = ssub.s32 %s41, %s48
      %p50 = scmp.eq.s32.totalorder %s49, 0
      %s52 = sadd.s32 %s51, 1
      %s53 = scalar_select %p50, %s51, %s52
      %p56 = pneg %p50
      %p57 = scmp.eq.s32.totalorder %s41, 1
      %p58 = por %p56, %p57
      %p59 = scmp.ne.s32.totalorder %s51, %s54
      %p60 = scmp.eq.s32.totalorder %s41, 0
      %p61 = por %p59, %p60
      %p62 = scmp.ne.s32.totalorder %s51, %s54
      %p63 = scmp.eq.s32.totalorder %s46, 1
      %p64 = por %p62, %p63
      %p65 = scmp.ne.s32.totalorder %s54, %s55
      %p66 = scmp.eq.s32.totalorder %s46, 0
      %p67 = por %p65, %p66
      %p68 = scmp.ne.s32.totalorder %s54, %s55
      %p69 = scmp.eq.s32.totalorder %s47, 1
      %p70 = por %p68, %p69
      %p72 = scmp.ne.s32.totalorder %s55, %s71
      %p73 = scmp.eq.s32.totalorder %s47, 0
      %p74 = por %p72, %p73
      %s75 = ssub.s32 %s41, %s48
      %p76 = scmp.eq.s32.totalorder %s75, 0
      %s78 = sadd.s32 %s77, 1
      %s79 = scalar_select %p76, %s77, %s78
      %p82 = pneg %p76
      %p83 = scmp.eq.s32.totalorder %s41, 1
      %p84 = por %p82, %p83
      %p85 = scmp.ne.s32.totalorder %s77, %s80
      %p86 = scmp.eq.s32.totalorder %s41, 0
      %p87 = por %p85, %p86
      %p88 = scmp.ne.s32.totalorder %s77, %s80
      %p89 = scmp.eq.s32.totalorder %s46, 1
      %p90 = por %p88, %p89
      %p91 = scmp.ne.s32.totalorder %s80, %s81
      %p92 = scmp.eq.s32.totalorder %s46, 0
      %p93 = por %p91, %p92
      %p94 = scmp.ne.s32.totalorder %s80, %s81
      %p95 = scmp.eq.s32.totalorder %s47, 1
      %p96 = por %p94, %p95
      %p98 = scmp.ne.s32.totalorder %s81, %s97
      %p99 = scmp.eq.s32.totalorder %s47, 0
      %p100 = por %p98, %p99
      %s102 = sadd.s32 %s101, 1
      %p105 = scmp.eq.s32.totalorder %s41, 1
      %p106 = scmp.ne.s32.totalorder %s101, %s103
      %p107 = scmp.eq.s32.totalorder %s41, 0
      %p108 = por %p106, %p107
      %p109 = scmp.ne.s32.totalorder %s101, %s103
      %p110 = scmp.eq.s32.totalorder %s46, 1
      %p111 = por %p109, %p110
      %p112 = scmp.ne.s32.totalorder %s103, %s104
      %p113 = scmp.eq.s32.totalorder %s46, 0
      %p114 = por %p112, %p113
      %p115 = scmp.ne.s32.totalorder %s103, %s104
      %p116 = scmp.eq.s32.totalorder %s47, 1
      %p117 = por %p115, %p116
      %p119 = scmp.ne.s32.totalorder %s104, %s118
      %p120 = scmp.eq.s32.totalorder %s47, 0
      %p121 = por %p119, %p120
      %s123 = sadd.s32 %s122, 1
      %p126 = scmp.eq.s32.totalorder %s41, 1
      %p127 = scmp.ne.s32.totalorder %s122, %s124
      %p128 = scmp.eq.s32.totalorder %s41, 0
      %p129 = por %p127, %p128
      %p130 = scmp.ne.s32.totalorder %s122, %s124
      %p131 = scmp.eq.s32.totalorder %s46, 1
      %p132 = por %p130, %p131
      %p133 = scmp.ne.s32.totalorder %s124, %s125
      %p134 = scmp.eq.s32.totalorder %s46, 0
      %p135 = por %p133, %p134
      %p136 = scmp.ne.s32.totalorder %s124, %s125
      %p137 = scmp.eq.s32.totalorder %s47, 1
      %p138 = por %p136, %p137
      %p140 = scmp.ne.s32.totalorder %s125, %s139
      %p141 = scmp.eq.s32.totalorder %s47, 0
      %p142 = por %p140, %p141
      %s144 = sadd.s32 %s143, 1
      %p147 = scmp.eq.s32.totalorder %s41, 1
      %p148 = scmp.ne.s32.totalorder %s143, %s145
      %p149 = scmp.eq.s32.totalorder %s41, 0
      %p150 = por %p148, %p149
      %p151 = scmp.ne.s32.totalorder %s143, %s145
      %p152 = scmp.eq.s32.totalorder %s46, 1
      %p153 = por %p151, %p152
      %p154 = scmp.ne.s32.totalorder %s145, %s146
      %p155 = scmp.eq.s32.totalorder %s46, 0
      %p156 = por %p154, %p155
      %p157 = scmp.ne.s32.totalorder %s145, %s146
      %p158 = scmp.eq.s32.totalorder %s47, 1
      %p159 = por %p157, %p158
      %p161 = scmp.ne.s32.totalorder %s146, %s160
      %p162 = scmp.eq.s32.totalorder %s47, 0
      %p163 = por %p161, %p162
      %s165 = sadd.s32 %s164, 1
      %p168 = scmp.eq.s32.totalorder %s41, 1
      %p169 = scmp.ne.s32.totalorder %s164, %s166
      %p170 = scmp.eq.s32.totalorder %s41, 0
      %p171 = por %p169, %p170
      %p172 = scmp.ne.s32.totalorder %s164, %s166
      %p173 = scmp.eq.s32.totalorder %s46, 1
      %p174 = por %p172, %p173
      %p175 = scmp.ne.s32.totalorder %s166, %s167
      %p176 = scmp.eq.s32.totalorder %s46, 0
      %p177 = por %p175, %p176
      %p178 = scmp.ne.s32.totalorder %s166, %s167
      %p179 = scmp.eq.s32.totalorder %s47, 1
      %p180 = por %p178, %p179
      %p182 = scmp.ne.s32.totalorder %s167, %s181
      %p183 = scmp.eq.s32.totalorder %s47, 0
      %p184 = por %p182, %p183
      %s186 = sadd.s32 %s185, 1
      %p189 = scmp.eq.s32.totalorder %s41, 1
      %p190 = scmp.ne.s32.totalorder %s185, %s187
      %p191 = scmp.eq.s32.totalorder %s41, 0
      %p192 = por %p190, %p191
      %p193 = scmp.ne.s32.totalorder %s185, %s187
      %p194 = scmp.eq.s32.totalorder %s46, 1
      %p195 = por %p193, %p194
      %p196 = scmp.ne.s32.totalorder %s187, %s188
      %p197 = scmp.eq.s32.totalorder %s46, 0
      %p198 = por %p196, %p197
      %p199 = scmp.ne.s32.totalorder %s187, %s188
      %p200 = scmp.eq.s32.totalorder %s47, 1
      %p201 = por %p199, %p200
      %p203 = scmp.ne.s32.totalorder %s188, %s202
      %p204 = scmp.eq.s32.totalorder %s47, 0
      %p205 = por %p203, %p204
      %s207 = sadd.s32 %s206, 1
      %p210 = scmp.eq.s32.totalorder %s41, 1
      %p211 = scmp.ne.s32.totalorder %s206, %s208
      %p212 = scmp.eq.s32.totalorder %s41, 0
      %p213 = por %p211, %p212
      %p214 = scmp.ne.s32.totalorder %s206, %s208
      %p215 = scmp.eq.s32.totalorder %s46, 1
      %p216 = por %p214, %p215
      %p217 = scmp.ne.s32.totalorder %s208, %s209
      %p218 = scmp.eq.s32.totalorder %s46, 0
      %p219 = por %p217, %p218
      %p220 = scmp.ne.s32.totalorder %s208, %s209
      %p221 = scmp.eq.s32.totalorder %s47, 1
      %p222 = por %p220, %p221
      %p224 = scmp.ne.s32.totalorder %s209, %s223
      %p225 = scmp.eq.s32.totalorder %s47, 0
      %p226 = por %p224, %p225
      %s228 = sadd.s32 %s227, 1
      %p231 = scmp.eq.s32.totalorder %s41, 1
      %p232 = scmp.ne.s32.totalorder %s227, %s229
      %p233 = scmp.eq.s32.totalorder %s41, 0
      %p234 = por %p232, %p233
      %p235 = scmp.ne.s32.totalorder %s227, %s229
      %p236 = scmp.eq.s32.totalorder %s46, 1
      %p237 = por %p235, %p236
      %p238 = scmp.ne.s32.totalorder %s229, %s230
      %p239 = scmp.eq.s32.totalorder %s46, 0
      %p240 = por %p238, %p239
      %p241 = scmp.ne.s32.totalorder %s229, %s230
      %p242 = scmp.eq.s32.totalorder %s47, 1
      %p243 = por %p241, %p242
      %p245 = scmp.ne.s32.totalorder %s230, %s244
      %p246 = scmp.eq.s32.totalorder %s47, 0
      %p247 = por %p245, %p246
      %s249 = sadd.s32 %s248, 1
      %p252 = scmp.eq.s32.totalorder %s41, 1
      %p253 = scmp.ne.s32.totalorder %s248, %s250
      %p254 = scmp.eq.s32.totalorder %s41, 0
      %p255 = por %p253, %p254
      %p256 = scmp.ne.s32.totalorder %s248, %s250
      %p257 = scmp.eq.s32.totalorder %s46, 1
      %p258 = por %p256, %p257
      %p259 = scmp.ne.s32.totalorder %s250, %s251
      %p260 = scmp.eq.s32.totalorder %s46, 0
      %p261 = por %p259, %p260
      %p262 = scmp.ne.s32.totalorder %s250, %s251
      %p263 = scmp.eq.s32.totalorder %s47, 1
      %p264 = por %p262, %p263
      %p266 = scmp.ne.s32.totalorder %s251, %s265
      %p267 = scmp.eq.s32.totalorder %s47, 0
      %p268 = por %p266, %p267
      %s270 = sadd.s32 %s269, 1
      %p273 = scmp.eq.s32.totalorder %s41, 1
      %p274 = scmp.ne.s32.totalorder %s269, %s271
      %p275 = scmp.eq.s32.totalorder %s41, 0
      %p276 = por %p274, %p275
      %p277 = scmp.ne.s32.totalorder %s269, %s271
      %p278 = scmp.eq.s32.totalorder %s46, 1
      %p279 = por %p277, %p278
      %p280 = scmp.ne.s32.totalorder %s271, %s272
      %p281 = scmp.eq.s32.totalorder %s46, 0
      %p282 = por %p280, %p281
      %p283 = scmp.ne.s32.totalorder %s271, %s272
      %p284 = scmp.eq.s32.totalorder %s47, 1
      %p285 = por %p283, %p284
      %p287 = scmp.ne.s32.totalorder %s272, %s286
      %p288 = scmp.eq.s32.totalorder %s47, 0
      %p289 = por %p287, %p288
      %s291 = sadd.s32 %s290, 1
      %p294 = scmp.eq.s32.totalorder %s41, 1
      %p295 = scmp.ne.s32.totalorder %s290, %s292
      %p296 = scmp.eq.s32.totalorder %s41, 0
      %p297 = por %p295, %p296
      %p298 = scmp.ne.s32.totalorder %s290, %s292
      %p299 = scmp.eq.s32.totalorder %s46, 1
      %p300 = por %p298, %p299
      %p301 = scmp.ne.s32.totalorder %s292, %s293
      %p302 = scmp.eq.s32.totalorder %s46, 0
      %p303 = por %p301, %p302
      %p304 = scmp.ne.s32.totalorder %s292, %s293
      %p305 = scmp.eq.s32.totalorder %s47, 1
      %p306 = por %p304, %p305
      %p308 = scmp.ne.s32.totalorder %s293, %s307
      %p309 = scmp.eq.s32.totalorder %s47, 0
      %p310 = por %p308, %p309
      %s312 = sadd.s32 %s311, 1
      %p315 = scmp.eq.s32.totalorder %s41, 1
      %p316 = scmp.ne.s32.totalorder %s311, %s313
      %p317 = scmp.eq.s32.totalorder %s41, 0
      %p318 = por %p316, %p317
      %p319 = scmp.ne.s32.totalorder %s311, %s313
      %p320 = scmp.eq.s32.totalorder %s46, 1
      %p321 = por %p319, %p320
      %p322 = scmp.ne.s32.totalorder %s313, %s314
      %p323 = scmp.eq.s32.totalorder %s46, 0
      %p324 = por %p322, %p323
      %p325 = scmp.ne.s32.totalorder %s313, %s314
      %p326 = scmp.eq.s32.totalorder %s47, 1
      %p327 = por %p325, %p326
      %p329 = scmp.ne.s32.totalorder %s314, %s328
      %p330 = scmp.eq.s32.totalorder %s47, 0
      %p331 = por %p329, %p330
      %s333 = sadd.s32 %s332, 1
      %p336 = scmp.eq.s32.totalorder %s41, 1
      %p337 = scmp.ne.s32.totalorder %s332, %s334
      %p338 = scmp.eq.s32.totalorder %s41, 0
      %p339 = por %p337, %p338
      %p340 = scmp.ne.s32.totalorder %s332, %s334
      %p341 = scmp.eq.s32.totalorder %s46, 1
      %p342 = por %p340, %p341
      %p343 = scmp.ne.s32.totalorder %s334, %s335
      %p344 = scmp.eq.s32.totalorder %s46, 0
      %p345 = por %p343, %p344
      %p346 = scmp.ne.s32.totalorder %s334, %s335
      %p347 = scmp.eq.s32.totalorder %s47, 1
      %p348 = por %p346, %p347
      %p350 = scmp.ne.s32.totalorder %s335, %s349
      %p351 = scmp.eq.s32.totalorder %s47, 0
      %p352 = por %p350, %p351
      %s354 = sadd.s32 %s353, 1
      %p357 = scmp.eq.s32.totalorder %s41, 1
      %p358 = scmp.ne.s32.totalorder %s353, %s355
      %p359 = scmp.eq.s32.totalorder %s41, 0
      %p360 = por %p358, %p359
      %p361 = scmp.ne.s32.totalorder %s353, %s355
      %p362 = scmp.eq.s32.totalorder %s46, 1
      %p363 = por %p361, %p362
      %p364 = scmp.ne.s32.totalorder %s355, %s356
      %p365 = scmp.eq.s32.totalorder %s46, 0
      %p366 = por %p364, %p365
      %p367 = scmp.ne.s32.totalorder %s355, %s356
      %p368 = scmp.eq.s32.totalorder %s47, 1
      %p369 = por %p367, %p368
      %p371 = scmp.ne.s32.totalorder %s356, %s370
      %p372 = scmp.eq.s32.totalorder %s47, 0
      %p373 = por %p371, %p372
      %s375 = sadd.s32 %s374, 1
      %p378 = scmp.eq.s32.totalorder %s41, 1
      %p379 = scmp.ne.s32.totalorder %s374, %s376
      %p380 = scmp.eq.s32.totalorder %s41, 0
      %p381 = por %p379, %p380
      %p382 = scmp.ne.s32.totalorder %s374, %s376
      %p383 = scmp.eq.s32.totalorder %s46, 1
      %p384 = por %p382, %p383
      %p385 = scmp.ne.s32.totalorder %s376, %s377
      %p386 = scmp.eq.s32.totalorder %s46, 0
      %p387 = por %p385, %p386
      %p388 = scmp.ne.s32.totalorder %s376, %s377
      %p389 = scmp.eq.s32.totalorder %s47, 1
      %p390 = por %p388, %p389
      %p392 = scmp.ne.s32.totalorder %s377, %s391
      %p393 = scmp.eq.s32.totalorder %s47, 0
      %p394 = por %p392, %p393
      %s396 = sadd.s32 %s395, 1
      %p399 = scmp.eq.s32.totalorder %s41, 1
      %p400 = scmp.ne.s32.totalorder %s395, %s397
      %p401 = scmp.eq.s32.totalorder %s41, 0
      %p402 = por %p400, %p401
      %p403 = scmp.ne.s32.totalorder %s395, %s397
      %p404 = scmp.eq.s32.totalorder %s46, 1
      %p405 = por %p403, %p404
      %p406 = scmp.ne.s32.totalorder %s397, %s398
      %p407 = scmp.eq.s32.totalorder %s46, 0
      %p408 = por %p406, %p407
      %p409 = scmp.ne.s32.totalorder %s397, %s398
      %p410 = scmp.eq.s32.totalorder %s47, 1
      %p411 = por %p409, %p410
      %p413 = scmp.ne.s32.totalorder %s398, %s412
      %p414 = scmp.eq.s32.totalorder %s47, 0
      %p415 = por %p413, %p414
      %s417 = sadd.s32 %s416, 1
      %p420 = scmp.eq.s32.totalorder %s41, 1
      %p421 = scmp.ne.s32.totalorder %s416, %s418
      %p422 = scmp.eq.s32.totalorder %s41, 0
      %p423 = por %p421, %p422
      %p424 = scmp.ne.s32.totalorder %s416, %s418
      %p425 = scmp.eq.s32.totalorder %s46, 1
      %p426 = por %p424, %p425
      %p427 = scmp.ne.s32.totalorder %s418, %s419
      %p428 = scmp.eq.s32.totalorder %s46, 0
      %p429 = por %p427, %p428
      %p430 = scmp.ne.s32.totalorder %s418, %s419
      %p431 = scmp.eq.s32.totalorder %s47, 1
      %p432 = por %p430, %p431
      %p434 = scmp.ne.s32.totalorder %s419, %s433
      %p435 = scmp.eq.s32.totalorder %s47, 0
      %p436 = por %p434, %p435
      %s438 = sadd.s32 %s437, 1
      %p441 = scmp.eq.s32.totalorder %s41, 1
      %p442 = scmp.ne.s32.totalorder %s437, %s439
      %p443 = scmp.eq.s32.totalorder %s41, 0
      %p444 = por %p442, %p443
      %p445 = scmp.ne.s32.totalorder %s437, %s439
      %p446 = scmp.eq.s32.totalorder %s46, 1
      %p447 = por %p445, %p446
      %p448 = scmp.ne.s32.totalorder %s439, %s440
      %p449 = scmp.eq.s32.totalorder %s46, 0
      %p450 = por %p448, %p449
      %p451 = scmp.ne.s32.totalorder %s439, %s440
      %p452 = scmp.eq.s32.totalorder %s47, 1
      %p453 = por %p451, %p452
      %p455 = scmp.ne.s32.totalorder %s440, %s454
      %p456 = scmp.eq.s32.totalorder %s47, 0
      %p457 = por %p455, %p456
      %s458 = ssub.s32 %s41, %s48
      %p459 = scmp.eq.s32.totalorder %s458, 0
      %s461 = sadd.s32 %s460, 1
      %s462 = scalar_select %p459, %s460, %s461
      %p465 = pneg %p459
      %p466 = scmp.eq.s32.totalorder %s41, 1
      %p467 = por %p465, %p466
      %p468 = scmp.ne.s32.totalorder %s460, %s463
      %p469 = scmp.eq.s32.totalorder %s41, 0
      %p470 = por %p468, %p469
      %p471 = scmp.ne.s32.totalorder %s460, %s463
      %p472 = scmp.eq.s32.totalorder %s46, 1
      %p473 = por %p471, %p472
      %p474 = scmp.ne.s32.totalorder %s463, %s464
      %p475 = scmp.eq.s32.totalorder %s46, 0
      %p476 = por %p474, %p475
      %p477 = scmp.ne.s32.totalorder %s463, %s464
      %p478 = scmp.eq.s32.totalorder %s47, 1
      %p479 = por %p477, %p478
      %p481 = scmp.ne.s32.totalorder %s464, %s480
      %p482 = scmp.eq.s32.totalorder %s47, 0
      %p483 = por %p481, %p482
      %p484 = scmp.le.s32.totalorder 1, %s41
      %p485 = scmp.lt.s32.totalorder %s41, 3
      %p486 = pnand %p484, %p485
      %p487 = pneg %p486
      // Predicated region
      $region9: #{tpu_custom_call.1} parent=5 // pred_check
        _
      $region10: #{tpu_custom_call.1} parent=5 // pred_check_branch
        %489 = sbr.rel (%p486) target = $region12
      $region11: #{tpu_custom_call.1} parent=5 // pred_region
        %s490 = ssub.s32 %s41, 1
        // Predicated region
        $region13: #{tpu_custom_call.1} parent=11 // pred_check
          %p491 = pneg %p114
        $region14: #{tpu_custom_call.1} parent=11 // pred_check_branch
          %493 = sbr.rel (%p491) target = $region16
        $region15: #{tpu_custom_call.1} parent=11 // pred_region
          %s495 = ssub.s32 2048, 2048
          %496 = vsyncadd [#allocation6], %s495
          %s497 = sshll.u32 [#allocation7], 4
          %s498 = int_to_ptr.vmem [resolvable:$true] %s497
          %503 = dma.hbm_to_vmem [thread:$0]  %s2, 2048, %s498, [#allocation6], 128, 128, 8
        $region16: #{tpu_custom_call.1} parent=11 // pred_fallthru
          _
        // Predicated region
        $region17: #{tpu_custom_call.1} parent=11 // pred_check
          %p504 = pneg %p135
        $region18: #{tpu_custom_call.1} parent=11 // pred_check_branch
          %506 = sbr.rel (%p504) target = $region20
        $region19: #{tpu_custom_call.1} parent=11 // pred_region
          %s508 = ssub.s32 3072, 3072
          %509 = vsyncadd [#allocation9], %s508
          %s510 = sshll.u32 [#allocation8], 4
          %s511 = int_to_ptr.vmem [resolvable:$true] %s510
          %516 = dma.hbm_to_vmem [thread:$0]  %s3, 3072, %s511, [#allocation9], 192, 192, 12
        $region20: #{tpu_custom_call.1} parent=11 // pred_fallthru
          _
        // Predicated region
        $region21: #{tpu_custom_call.1} parent=11 // pred_check
          %p517 = pneg %p156
        $region22: #{tpu_custom_call.1} parent=11 // pred_check_branch
          %519 = sbr.rel (%p517) target = $region24
        $region23: #{tpu_custom_call.1} parent=11 // pred_region
          %s521 = ssub.s32 48, 48
          %522 = vsyncadd [#allocation9], %s521
          %s524 = sshll.u32 [#allocation10], 4
          %s525 = int_to_ptr.vmem [resolvable:$true] %s524
          %527 = dma.hbm_to_vmem [thread:$0]  %s4, 48, %s525, [#allocation9]
        $region24: #{tpu_custom_call.1} parent=11 // pred_fallthru
          _
        // Predicated region
        $region25: #{tpu_custom_call.1} parent=11 // pred_check
          %p528 = pneg %p177
        $region26: #{tpu_custom_call.1} parent=11 // pred_check_branch
          %530 = sbr.rel (%p528) target = $region28
        $region27: #{tpu_custom_call.1} parent=11 // pred_region
          %s532 = ssub.s32 1024, 1024
          %533 = vsyncadd [#allocation12], %s532
          %s534 = sshll.u32 [#allocation11], 4
          %s535 = int_to_ptr.vmem [resolvable:$true] %s534
          %540 = dma.hbm_to_vmem [thread:$0]  %s5, 1024, %s535, [#allocation12], 64, 64, 4
        $region28: #{tpu_custom_call.1} parent=11 // pred_fallthru
          _
        // Predicated region
        $region29: #{tpu_custom_call.1} parent=11 // pred_check
          %p541 = pneg %p198
        $region30: #{tpu_custom_call.1} parent=11 // pred_check_branch
          %543 = sbr.rel (%p541) target = $region32
        $region31: #{tpu_custom_call.1} parent=11 // pred_region
          %s545 = ssub.s32 16, 16
          %546 = vsyncadd [#allocation12], %s545
          %s548 = sshll.u32 [#allocation13], 4
          %s549 = int_to_ptr.vmem [resolvable:$true] %s548
          %551 = dma.hbm_to_vmem [thread:$0]  %s6, 16, %s549, [#allocation12]
        $region32: #{tpu_custom_call.1} parent=11 // pred_fallthru
          _
        // Predicated region
        $region33: #{tpu_custom_call.1} parent=11 // pred_check
          %p552 = pneg %p219
        $region34: #{tpu_custom_call.1} parent=11 // pred_check_branch
          %554 = sbr.rel (%p552) target = $region36
        $region35: #{tpu_custom_call.1} parent=11 // pred_region
          %s556 = ssub.s32 3072, 3072
          %557 = vsyncadd [#allocation15], %s556
          %s558 = sshll.u32 [#allocation14], 4
          %s559 = int_to_ptr.vmem [resolvable:$true] %s558
          %564 = dma.hbm_to_vmem [thread:$0]  %s7, 3072, %s559, [#allocation15], 192, 192, 12
        $region36: #{tpu_custom_call.1} parent=11 // pred_fallthru
          _
        // Predicated region
        $region37: #{tpu_custom_call.1} parent=11 // pred_check
          %p565 = pneg %p240
        $region38: #{tpu_custom_call.1} parent=11 // pred_check_branch
          %567 = sbr.rel (%p565) target = $region40
        $region39: #{tpu_custom_call.1} parent=11 // pred_region
          %s569 = ssub.s32 48, 48
          %570 = vsyncadd [#allocation15], %s569
          %s572 = sshll.u32 [#allocation16], 4
          %s573 = int_to_ptr.vmem [resolvable:$true] %s572
          %575 = dma.hbm_to_vmem [thread:$0]  %s8, 48, %s573, [#allocation15]
        $region40: #{tpu_custom_call.1} parent=11 // pred_fallthru
          _
        // Predicated region
        $region41: #{tpu_custom_call.1} parent=11 // pred_check
          %p576 = pneg %p261
        $region42: #{tpu_custom_call.1} parent=11 // pred_check_branch
          %578 = sbr.rel (%p576) target = $region44
        $region43: #{tpu_custom_call.1} parent=11 // pred_region
          %s580 = ssub.s32 1024, 1024
          %581 = vsyncadd [#allocation18], %s580
          %s582 = sshll.u32 [#allocation17], 4
          %s583 = int_to_ptr.vmem [resolvable:$true] %s582
          %588 = dma.hbm_to_vmem [thread:$0]  %s9, 1024, %s583, [#allocation18], 64, 64, 4
        $region44: #{tpu_custom_call.1} parent=11 // pred_fallthru
          _
        // Predicated region
        $region45: #{tpu_custom_call.1} parent=11 // pred_check
          %p589 = pneg %p282
        $region46: #{tpu_custom_call.1} parent=11 // pred_check_branch
          %591 = sbr.rel (%p589) target = $region48
        $region47: #{tpu_custom_call.1} parent=11 // pred_region
          %s593 = ssub.s32 16, 16
          %594 = vsyncadd [#allocation18], %s593
          %s596 = sshll.u32 [#allocation19], 4
          %s597 = int_to_ptr.vmem [resolvable:$true] %s596
          %599 = dma.hbm_to_vmem [thread:$0]  %s10, 16, %s597, [#allocation18]
        $region48: #{tpu_custom_call.1} parent=11 // pred_fallthru
          _
        // Predicated region
        $region49: #{tpu_custom_call.1} parent=11 // pred_check
          %p600 = pneg %p303
        $region50: #{tpu_custom_call.1} parent=11 // pred_check_branch
          %602 = sbr.rel (%p600) target = $region52
        $region51: #{tpu_custom_call.1} parent=11 // pred_region
          %s604 = ssub.s32 1024, 1024
          %605 = vsyncadd [#allocation21], %s604
          %s606 = sshll.u32 [#allocation20], 4
          %s607 = int_to_ptr.vmem [resolvable:$true] %s606
          %612 = dma.hbm_to_vmem [thread:$0]  %s11, 1024, %s607, [#allocation21], 64, 64, 4
        $region52: #{tpu_custom_call.1} parent=11 // pred_fallthru
          _
        // Predicated region
        $region53: #{tpu_custom_call.1} parent=11 // pred_check
          %p613 = pneg %p324
        $region54: #{tpu_custom_call.1} parent=11 // pred_check_branch
          %615 = sbr.rel (%p613) target = $region56
        $region55: #{tpu_custom_call.1} parent=11 // pred_region
          %s617 = ssub.s32 16, 16
          %618 = vsyncadd [#allocation21], %s617
          %s620 = sshll.u32 [#allocation22], 4
          %s621 = int_to_ptr.vmem [resolvable:$true] %s620
          %623 = dma.hbm_to_vmem [thread:$0]  %s12, 16, %s621, [#allocation21]
        $region56: #{tpu_custom_call.1} parent=11 // pred_fallthru
          _
        // Predicated region
        $region57: #{tpu_custom_call.1} parent=11 // pred_check
          %p624 = pneg %p345
        $region58: #{tpu_custom_call.1} parent=11 // pred_check_branch
          %626 = sbr.rel (%p624) target = $region60
        $region59: #{tpu_custom_call.1} parent=11 // pred_region
          %s628 = ssub.s32 1024, 1024
          %629 = vsyncadd [#allocation24], %s628
          %s630 = sshll.u32 [#allocation23], 4
          %s631 = int_to_ptr.vmem [resolvable:$true] %s630
          %636 = dma.hbm_to_vmem [thread:$0]  %s13, 1024, %s631, [#allocation24], 64, 64, 4
        $region60: #{tpu_custom_call.1} parent=11 // pred_fallthru
          _
        // Predicated region
        $region61: #{tpu_custom_call.1} parent=11 // pred_check
          %p637 = pneg %p366
        $region62: #{tpu_custom_call.1} parent=11 // pred_check_branch
          %639 = sbr.rel (%p637) target = $region64
        $region63: #{tpu_custom_call.1} parent=11 // pred_region
          %s641 = ssub.s32 16, 16
          %642 = vsyncadd [#allocation24], %s641
          %s644 = sshll.u32 [#allocation25], 4
          %s645 = int_to_ptr.vmem [resolvable:$true] %s644
          %647 = dma.hbm_to_vmem [thread:$0]  %s14, 16, %s645, [#allocation24]
        $region64: #{tpu_custom_call.1} parent=11 // pred_fallthru
          _
        // Predicated region
        $region65: #{tpu_custom_call.1} parent=11 // pred_check
          %p648 = pneg %p387
        $region66: #{tpu_custom_call.1} parent=11 // pred_check_branch
          %650 = sbr.rel (%p648) target = $region68
        $region67: #{tpu_custom_call.1} parent=11 // pred_region
          %s652 = ssub.s32 16, 16
          %653 = vsyncadd [#allocation27], %s652
          %s655 = sshll.u32 [#allocation26], 4
          %s656 = int_to_ptr.vmem [resolvable:$true] %s655
          %658 = dma.hbm_to_vmem [thread:$0]  %s15, 16, %s656, [#allocation27]
        $region68: #{tpu_custom_call.1} parent=11 // pred_fallthru
          _
        // Predicated region
        $region69: #{tpu_custom_call.1} parent=11 // pred_check
          %p659 = pneg %p408
        $region70: #{tpu_custom_call.1} parent=11 // pred_check_branch
          %661 = sbr.rel (%p659) target = $region72
        $region71: #{tpu_custom_call.1} parent=11 // pred_region
          %s663 = ssub.s32 16, 16
          %664 = vsyncadd [#allocation27], %s663
          %s666 = sshll.u32 [#allocation28], 4
          %s667 = int_to_ptr.vmem [resolvable:$true] %s666
          %669 = dma.hbm_to_vmem [thread:$0]  %s16, 16, %s667, [#allocation27]
        $region72: #{tpu_custom_call.1} parent=11 // pred_fallthru
          _
        // Predicated region
        $region73: #{tpu_custom_call.1} parent=11 // pred_check
          %p670 = pneg %p429
        $region74: #{tpu_custom_call.1} parent=11 // pred_check_branch
          %672 = sbr.rel (%p670) target = $region76
        $region75: #{tpu_custom_call.1} parent=11 // pred_region
          _
        $region76: #{tpu_custom_call.1} parent=11 // pred_fallthru
          _
        // Predicated region
        $region77: #{tpu_custom_call.1} parent=11 // pred_check
          %p673 = pneg %p450
        $region78: #{tpu_custom_call.1} parent=11 // pred_check_branch
          %675 = sbr.rel (%p673) target = $region80
        $region79: #{tpu_custom_call.1} parent=11 // pred_region
          _
        $region80: #{tpu_custom_call.1} parent=11 // pred_fallthru
          _
      $region12: #{tpu_custom_call.1} parent=5 // pred_fallthru
        _
      %p676 = scmp.lt.s32.totalorder %s41, 2
      // Predicated region
      $region81: #{tpu_custom_call.1} parent=5 // pred_check
        %p677 = pneg %p676
      $region82: #{tpu_custom_call.1} parent=5 // pred_check_branch
        %679 = sbr.rel (%p677) target = $region84
      $region83: #{tpu_custom_call.1} parent=5 // pred_region
        // Predicated region
        $region85: #{tpu_custom_call.1} parent=83 // pred_check
          %p680 = pneg %p61
        $region86: #{tpu_custom_call.1} parent=83 // pred_check_branch
          %682 = sbr.rel (%p680) target = $region88
        $region87: #{tpu_custom_call.1} parent=83 // pred_region
          %s683 = sand.u32 %s51, 1
          %s684 = scalar_lea.sflag [#allocation3], %s683
          %s685 = sand.u32 %s51, 1
          %s686 = smul.addr %s685, 32
          %s687 = scalar_lea.vmem [#allocation2], %s686
          %s689 = ssub.s32 512, 512
          %690 = vsyncadd %s684, %s689
          %s691 = smul.addr %s41, 4
          %s692 = smul.addr %s691, 128
          %s693 = scalar_lea.hbm %s0, %s692
          %s694 = sshll.u32 %s687, 4
          %s695 = int_to_ptr.vmem [resolvable:$true] %s694
          %700 = dma.hbm_to_vmem [thread:$0]  %s693, 512, %s695, %s684, 128, 128, 8
        $region88: #{tpu_custom_call.1} parent=83 // pred_fallthru
          _
        // Predicated region
        $region89: #{tpu_custom_call.1} parent=83 // pred_check
          %p701 = pneg %p87
        $region90: #{tpu_custom_call.1} parent=83 // pred_check_branch
          %703 = sbr.rel (%p701) target = $region92
        $region91: #{tpu_custom_call.1} parent=83 // pred_region
          %s704 = sand.u32 %s41, 1
          %s705 = scalar_lea.sflag [#allocation6], %s704
          %s706 = sand.u32 %s77, 1
          %s707 = smul.addr %s706, 32
          %s708 = scalar_lea.vmem [#allocation5], %s707
          %s710 = ssub.s32 512, 512
          %711 = vsyncadd %s705, %s710
          %s712 = smul.addr %s41, 4
          %s713 = smul.addr %s712, 128
          %s714 = scalar_lea.hbm %s1, %s713
          %s715 = sshll.u32 %s708, 4
          %s716 = int_to_ptr.vmem [resolvable:$true] %s715
          %721 = dma.hbm_to_vmem [thread:$0]  %s714, 512, %s716, %s705, 128, 128, 8
        $region92: #{tpu_custom_call.1} parent=83 // pred_fallthru
          _
      $region84: #{tpu_custom_call.1} parent=5 // pred_fallthru
        _
      %p722 = scmp.le.s32.totalorder 1, %s41
      %p723 = scmp.lt.s32.totalorder %s41, 3
      %p724 = pnand %p722, %p723
      %p725 = pneg %p724
      // Predicated region
      $region93: #{tpu_custom_call.1} parent=5 // pred_check
        _
      $region94: #{tpu_custom_call.1} parent=5 // pred_check_branch
        %727 = sbr.rel (%p724) target = $region96
      $region95: #{tpu_custom_call.1} parent=5 // pred_region
        %s728 = ssub.s32 %s41, 1
        %s729 = sand.u32 %s54, 1
        %s730 = scalar_lea.sflag [#allocation3], %s729
        %s731 = sand.u32 %s54, 1
        %s732 = smul.addr %s731, 32
        %s733 = scalar_lea.vmem [#allocation2], %s732
        // Predicated region
        $region97: #{tpu_custom_call.1} parent=95 // pred_check
          %p734 = pneg %p67
        $region98: #{tpu_custom_call.1} parent=95 // pred_check_branch
          %736 = sbr.rel (%p734) target = $region100
        $region99: #{tpu_custom_call.1} parent=95 // pred_region
          %737 = dma.done %s730, 512
        $region100: #{tpu_custom_call.1} parent=95 // pred_fallthru
          _
        %s738 = sand.u32 %s46, 1
        %s739 = scalar_lea.sflag [#allocation6], %s738
        %s740 = sand.u32 %s80, 1
        %s741 = smul.addr %s740, 32
        %s742 = scalar_lea.vmem [#allocation5], %s741
        // Predicated region
        $region101: #{tpu_custom_call.1} parent=95 // pred_check
          %p743 = pneg %p93
        $region102: #{tpu_custom_call.1} parent=95 // pred_check_branch
          %745 = sbr.rel (%p743) target = $region104
        $region103: #{tpu_custom_call.1} parent=95 // pred_region
          %746 = dma.done %s739, 512
        $region104: #{tpu_custom_call.1} parent=95 // pred_fallthru
          _
        // Predicated region
        $region105: #{tpu_custom_call.1} parent=95 // pred_check
          %p747 = pneg %p114
        $region106: #{tpu_custom_call.1} parent=95 // pred_check_branch
          %749 = sbr.rel (%p747) target = $region108
        $region107: #{tpu_custom_call.1} parent=95 // pred_region
          %750 = dma.done [#allocation6], 2048
        $region108: #{tpu_custom_call.1} parent=95 // pred_fallthru
          _
        // Predicated region
        $region109: #{tpu_custom_call.1} parent=95 // pred_check
          %p751 = pneg %p135
        $region110: #{tpu_custom_call.1} parent=95 // pred_check_branch
          %753 = sbr.rel (%p751) target = $region112
        $region111: #{tpu_custom_call.1} parent=95 // pred_region
          %754 = dma.done [#allocation9], 3072
        $region112: #{tpu_custom_call.1} parent=95 // pred_fallthru
          _
        // Predicated region
        $region113: #{tpu_custom_call.1} parent=95 // pred_check
          %p755 = pneg %p156
        $region114: #{tpu_custom_call.1} parent=95 // pred_check_branch
          %757 = sbr.rel (%p755) target = $region116
        $region115: #{tpu_custom_call.1} parent=95 // pred_region
          %758 = dma.done [#allocation9], 48
        $region116: #{tpu_custom_call.1} parent=95 // pred_fallthru
          _
        // Predicated region
        $region117: #{tpu_custom_call.1} parent=95 // pred_check
          %p759 = pneg %p177
        $region118: #{tpu_custom_call.1} parent=95 // pred_check_branch
          %761 = sbr.rel (%p759) target = $region120
        $region119: #{tpu_custom_call.1} parent=95 // pred_region
          %762 = dma.done [#allocation12], 1024
        $region120: #{tpu_custom_call.1} parent=95 // pred_fallthru
          _
        // Predicated region
        $region121: #{tpu_custom_call.1} parent=95 // pred_check
          %p763 = pneg %p198
        $region122: #{tpu_custom_call.1} parent=95 // pred_check_branch
          %765 = sbr.rel (%p763) target = $region124
        $region123: #{tpu_custom_call.1} parent=95 // pred_region
          %766 = dma.done [#allocation12], 16
        $region124: #{tpu_custom_call.1} parent=95 // pred_fallthru
          _
        // Predicated region
        $region125: #{tpu_custom_call.1} parent=95 // pred_check
          %p767 = pneg %p219
        $region126: #{tpu_custom_call.1} parent=95 // pred_check_branch
          %769 = sbr.rel (%p767) target = $region128
        $region127: #{tpu_custom_call.1} parent=95 // pred_region
          %770 = dma.done [#allocation15], 3072
        $region128: #{tpu_custom_call.1} parent=95 // pred_fallthru
          _
        // Predicated region
        $region129: #{tpu_custom_call.1} parent=95 // pred_check
          %p771 = pneg %p240
        $region130: #{tpu_custom_call.1} parent=95 // pred_check_branch
          %773 = sbr.rel (%p771) target = $region132
        $region131: #{tpu_custom_call.1} parent=95 // pred_region
          %774 = dma.done [#allocation15], 48
        $region132: #{tpu_custom_call.1} parent=95 // pred_fallthru
          _
        // Predicated region
        $region133: #{tpu_custom_call.1} parent=95 // pred_check
          %p775 = pneg %p261
        $region134: #{tpu_custom_call.1} parent=95 // pred_check_branch
          %777 = sbr.rel (%p775) target = $region136
        $region135: #{tpu_custom_call.1} parent=95 // pred_region
          %778 = dma.done [#allocation18], 1024
        $region136: #{tpu_custom_call.1} parent=95 // pred_fallthru
          _
        // Predicated region
        $region137: #{tpu_custom_call.1} parent=95 // pred_check
          %p779 = pneg %p282
        $region138: #{tpu_custom_call.1} parent=95 // pred_check_branch
          %781 = sbr.rel (%p779) target = $region140
        $region139: #{tpu_custom_call.1} parent=95 // pred_region
          %782 = dma.done [#allocation18], 16
        $region140: #{tpu_custom_call.1} parent=95 // pred_fallthru
          _
        // Predicated region
        $region141: #{tpu_custom_call.1} parent=95 // pred_check
          %p783 = pneg %p303
        $region142: #{tpu_custom_call.1} parent=95 // pred_check_branch
          %785 = sbr.rel (%p783) target = $region144
        $region143: #{tpu_custom_call.1} parent=95 // pred_region
          %786 = dma.done [#allocation21], 1024
        $region144: #{tpu_custom_call.1} parent=95 // pred_fallthru
          _
        // Predicated region
        $region145: #{tpu_custom_call.1} parent=95 // pred_check
          %p787 = pneg %p324
        $region146: #{tpu_custom_call.1} parent=95 // pred_check_branch
          %789 = sbr.rel (%p787) target = $region148
        $region147: #{tpu_custom_call.1} parent=95 // pred_region
          %790 = dma.done [#allocation21], 16
        $region148: #{tpu_custom_call.1} parent=95 // pred_fallthru
          _
        // Predicated region
        $region149: #{tpu_custom_call.1} parent=95 // pred_check
          %p791 = pneg %p345
        $region150: #{tpu_custom_call.1} parent=95 // pred_check_branch
          %793 = sbr.rel (%p791) target = $region152
        $region151: #{tpu_custom_call.1} parent=95 // pred_region
          %794 = dma.done [#allocation24], 1024
        $region152: #{tpu_custom_call.1} parent=95 // pred_fallthru
          _
        // Predicated region
        $region153: #{tpu_custom_call.1} parent=95 // pred_check
          %p795 = pneg %p366
        $region154: #{tpu_custom_call.1} parent=95 // pred_check_branch
          %797 = sbr.rel (%p795) target = $region156
        $region155: #{tpu_custom_call.1} parent=95 // pred_region
          %798 = dma.done [#allocation24], 16
        $region156: #{tpu_custom_call.1} parent=95 // pred_fallthru
          _
        // Predicated region
        $region157: #{tpu_custom_call.1} parent=95 // pred_check
          %p799 = pneg %p387
        $region158: #{tpu_custom_call.1} parent=95 // pred_check_branch
          %801 = sbr.rel (%p799) target = $region160
        $region159: #{tpu_custom_call.1} parent=95 // pred_region
          %802 = dma.done [#allocation27], 16
        $region160: #{tpu_custom_call.1} parent=95 // pred_fallthru
          _
        // Predicated region
        $region161: #{tpu_custom_call.1} parent=95 // pred_check
          %p803 = pneg %p408
        $region162: #{tpu_custom_call.1} parent=95 // pred_check_branch
          %805 = sbr.rel (%p803) target = $region164
        $region163: #{tpu_custom_call.1} parent=95 // pred_region
          %806 = dma.done [#allocation27], 16
        $region164: #{tpu_custom_call.1} parent=95 // pred_fallthru
          _
        %s807 = sand.u32 %s54, 1
        %s808 = scalar_lea.sflag [#allocation3], %s807
        %s809 = sand.u32 %s54, 1
        %s810 = smul.addr %s809, 32
        %s811 = scalar_lea.vmem [#allocation2], %s810
        %p812 = pneg %p67
        %p813 = pneg %p64
        %s814 = sand.u32 %s46, 1
        %s815 = scalar_lea.sflag [#allocation6], %s814
        %s816 = sand.u32 %s80, 1
        %s817 = smul.addr %s816, 32
        %s818 = scalar_lea.vmem [#allocation5], %s817
        %p819 = pneg %p93
        %p820 = pneg %p90
        %p821 = pneg %p114
        %p822 = pneg %p111
        %p823 = pneg %p135
        %p824 = pneg %p132
        %p825 = pneg %p156
        %p826 = pneg %p153
        %p827 = pneg %p177
        %p828 = pneg %p174
        %p829 = pneg %p198
        %p830 = pneg %p195
        %p831 = pneg %p219
        %p832 = pneg %p216
        %p833 = pneg %p240
        %p834 = pneg %p237
        %p835 = pneg %p261
        %p836 = pneg %p258
        %p837 = pneg %p282
        %p838 = pneg %p279
        %p839 = pneg %p303
        %p840 = pneg %p300
        %p841 = pneg %p324
        %p842 = pneg %p321
        %p843 = pneg %p345
        %p844 = pneg %p342
        %p845 = pneg %p366
        %p846 = pneg %p363
        %p847 = pneg %p387
        %p848 = pneg %p384
        %p849 = pneg %p408
        %p850 = pneg %p405
        %p851 = pneg %p429
        %p852 = pneg %p426
        %p853 = pneg %p450
        %p854 = pneg %p447
        %p855 = pneg %p476
        %p856 = pneg %p473
        %s857 = sand.u32 %s463, 1
        %s858 = scalar_lea.sflag [#allocation4], %s857
        %s859 = sand.u32 %s463, 1
        %s860 = scalar_lea.vmem [#allocation29], %s859
        %v862 = vld [vmem:[#allocation7] sm:$0xff]
        %v863 = vld [vmem:[#allocation7 + $0x8] sm:$0xff]
        %v864 = vld [vmem:[#allocation7 + $0x10] sm:$0xff]
        %v865 = vld [vmem:[#allocation7 + $0x18] sm:$0xff]
        %v866 = vld [vmem:[#allocation7 + $0x20] sm:$0xff]
        %v867 = vld [vmem:[#allocation7 + $0x28] sm:$0xff]
        %v868 = vld [vmem:[#allocation7 + $0x30] sm:$0xff]
        %v869 = vld [vmem:[#allocation7 + $0x38] sm:$0xff]
        %v870 = vld [vmem:[#allocation7 + $0x40] sm:$0xff]
        %v871 = vld [vmem:[#allocation7 + $0x48] sm:$0xff]
        %v872 = vld [vmem:[#allocation7 + $0x50] sm:$0xff]
        %v873 = vld [vmem:[#allocation7 + $0x58] sm:$0xff]
        %v874 = vld [vmem:[#allocation7 + $0x60] sm:$0xff]
        %v875 = vld [vmem:[#allocation7 + $0x68] sm:$0xff]
        %v876 = vld [vmem:[#allocation7 + $0x70] sm:$0xff]
        %v877 = vld [vmem:[#allocation7 + $0x78] sm:$0xff]
        %v878 = vpack.c.bf16 %v863, %v862
        %v879 = vpack.c.bf16 %v865, %v864
        %v880 = vpack.c.bf16 %v867, %v866
        %v881 = vpack.c.bf16 %v869, %v868
        %v882 = vpack.c.bf16 %v871, %v870
        %v883 = vpack.c.bf16 %v873, %v872
        %v884 = vpack.c.bf16 %v875, %v874
        %v885 = vpack.c.bf16 %v877, %v876
        %v886 = vld [vmem:[%s733] sm:$0xff]
        %v887 = vld [vmem:[%s733 + $0x8] sm:$0xff]
        %v888 = vld [vmem:[%s733 + $0x10] sm:$0xff]
        %v889 = vld [vmem:[%s733 + $0x18] sm:$0xff]
        %v890 = vld [vmem:[%s742] sm:$0xff]
        %v891 = vld [vmem:[%s742 + $0x8] sm:$0xff]
        %v892 = vld [vmem:[%s742 + $0x10] sm:$0xff]
        %v893 = vld [vmem:[%s742 + $0x18] sm:$0xff]
        %v894 = vld [vmem:[#allocation8] sm:$0xff]
        %v895 = vld [vmem:[#allocation8 + $0x8] sm:$0xf]
        %v896 = vld [vmem:[#allocation8 + $0xc] sm:$0xff]
        %v897 = vld [vmem:[#allocation8 + $0x14] sm:$0xf]
        %v898 = vld [vmem:[#allocation8 + $0x18] sm:$0xff]
        %v899 = vld [vmem:[#allocation8 + $0x20] sm:$0xf]
        %v900 = vld [vmem:[#allocation8 + $0x24] sm:$0xff]
        %v901 = vld [vmem:[#allocation8 + $0x2c] sm:$0xf]
        %v902 = vld [vmem:[#allocation8 + $0x30] sm:$0xff]
        %v903 = vld [vmem:[#allocation8 + $0x38] sm:$0xf]
        %v904 = vld [vmem:[#allocation8 + $0x3c] sm:$0xff]
        %v905 = vld [vmem:[#allocation8 + $0x44] sm:$0xf]
        %v906 = vld [vmem:[#allocation8 + $0x48] sm:$0xff]
        %v907 = vld [vmem:[#allocation8 + $0x50] sm:$0xf]
        %v908 = vld [vmem:[#allocation8 + $0x54] sm:$0xff]
        %v909 = vld [vmem:[#allocation8 + $0x5c] sm:$0xf]
        %v910 = vld [vmem:[#allocation8 + $0x60] sm:$0xff]
        %v911 = vld [vmem:[#allocation8 + $0x68] sm:$0xf]
        %v912 = vld [vmem:[#allocation8 + $0x6c] sm:$0xff]
        %v913 = vld [vmem:[#allocation8 + $0x74] sm:$0xf]
        %v914 = vld [vmem:[#allocation8 + $0x78] sm:$0xff]
        %v915 = vld [vmem:[#allocation8 + $0x80] sm:$0xf]
        %v916 = vld [vmem:[#allocation8 + $0x84] sm:$0xff]
        %v917 = vld [vmem:[#allocation8 + $0x8c] sm:$0xf]
        %v918 = vld [vmem:[#allocation8 + $0x90] sm:$0xff]
        %v919 = vld [vmem:[#allocation8 + $0x98] sm:$0xf]
        %v920 = vld [vmem:[#allocation8 + $0x9c] sm:$0xff]
        %v921 = vld [vmem:[#allocation8 + $0xa4] sm:$0xf]
        %v922 = vld [vmem:[#allocation8 + $0xa8] sm:$0xff]
        %v923 = vld [vmem:[#allocation8 + $0xb0] sm:$0xf]
        %v924 = vld [vmem:[#allocation8 + $0xb4] sm:$0xff]
        %v925 = vld [vmem:[#allocation8 + $0xbc] sm:$0xf]
        %v926 = vld [vmem:[#allocation10] sm:$0x7]
        %v927 = vld [vmem:[#allocation11] sm:$0xf]
        %v928 = vld [vmem:[#allocation11 + $0x4] sm:$0xf]
        %v929 = vld [vmem:[#allocation11 + $0x8] sm:$0xf]
        %v930 = vld [vmem:[#allocation11 + $0xc] sm:$0xf]
        %v931 = vld [vmem:[#allocation11 + $0x10] sm:$0xf]
        %v932 = vld [vmem:[#allocation11 + $0x14] sm:$0xf]
        %v933 = vld [vmem:[#allocation11 + $0x18] sm:$0xf]
        %v934 = vld [vmem:[#allocation11 + $0x1c] sm:$0xf]
        %v935 = vld [vmem:[#allocation11 + $0x20] sm:$0xf]
        %v936 = vld [vmem:[#allocation11 + $0x24] sm:$0xf]
        %v937 = vld [vmem:[#allocation11 + $0x28] sm:$0xf]
        %v938 = vld [vmem:[#allocation11 + $0x2c] sm:$0xf]
        %v939 = vld [vmem:[#allocation11 + $0x30] sm:$0xf]
        %v940 = vld [vmem:[#allocation11 + $0x34] sm:$0xf]
        %v941 = vld [vmem:[#allocation11 + $0x38] sm:$0xf]
        %v942 = vld [vmem:[#allocation11 + $0x3c] sm:$0xf]
        %v943 = vld [vmem:[#allocation13] sm:$0x1]
        %v944 = vpack.c.bf16 %v887, %v886
        %v945 = vpack.c.bf16 %v889, %v888
        %v947 = vlaneseq
        %v948 = vshrl.u32 %v947, 7
        %v949 = vsub.s32 0, %v948
        %v950 = vrot.slane %v926, %v949
        %v951 = vlaneseq
        %v952 = vshrl.u32 %v951, 7
        %v953 = vsub.s32 1, %v952
        %v954 = vrot.slane %v926, %v953
        %v955 = vlaneseq
        %v956 = vshrl.u32 %v955, 7
        %v957 = vsub.s32 2, %v956
        %v958 = vrot.slane %v926, %v957
        %v994 = vunpack.c.l.b16 %v894
        %v995 = vunpack.c.h.b16 %v894
        %v996 = vunpack.c.l.b16 %v895
        %v997 = vunpack.c.l.b16 %v896
        %v998 = vunpack.c.h.b16 %v896
        %v999 = vunpack.c.l.b16 %v897
        %v1000 = vunpack.c.l.b16 %v898
        %v1001 = vunpack.c.h.b16 %v898
        %v1002 = vunpack.c.l.b16 %v899
        %v1003 = vunpack.c.l.b16 %v900
        %v1004 = vunpack.c.h.b16 %v900
        %v1005 = vunpack.c.l.b16 %v901
        %v1006 = vunpack.c.l.b16 %v902
        %v1007 = vunpack.c.h.b16 %v902
        %v1008 = vunpack.c.l.b16 %v903
        %v1009 = vunpack.c.l.b16 %v904
        %v1010 = vunpack.c.h.b16 %v904
        %v1011 = vunpack.c.l.b16 %v905
        %v1012 = vunpack.c.l.b16 %v906
        %v1013 = vunpack.c.h.b16 %v906
        %v1014 = vunpack.c.l.b16 %v907
        %v1015 = vunpack.c.l.b16 %v908
        %v1016 = vunpack.c.h.b16 %v908
        %v1017 = vunpack.c.l.b16 %v909
        %v1018 = vunpack.c.l.b16 %v910
        %v1019 = vunpack.c.h.b16 %v910
        %v1020 = vunpack.c.l.b16 %v911
        %v1021 = vunpack.c.l.b16 %v912
        %v1022 = vunpack.c.h.b16 %v912
        %v1023 = vunpack.c.l.b16 %v913
        %v1024 = vunpack.c.l.b16 %v914
        %v1025 = vunpack.c.h.b16 %v914
        %v1026 = vunpack.c.l.b16 %v915
        %v1027 = vunpack.c.l.b16 %v916
        %v1028 = vunpack.c.h.b16 %v916
        %v1029 = vunpack.c.l.b16 %v917
        %v1030 = vunpack.c.l.b16 %v918
        %v1031 = vunpack.c.h.b16 %v918
        %v1032 = vunpack.c.l.b16 %v919
        %v1033 = vunpack.c.l.b16 %v920
        %v1034 = vunpack.c.h.b16 %v920
        %v1035 = vunpack.c.l.b16 %v921
        %v1036 = vunpack.c.l.b16 %v922
        %v1037 = vunpack.c.h.b16 %v922
        %v1038 = vunpack.c.l.b16 %v923
        %v1039 = vunpack.c.l.b16 %v924
        %v1040 = vunpack.c.h.b16 %v924
        %v1041 = vunpack.c.l.b16 %v925
        %v1042 = vpack.c.b16 %v997, %v994
        %v1043 = vpack.c.b16 %v998, %v995
        %v1044 = vpack.c.b16 %v999, %v996
        %v1045 = vpack.c.b16 %v1003, %v1000
        %v1046 = vpack.c.b16 %v1004, %v1001
        %v1047 = vpack.c.b16 %v1005, %v1002
        %v1048 = vpack.c.b16 %v1009, %v1006
        %v1049 = vpack.c.b16 %v1010, %v1007
        %v1050 = vpack.c.b16 %v1011, %v1008
        %v1051 = vpack.c.b16 %v1015, %v1012
        %v1052 = vpack.c.b16 %v1016, %v1013
        %v1053 = vpack.c.b16 %v1017, %v1014
        %v1054 = vpack.c.b16 %v1021, %v1018
        %v1055 = vpack.c.b16 %v1022, %v1019
        %v1056 = vpack.c.b16 %v1023, %v1020
        %v1057 = vpack.c.b16 %v1027, %v1024
        %v1058 = vpack.c.b16 %v1028, %v1025
        %v1059 = vpack.c.b16 %v1029, %v1026
        %v1060 = vpack.c.b16 %v1033, %v1030
        %v1061 = vpack.c.b16 %v1034, %v1031
        %v1062 = vpack.c.b16 %v1035, %v1032
        %v1063 = vpack.c.b16 %v1039, %v1036
        %v1064 = vpack.c.b16 %v1040, %v1037
        %v1065 = vpack.c.b16 %v1041, %v1038
        %1090 = vmatprep.subr.bf16.mxu0 %v1043
        %1091 = vmatpush1.bf16.msra.mxu0 %v1042
        %1092 = vmatprep.subr.bf16.mxu0 %v1046
        %1093 = vmatpush1.bf16.msra.mxu0 %v1045
        %1094 = vmatprep.subr.bf16.mxu0 %v1049
        %1095 = vmatpush1.bf16.msra.mxu0 %v1048
        %1096 = vmatprep.subr.bf16.mxu0 %v1052
        %1097 = vmatpush1.bf16.msra.mxu0 %v1051
        %1098 = vmatprep.subr.bf16.mxu0 %v1055
        %1099 = vmatpush1.bf16.msra.mxu0 %v1054
        %1100 = vmatprep.subr.bf16.mxu0 %v1058
        %1101 = vmatpush1.bf16.msra.mxu0 %v1057
        %1102 = vmatprep.subr.bf16.mxu0 %v1061
        %1103 = vmatpush1.bf16.msra.mxu0 %v1060
        %1104 = vmatprep.subr.bf16.mxu0 %v1064
        %1105 = vmatpush1.bf16.msra.mxu0 %v1063
        %1106 = vmatprep.subr.bf16.mxu0 0
        %1107 = vmatpush1.bf16.msra.mxu0 0
        %1108 = vmatprep.subr.bf16.mxu0 0
        %1109 = vmatpush1.bf16.msra.mxu0 0
        %1110 = vmatprep.subr.bf16.mxu0 0
        %1111 = vmatpush1.bf16.msra.mxu0 0
        %1112 = vmatprep.subr.bf16.mxu0 0
        %1113 = vmatpush1.bf16.msra.mxu0 0
        %1114 = vmatprep.subr.bf16.mxu0 0
        %1115 = vmatpush1.bf16.msra.mxu0 0
        %1116 = vmatprep.subr.bf16.mxu0 0
        %1117 = vmatpush1.bf16.msra.mxu0 0
        %1118 = vmatprep.subr.bf16.mxu0 0
        %1119 = vmatpush1.bf16.msra.mxu0 0
        %1120 = vmatprep.subr.bf16.mxu0 0
        %1121 = vmatpush1.bf16.msra.mxu0 0
        %1122 = vmatprep.mubr.bf16.mxu0 0
        %1123 = vmatmul.mubr.bf16.gmra.mrb[0].mxu0 %v944
        %v1124 = vpop.f32.mrb[0].mxu0
        %v1125 = vadd.f32 %v950, %v1124
        %v1126 = vpop.f32.mrb[0].mxu0
        %v1127 = vadd.f32 %v954, %v1126
        %v1128 = vpop.f32.mrb[0].mxu0
        %v1129 = vadd.f32 %v950, %v1128
        %v1130 = vpop.f32.mrb[0].mxu0
        %v1131 = vadd.f32 %v954, %v1130
        %1132 = vmatprep.mubr.bf16.mxu0 0
        %1133 = vmatmul.mubr.bf16.gmra.mrb[0].mxu0 %v945
        %v1134 = vpop.f32.mrb[0].mxu0
        %v1135 = vadd.f32 %v950, %v1134
        %v1136 = vpop.f32.mrb[0].mxu0
        %v1137 = vadd.f32 %v954, %v1136
        %v1138 = vpop.f32.mrb[0].mxu0
        %v1139 = vadd.f32 %v950, %v1138
        %v1140 = vpop.f32.mrb[0].mxu0
        %v1141 = vadd.f32 %v954, %v1140
        %1142 = vdwg.mxu0
        %1143 = vmatprep.subr.bf16.mxu0 0
        %1144 = vmatpush1.bf16.msra.mxu0 %v1044
        %1145 = vmatprep.subr.bf16.mxu0 0
        %1146 = vmatpush1.bf16.msra.mxu0 %v1047
        %1147 = vmatprep.subr.bf16.mxu0 0
        %1148 = vmatpush1.bf16.msra.mxu0 %v1050
        %1149 = vmatprep.subr.bf16.mxu0 0
        %1150 = vmatpush1.bf16.msra.mxu0 %v1053
        %1151 = vmatprep.subr.bf16.mxu0 0
        %1152 = vmatpush1.bf16.msra.mxu0 %v1056
        %1153 = vmatprep.subr.bf16.mxu0 0
        %1154 = vmatpush1.bf16.msra.mxu0 %v1059
        %1155 = vmatprep.subr.bf16.mxu0 0
        %1156 = vmatpush1.bf16.msra.mxu0 %v1062
        %1157 = vmatprep.subr.bf16.mxu0 0
        %1158 = vmatpush1.bf16.msra.mxu0 %v1065
        %1159 = vmatprep.subr.bf16.mxu0 0
        %1160 = vmatpush1.bf16.msra.mxu0 0
        %1161 = vmatprep.subr.bf16.mxu0 0
        %1162 = vmatpush1.bf16.msra.mxu0 0
        %1163 = vmatprep.subr.bf16.mxu0 0
        %1164 = vmatpush1.bf16.msra.mxu0 0
        %1165 = vmatprep.subr.bf16.mxu0 0
        %1166 = vmatpush1.bf16.msra.mxu0 0
        %1167 = vmatprep.subr.bf16.mxu0 0
        %1168 = vmatpush1.bf16.msra.mxu0 0
        %1169 = vmatprep.subr.bf16.mxu0 0
        %1170 = vmatpush1.bf16.msra.mxu0 0
        %1171 = vmatprep.subr.bf16.mxu0 0
        %1172 = vmatpush1.bf16.msra.mxu0 0
        %1173 = vmatprep.subr.bf16.mxu0 0
        %1174 = vmatpush1.bf16.msra.mxu0 0
        %1175 = vmatprep.mubr.bf16.mxu0 0
        %1176 = vmatmul.mubr.bf16.gmra.mrb[0].mxu0 %v944
        %v1177 = vpop.f32.mrb[0].mxu0
        %v1178 = vadd.f32 %v958, %v1177
        %v1179 = vpop.f32.mrb[0].mxu0
        %v1180 = vpop.f32.mrb[0].mxu0
        %v1181 = vadd.f32 %v958, %v1180
        %v1182 = vpop.f32.mrb[0].mxu0
        %1183 = vmatprep.mubr.bf16.mxu0 0
        %1184 = vmatmul.mubr.bf16.gmra.mrb[0].mxu0 %v945
        %v1185 = vpop.f32.mrb[0].mxu0
        %v1186 = vadd.f32 %v958, %v1185
        %v1187 = vpop.f32.mrb[0].mxu0
        %v1188 = vpop.f32.mrb[0].mxu0
        %v1189 = vadd.f32 %v958, %v1188
        %v1190 = vpop.f32.mrb[0].mxu0
        %1191 = vdwg.mxu0
        %v1192 = vmax.f32 %v1127, %v1131
        %v1193 = vmax.f32 %v1137, %v1141
        %v1194 = vmax.f32 %v1192, %v1193
        %v1195 = vrot.slane %v1194, 4
        %v1196 = vmax.f32 %v1194, %v1195
        %v1197 = vrot.slane %v1196, 2
        %v1198 = vmax.f32 %v1196, %v1197
        %v1199 = vrot.slane %v1198, 1
        %v1200 = vmax.f32 %v1198, %v1199
        %v1201 = vsub.f32 %v1127, %v1200
        %v1202 = vsub.f32 %v1131, %v1200
        %v1203 = vsub.f32 %v1137, %v1200
        %v1204 = vsub.f32 %v1141, %v1200
        %v1205 = vmul.f32 %v1201, 1.442695
        %v1206 = vpow.pop %v1205
        %v1207 = vmul.f32 %v1202, 1.442695
        %v1208 = vpow.pop %v1207
        %v1209 = vmul.f32 %v1203, 1.442695
        %v1210 = vpow.pop %v1209
        %v1211 = vmul.f32 %v1204, 1.442695
        %v1212 = vpow.pop %v1211
        %v1213 = vadd.f32 %v1206, %v1208
        %v1214 = vadd.f32 %v1213, %v1210
        %v1215 = vadd.f32 %v1214, %v1212
        %v1216 = vrot.slane %v1215, 4
        %v1217 = vadd.f32 %v1215, %v1216
        %v1218 = vrot.slane %v1217, 2
        %v1219 = vadd.f32 %v1217, %v1218
        %v1220 = vrot.slane %v1219, 1
        %v1221 = vadd.f32 %v1219, %v1220
        %v1222 = vrcp.pop %v1221
        %v1223 = vmul.f32 %v1206, %v1222
        %v1224 = vmul.f32 %v1208, %v1222
        %v1225 = vmul.f32 %v1210, %v1222
        %v1226 = vmul.f32 %v1212, %v1222
        %1227 = vmax.xlane.f32.xlu0 %v1125
        %v1228 = vpop.xlane.xlu0 %1227
        %1229 = vmax.xlane.f32.xlu0 %v1129
        %v1230 = vpop.xlane.xlu0 %1229
        %1231 = vmax.xlane.f32.xlu0 %v1135
        %v1232 = vpop.xlane.xlu0 %1231
        %1233 = vmax.xlane.f32.xlu0 %v1139
        %v1234 = vpop.xlane.xlu0 %1233
        %v1235 = vsub.f32 %v1125, %v1228
        %v1236 = vsub.f32 %v1129, %v1230
        %v1237 = vsub.f32 %v1135, %v1232
        %v1238 = vsub.f32 %v1139, %v1234
        %v1239 = vmul.f32 %v1235, 1.442695
        %v1240 = vpow.pop %v1239
        %v1241 = vmul.f32 %v1236, 1.442695
        %v1242 = vpow.pop %v1241
        %v1243 = vmul.f32 %v1237, 1.442695
        %v1244 = vpow.pop %v1243
        %v1245 = vmul.f32 %v1238, 1.442695
        %v1246 = vpow.pop %v1245
        %v1247 = vpack.c.bf16 %v1242, %v1240
        %v1248 = vpack.c.bf16 %v1246, %v1244
        %1249 = vmatprep.subr.bf16.mxu0 0
        %1250 = vmatpush1.bf16.msra.mxu0 %v878
        %1251 = vmatprep.subr.bf16.mxu0 0
        %1252 = vmatpush1.bf16.msra.mxu0 %v879
        %1253 = vmatprep.subr.bf16.mxu0 0
        %1254 = vmatpush1.bf16.msra.mxu0 %v880
        %1255 = vmatprep.subr.bf16.mxu0 0
        %1256 = vmatpush1.bf16.msra.mxu0 %v881
        %1257 = vmatprep.subr.bf16.mxu0 0
        %1258 = vmatpush1.bf16.msra.mxu0 %v882
        %1259 = vmatprep.subr.bf16.mxu0 0
        %1260 = vmatpush1.bf16.msra.mxu0 %v883
        %1261 = vmatprep.subr.bf16.mxu0 0
        %1262 = vmatpush1.bf16.msra.mxu0 %v884
        %1263 = vmatprep.subr.bf16.mxu0 0
        %1264 = vmatpush1.bf16.msra.mxu0 %v885
        %1265 = vmatprep.subr.bf16.mxu0 0
        %1266 = vmatpush1.bf16.msra.mxu0 0
        %1267 = vmatprep.subr.bf16.mxu0 0
        %1268 = vmatpush1.bf16.msra.mxu0 0
        %1269 = vmatprep.subr.bf16.mxu0 0
        %1270 = vmatpush1.bf16.msra.mxu0 0
        %1271 = vmatprep.subr.bf16.mxu0 0
        %1272 = vmatpush1.bf16.msra.mxu0 0
        %1273 = vmatprep.subr.bf16.mxu0 0
        %1274 = vmatpush1.bf16.msra.mxu0 0
        %1275 = vmatprep.subr.bf16.mxu0 0
        %1276 = vmatpush1.bf16.msra.mxu0 0
        %1277 = vmatprep.subr.bf16.mxu0 0
        %1278 = vmatpush1.bf16.msra.mxu0 0
        %1279 = vmatprep.subr.bf16.mxu0 0
        %1280 = vmatpush1.bf16.msra.mxu0 0
        %1281 = vmatprep.mubr.bf16.mxu0 0
        %1282 = vmatmul.mubr.bf16.gmra.mrb[0].mxu0 %v1247
        %v1283 = vpop.f32.mrb[0].mxu0
        %v1284 = vadd.f32 0.0, %v1283
        %v1285 = vpop.f32.mrb[0].mxu0
        %v1286 = vpop.f32.mrb[0].mxu0
        %v1287 = vadd.f32 0.0, %v1286
        %v1288 = vpop.f32.mrb[0].mxu0
        %1289 = vmatprep.mubr.bf16.mxu0 0
        %1290 = vmatmul.mubr.bf16.gmra.mrb[0].mxu0 %v1248
        %v1291 = vpop.f32.mrb[0].mxu0
        %v1292 = vadd.f32 0.0, %v1291
        %v1293 = vpop.f32.mrb[0].mxu0
        %v1294 = vpop.f32.mrb[0].mxu0
        %v1295 = vadd.f32 0.0, %v1294
        %v1296 = vpop.f32.mrb[0].mxu0
        %1297 = vdwg.mxu0
        %v1298 = vrcp.pop %v1284
        %v1299 = vrcp.pop %v1287
        %v1300 = vrcp.pop %v1292
        %v1301 = vrcp.pop %v1295
        %v1302 = vmul.f32 %v1240, %v1298
        %v1303 = vmul.f32 %v1242, %v1299
        %v1304 = vmul.f32 %v1244, %v1300
        %v1305 = vmul.f32 %v1246, %v1301
        %v1306 = vpack.c.bf16 %v1224, %v1223
        %v1307 = vpack.c.bf16 %v1226, %v1225
        %v1308 = vpack.c.bf16 %v1181, %v1178
        %v1309 = vpack.c.bf16 %v1189, %v1186
        %1310 = vxpose.xlu0.c.b16.start [1/8] %v1306, 128
        %1311 = vxpose.xlu0.c.b16.cont [2/8] %v1307, 128
        %1312 = vxpose.xlu0.c.b16.cont [3/8] 0, 128
        %1313 = vxpose.xlu0.c.b16.cont [4/8] 0, 128
        %1314 = vxpose.xlu0.c.b16.cont [5/8] 0, 128
        %1315 = vxpose.xlu0.c.b16.cont [6/8] 0, 128
        %1316 = vxpose.xlu0.c.b16.cont [7/8] 0, 128
        %1317 = vxpose.xlu0.c.b16.end [8/8] 0, 128
        %v1318 = vpop.trf.xlu0
        %v1319 = vpop.trf.xlu0
        %v1320 = vpop.trf.xlu0
        %v1321 = vpop.trf.xlu0
        %v1322 = vpop.trf.xlu0
        %v1323 = vpop.trf.xlu0
        %v1324 = vpop.trf.xlu0
        %v1325 = vpop.trf.xlu0
        %vm1326 = vcmask 261120
        %v1328 = vsel %vm1326, %v1318, 0
        %v1331 = vsel %vm1326, %v1319, 0
        %v1334 = vsel %vm1326, %v1320, 0
        %v1337 = vsel %vm1326, %v1321, 0
        %v1340 = vsel %vm1326, %v1322, 0
        %v1343 = vsel %vm1326, %v1323, 0
        %v1346 = vsel %vm1326, %v1324, 0
        %v1349 = vsel %vm1326, %v1325, 0
        %1351 = vmatprep.subr.bf16.mxu0 0
        %1352 = vmatpush1.bf16.msra.mxu0 %v1308
        %1353 = vmatprep.subr.bf16.mxu0 0
        %1354 = vmatpush1.bf16.msra.mxu0 %v1309
        %1355 = vmatprep.subr.bf16.mxu0 0
        %1356 = vmatpush1.bf16.msra.mxu0 0
        %1357 = vmatprep.subr.bf16.mxu0 0
        %1358 = vmatpush1.bf16.msra.mxu0 0
        %1359 = vmatprep.subr.bf16.mxu0 0
        %1360 = vmatpush1.bf16.msra.mxu0 0
        %1361 = vmatprep.subr.bf16.mxu0 0
        %1362 = vmatpush1.bf16.msra.mxu0 0
        %1363 = vmatprep.subr.bf16.mxu0 0
        %1364 = vmatpush1.bf16.msra.mxu0 0
        %1365 = vmatprep.subr.bf16.mxu0 0
        %1366 = vmatpush1.bf16.msra.mxu0 0
        %1367 = vmatprep.subr.bf16.mxu0 0
        %1368 = vmatpush1.bf16.msra.mxu0 0
        %1369 = vmatprep.subr.bf16.mxu0 0
        %1370 = vmatpush1.bf16.msra.mxu0 0
        %1371 = vmatprep.subr.bf16.mxu0 0
        %1372 = vmatpush1.bf16.msra.mxu0 0
        %1373 = vmatprep.subr.bf16.mxu0 0
        %1374 = vmatpush1.bf16.msra.mxu0 0
        %1375 = vmatprep.subr.bf16.mxu0 0
        %1376 = vmatpush1.bf16.msra.mxu0 0
        %1377 = vmatprep.subr.bf16.mxu0 0
        %1378 = vmatpush1.bf16.msra.mxu0 0
        %1379 = vmatprep.subr.bf16.mxu0 0
        %1380 = vmatpush1.bf16.msra.mxu0 0
        %1381 = vmatprep.subr.bf16.mxu0 0
        %1382 = vmatpush1.bf16.msra.mxu0 0
        %1383 = vmatprep.mubr.bf16.mxu0 0
        %1384 = vmatmul.mubr.bf16.gmra.mrb[0].mxu0 %v1328
        %v1385 = vpop.f32.mrb[0].mxu0
        %v1386 = vadd.f32 0.0, %v1385
        %v1387 = vpop.f32.mrb[0].mxu0
        %v1388 = vpop.f32.mrb[0].mxu0
        %v1389 = vadd.f32 0.0, %v1388
        %v1390 = vpop.f32.mrb[0].mxu0
        %1391 = vmatprep.mubr.bf16.mxu0 0
        %1392 = vmatmul.mubr.bf16.gmra.mrb[0].mxu0 %v1331
        %v1393 = vpop.f32.mrb[0].mxu0
        %v1394 = vadd.f32 0.0, %v1393
        %v1395 = vpop.f32.mrb[0].mxu0
        %v1396 = vpop.f32.mrb[0].mxu0
        %v1397 = vadd.f32 0.0, %v1396
        %v1398 = vpop.f32.mrb[0].mxu0
        %1399 = vmatprep.mubr.bf16.mxu0 0
        %1400 = vmatmul.mubr.bf16.gmra.mrb[0].mxu0 %v1334
        %v1401 = vpop.f32.mrb[0].mxu0
        %v1402 = vadd.f32 0.0, %v1401
        %v1403 = vpop.f32.mrb[0].mxu0
        %v1404 = vpop.f32.mrb[0].mxu0
        %v1405 = vadd.f32 0.0, %v1404
        %v1406 = vpop.f32.mrb[0].mxu0
        %1407 = vmatprep.mubr.bf16.mxu0 0
        %1408 = vmatmul.mubr.bf16.gmra.mrb[0].mxu0 %v1337
        %v1409 = vpop.f32.mrb[0].mxu0
        %v1410 = vadd.f32 0.0, %v1409
        %v1411 = vpop.f32.mrb[0].mxu0
        %v1412 = vpop.f32.mrb[0].mxu0
        %v1413 = vadd.f32 0.0, %v1412
        %v1414 = vpop.f32.mrb[0].mxu0
        %1415 = vmatprep.mubr.bf16.mxu0 0
        %1416 = vmatmul.mubr.bf16.gmra.mrb[0].mxu0 %v1340
        %v1417 = vpop.f32.mrb[0].mxu0
        %v1418 = vadd.f32 0.0, %v1417
        %v1419 = vpop.f32.mrb[0].mxu0
        %v1420 = vpop.f32.mrb[0].mxu0
        %v1421 = vadd.f32 0.0, %v1420
        %v1422 = vpop.f32.mrb[0].mxu0
        %1423 = vmatprep.mubr.bf16.mxu0 0
        %1424 = vmatmul.mubr.bf16.gmra.mrb[0].mxu0 %v1343
        %v1425 = vpop.f32.mrb[0].mxu0
        %v1426 = vadd.f32 0.0, %v1425
        %v1427 = vpop.f32.mrb[0].mxu0
        %v1428 = vpop.f32.mrb[0].mxu0
        %v1429 = vadd.f32 0.0, %v1428
        %v1430 = vpop.f32.mrb[0].mxu0
        %1431 = vmatprep.mubr.bf16.mxu0 0
        %1432 = vmatmul.mubr.bf16.gmra.mrb[0].mxu0 %v1346
        %v1433 = vpop.f32.mrb[0].mxu0
        %v1434 = vadd.f32 0.0, %v1433
        %v1435 = vpop.f32.mrb[0].mxu0
        %v1436 = vpop.f32.mrb[0].mxu0
        %v1437 = vadd.f32 0.0, %v1436
        %v1438 = vpop.f32.mrb[0].mxu0
        %1439 = vmatprep.mubr.bf16.mxu0 0
        %1440 = vmatmul.mubr.bf16.gmra.mrb[0].mxu0 %v1349
        %v1441 = vpop.f32.mrb[0].mxu0
        %v1442 = vadd.f32 0.0, %v1441
        %v1443 = vpop.f32.mrb[0].mxu0
        %v1444 = vpop.f32.mrb[0].mxu0
        %v1445 = vadd.f32 0.0, %v1444
        %v1446 = vpop.f32.mrb[0].mxu0
        %1447 = vdwg.mxu0
        %v1448 = vmul.f32 %v1386, %v862
        %v1449 = vmul.f32 %v1389, %v863
        %v1450 = vmul.f32 %v1394, %v864
        %v1451 = vmul.f32 %v1397, %v865
        %v1452 = vmul.f32 %v1402, %v866
        %v1453 = vmul.f32 %v1405, %v867
        %v1454 = vmul.f32 %v1410, %v868
        %v1455 = vmul.f32 %v1413, %v869
        %v1456 = vmul.f32 %v1418, %v870
        %v1457 = vmul.f32 %v1421, %v871
        %v1458 = vmul.f32 %v1426, %v872
        %v1459 = vmul.f32 %v1429, %v873
        %v1460 = vmul.f32 %v1434, %v874
        %v1461 = vmul.f32 %v1437, %v875
        %v1462 = vmul.f32 %v1442, %v876
        %v1463 = vmul.f32 %v1445, %v877
        %v1464 = vpack.c.bf16 %v1303, %v1302
        %v1465 = vpack.c.bf16 %v1305, %v1304
        %v1466 = vpack.c.bf16 %v1449, %v1448
        %v1467 = vpack.c.bf16 %v1451, %v1450
        %v1468 = vpack.c.bf16 %v1453, %v1452
        %v1469 = vpack.c.bf16 %v1455, %v1454
        %v1470 = vpack.c.bf16 %v1457, %v1456
        %v1471 = vpack.c.bf16 %v1459, %v1458
        %v1472 = vpack.c.bf16 %v1461, %v1460
        %v1473 = vpack.c.bf16 %v1463, %v1462
        %1474 = vmatprep.subr.bf16.mxu0 0
        %1475 = vmatpush1.bf16.msra.mxu0 %v1466
        %1476 = vmatprep.subr.bf16.mxu0 0
        %1477 = vmatpush1.bf16.msra.mxu0 %v1467
        %1478 = vmatprep.subr.bf16.mxu0 0
        %1479 = vmatpush1.bf16.msra.mxu0 %v1468
        %1480 = vmatprep.subr.bf16.mxu0 0
        %1481 = vmatpush1.bf16.msra.mxu0 %v1469
        %1482 = vmatprep.subr.bf16.mxu0 0
        %1483 = vmatpush1.bf16.msra.mxu0 %v1470
        %1484 = vmatprep.subr.bf16.mxu0 0
        %1485 = vmatpush1.bf16.msra.mxu0 %v1471
        %1486 = vmatprep.subr.bf16.mxu0 0
        %1487 = vmatpush1.bf16.msra.mxu0 %v1472
        %1488 = vmatprep.subr.bf16.mxu0 0
        %1489 = vmatpush1.bf16.msra.mxu0 %v1473
        %1490 = vmatprep.subr.bf16.mxu0 0
        %1491 = vmatpush1.bf16.msra.mxu0 0
        %1492 = vmatprep.subr.bf16.mxu0 0
        %1493 = vmatpush1.bf16.msra.mxu0 0
        %1494 = vmatprep.subr.bf16.mxu0 0
        %1495 = vmatpush1.bf16.msra.mxu0 0
        %1496 = vmatprep.subr.bf16.mxu0 0
        %1497 = vmatpush1.bf16.msra.mxu0 0
        %1498 = vmatprep.subr.bf16.mxu0 0
        %1499 = vmatpush1.bf16.msra.mxu0 0
        %1500 = vmatprep.subr.bf16.mxu0 0
        %1501 = vmatpush1.bf16.msra.mxu0 0
        %1502 = vmatprep.subr.bf16.mxu0 0
        %1503 = vmatpush1.bf16.msra.mxu0 0
        %1504 = vmatprep.subr.bf16.mxu0 0
        %1505 = vmatpush1.bf16.msra.mxu0 0
        %1506 = vmatprep.mubr.bf16.mxu0 0
        %1507 = vmatmul.mubr.bf16.gmra.mrb[0].mxu0 %v1464
        %v1508 = vpop.f32.mrb[0].mxu0
        %v1509 = vadd.f32 0.0, %v1508
        %v1510 = vpop.f32.mrb[0].mxu0
        %v1511 = vpop.f32.mrb[0].mxu0
        %v1512 = vadd.f32 0.0, %v1511
        %v1513 = vpop.f32.mrb[0].mxu0
        %1514 = vmatprep.mubr.bf16.mxu0 0
        %1515 = vmatmul.mubr.bf16.gmra.mrb[0].mxu0 %v1465
        %v1516 = vpop.f32.mrb[0].mxu0
        %v1517 = vadd.f32 0.0, %v1516
        %v1518 = vpop.f32.mrb[0].mxu0
        %v1519 = vpop.f32.mrb[0].mxu0
        %v1520 = vadd.f32 0.0, %v1519
        %v1521 = vpop.f32.mrb[0].mxu0
        %1522 = vdwg.mxu0
        %v1523 = vpack.c.bf16 %v1512, %v1509
        %v1524 = vpack.c.bf16 %v1520, %v1517
        %v1526 = vlaneseq
        %v1527 = vshrl.u32 %v1526, 7
        %v1528 = vsub.s32 0, %v1527
        %v1529 = vrot.slane %v943, %v1528
        %v1547 = vunpack.c.l.b16 %v927
        %v1548 = vunpack.c.l.b16 %v928
        %v1549 = vunpack.c.l.b16 %v929
        %v1550 = vunpack.c.l.b16 %v930
        %v1551 = vunpack.c.l.b16 %v931
        %v1552 = vunpack.c.l.b16 %v932
        %v1553 = vunpack.c.l.b16 %v933
        %v1554 = vunpack.c.l.b16 %v934
        %v1555 = vunpack.c.l.b16 %v935
        %v1556 = vunpack.c.l.b16 %v936
        %v1557 = vunpack.c.l.b16 %v937
        %v1558 = vunpack.c.l.b16 %v938
        %v1559 = vunpack.c.l.b16 %v939
        %v1560 = vunpack.c.l.b16 %v940
        %v1561 = vunpack.c.l.b16 %v941
        %v1562 = vunpack.c.l.b16 %v942
        %v1563 = vpack.c.b16 %v1548, %v1547
        %v1564 = vpack.c.b16 %v1550, %v1549
        %v1565 = vpack.c.b16 %v1552, %v1551
        %v1566 = vpack.c.b16 %v1554, %v1553
        %v1567 = vpack.c.b16 %v1556, %v1555
        %v1568 = vpack.c.b16 %v1558, %v1557
        %v1569 = vpack.c.b16 %v1560, %v1559
        %v1570 = vpack.c.b16 %v1562, %v1561
        %1579 = vmatprep.subr.bf16.mxu0 0
        %1580 = vmatpush1.bf16.msra.mxu0 %v1563
        %1581 = vmatprep.subr.bf16.mxu0 0
        %1582 = vmatpush1.bf16.msra.mxu0 %v1564
        %1583 = vmatprep.subr.bf16.mxu0 0
        %1584 = vmatpush1.bf16.msra.mxu0 %v1565
        %1585 = vmatprep.subr.bf16.mxu0 0
        %1586 = vmatpush1.bf16.msra.mxu0 %v1566
        %1587 = vmatprep.subr.bf16.mxu0 0
        %1588 = vmatpush1.bf16.msra.mxu0 %v1567
        %1589 = vmatprep.subr.bf16.mxu0 0
        %1590 = vmatpush1.bf16.msra.mxu0 %v1568
        %1591 = vmatprep.subr.bf16.mxu0 0
        %1592 = vmatpush1.bf16.msra.mxu0 %v1569
        %1593 = vmatprep.subr.bf16.mxu0 0
        %1594 = vmatpush1.bf16.msra.mxu0 %v1570
        %1595 = vmatprep.subr.bf16.mxu0 0
        %1596 = vmatpush1.bf16.msra.mxu0 0
        %1597 = vmatprep.subr.bf16.mxu0 0
        %1598 = vmatpush1.bf16.msra.mxu0 0
        %1599 = vmatprep.subr.bf16.mxu0 0
        %1600 = vmatpush1.bf16.msra.mxu0 0
        %1601 = vmatprep.subr.bf16.mxu0 0
        %1602 = vmatpush1.bf16.msra.mxu0 0
        %1603 = vmatprep.subr.bf16.mxu0 0
        %1604 = vmatpush1.bf16.msra.mxu0 0
        %1605 = vmatprep.subr.bf16.mxu0 0
        %1606 = vmatpush1.bf16.msra.mxu0 0
        %1607 = vmatprep.subr.bf16.mxu0 0
        %1608 = vmatpush1.bf16.msra.mxu0 0
        %1609 = vmatprep.subr.bf16.mxu0 0
        %1610 = vmatpush1.bf16.msra.mxu0 0
        %1611 = vmatprep.mubr.bf16.mxu0 0
        %1612 = vmatmul.mubr.bf16.gmra.mrb[0].mxu0 %v1523
        %v1613 = vpop.f32.mrb[0].mxu0
        %v1614 = vadd.f32 %v1529, %v1613
        %v1615 = vpop.f32.mrb[0].mxu0
        %v1616 = vpop.f32.mrb[0].mxu0
        %v1617 = vadd.f32 %v1529, %v1616
        %v1618 = vpop.f32.mrb[0].mxu0
        %1619 = vmatprep.mubr.bf16.mxu0 0
        %1620 = vmatmul.mubr.bf16.gmra.mrb[0].mxu0 %v1524
        %v1621 = vpop.f32.mrb[0].mxu0
        %v1622 = vadd.f32 %v1529, %v1621
        %v1623 = vpop.f32.mrb[0].mxu0
        %v1624 = vpop.f32.mrb[0].mxu0
        %v1625 = vadd.f32 %v1529, %v1624
        %v1626 = vpop.f32.mrb[0].mxu0
        %1627 = vdwg.mxu0
        %v1628 = vadd.f32 %v1614, %v886
        %v1629 = vadd.f32 %v1617, %v887
        %v1630 = vadd.f32 %v1622, %v888
        %v1631 = vadd.f32 %v1625, %v889
        %v1632 = vld [vmem:[#allocation14] sm:$0xff]
        %v1633 = vld [vmem:[#allocation14 + $0x8] sm:$0xf]
        %v1634 = vld [vmem:[#allocation14 + $0xc] sm:$0xff]
        %v1635 = vld [vmem:[#allocation14 + $0x14] sm:$0xf]
        %v1636 = vld [vmem:[#allocation14 + $0x18] sm:$0xff]
        %v1637 = vld [vmem:[#allocation14 + $0x20] sm:$0xf]
        %v1638 = vld [vmem:[#allocation14 + $0x24] sm:$0xff]
        %v1639 = vld [vmem:[#allocation14 + $0x2c] sm:$0xf]
        %v1640 = vld [vmem:[#allocation14 + $0x30] sm:$0xff]
        %v1641 = vld [vmem:[#allocation14 + $0x38] sm:$0xf]
        %v1642 = vld [vmem:[#allocation14 + $0x3c] sm:$0xff]
        %v1643 = vld [vmem:[#allocation14 + $0x44] sm:$0xf]
        %v1644 = vld [vmem:[#allocation14 + $0x48] sm:$0xff]
        %v1645 = vld [vmem:[#allocation14 + $0x50] sm:$0xf]
        %v1646 = vld [vmem:[#allocation14 + $0x54] sm:$0xff]
        %v1647 = vld [vmem:[#allocation14 + $0x5c] sm:$0xf]
        %v1648 = vld [vmem:[#allocation14 + $0x60] sm:$0xff]
        %v1649 = vld [vmem:[#allocation14 + $0x68] sm:$0xf]
        %v1650 = vld [vmem:[#allocation14 + $0x6c] sm:$0xff]
        %v1651 = vld [vmem:[#allocation14 + $0x74] sm:$0xf]
        %v1652 = vld [vmem:[#allocation14 + $0x78] sm:$0xff]
        %v1653 = vld [vmem:[#allocation14 + $0x80] sm:$0xf]
        %v1654 = vld [vmem:[#allocation14 + $0x84] sm:$0xff]
        %v1655 = vld [vmem:[#allocation14 + $0x8c] sm:$0xf]
        %v1656 = vld [vmem:[#allocation14 + $0x90] sm:$0xff]
        %v1657 = vld [vmem:[#allocation14 + $0x98] sm:$0xf]
        %v1658 = vld [vmem:[#allocation14 + $0x9c] sm:$0xff]
        %v1659 = vld [vmem:[#allocation14 + $0xa4] sm:$0xf]
        %v1660 = vld [vmem:[#allocation14 + $0xa8] sm:$0xff]
        %v1661 = vld [vmem:[#allocation14 + $0xb0] sm:$0xf]
        %v1662 = vld [vmem:[#allocation14 + $0xb4] sm:$0xff]
        %v1663 = vld [vmem:[#allocation14 + $0xbc] sm:$0xf]
        %v1664 = vld [vmem:[#allocation16] sm:$0x7]
        %v1665 = vld [vmem:[#allocation17] sm:$0xf]
        %v1666 = vld [vmem:[#allocation17 + $0x4] sm:$0xf]
        %v1667 = vld [vmem:[#allocation17 + $0x8] sm:$0xf]
        %v1668 = vld [vmem:[#allocation17 + $0xc] sm:$0xf]
        %v1669 = vld [vmem:[#allocation17 + $0x10] sm:$0xf]
        %v1670 = vld [vmem:[#allocation17 + $0x14] sm:$0xf]
        %v1671 = vld [vmem:[#allocation17 + $0x18] sm:$0xf]
        %v1672 = vld [vmem:[#allocation17 + $0x1c] sm:$0xf]
        %v1673 = vld [vmem:[#allocation17 + $0x20] sm:$0xf]
        %v1674 = vld [vmem:[#allocation17 + $0x24] sm:$0xf]
        %v1675 = vld [vmem:[#allocation17 + $0x28] sm:$0xf]
        %v1676 = vld [vmem:[#allocation17 + $0x2c] sm:$0xf]
        %v1677 = vld [vmem:[#allocation17 + $0x30] sm:$0xf]
        %v1678 = vld [vmem:[#allocation17 + $0x34] sm:$0xf]
        %v1679 = vld [vmem:[#allocation17 + $0x38] sm:$0xf]
        %v1680 = vld [vmem:[#allocation17 + $0x3c] sm:$0xf]
        %v1681 = vld [vmem:[#allocation19] sm:$0x1]
        %v1682 = vpack.c.bf16 %v891, %v890
        %v1683 = vpack.c.bf16 %v893, %v892
        %v1685 = vlaneseq
        %v1686 = vshrl.u32 %v1685, 7
        %v1687 = vsub.s32 0, %v1686
        %v1688 = vrot.slane %v1664, %v1687
        %v1689 = vlaneseq
        %v1690 = vshrl.u32 %v1689, 7
        %v1691 = vsub.s32 1, %v1690
        %v1692 = vrot.slane %v1664, %v1691
        %v1693 = vlaneseq
        %v1694 = vshrl.u32 %v1693, 7
        %v1695 = vsub.s32 2, %v1694
        %v1696 = vrot.slane %v1664, %v1695
        %v1732 = vunpack.c.l.b16 %v1632
        %v1733 = vunpack.c.h.b16 %v1632
        %v1734 = vunpack.c.l.b16 %v1633
        %v1735 = vunpack.c.l.b16 %v1634
        %v1736 = vunpack.c.h.b16 %v1634
        %v1737 = vunpack.c.l.b16 %v1635
        %v1738 = vunpack.c.l.b16 %v1636
        %v1739 = vunpack.c.h.b16 %v1636
        %v1740 = vunpack.c.l.b16 %v1637
        %v1741 = vunpack.c.l.b16 %v1638
        %v1742 = vunpack.c.h.b16 %v1638
        %v1743 = vunpack.c.l.b16 %v1639
        %v1744 = vunpack.c.l.b16 %v1640
        %v1745 = vunpack.c.h.b16 %v1640
        %v1746 = vunpack.c.l.b16 %v1641
        %v1747 = vunpack.c.l.b16 %v1642
        %v1748 = vunpack.c.h.b16 %v1642
        %v1749 = vunpack.c.l.b16 %v1643
        %v1750 = vunpack.c.l.b16 %v1644
        %v1751 = vunpack.c.h.b16 %v1644
        %v1752 = vunpack.c.l.b16 %v1645
        %v1753 = vunpack.c.l.b16 %v1646
        %v1754 = vunpack.c.h.b16 %v1646
        %v1755 = vunpack.c.l.b16 %v1647
        %v1756 = vunpack.c.l.b16 %v1648
        %v1757 = vunpack.c.h.b16 %v1648
        %v1758 = vunpack.c.l.b16 %v1649
        %v1759 = vunpack.c.l.b16 %v1650
        %v1760 = vunpack.c.h.b16 %v1650
        %v1761 = vunpack.c.l.b16 %v1651
        %v1762 = vunpack.c.l.b16 %v1652
        %v1763 = vunpack.c.h.b16 %v1652
        %v1764 = vunpack.c.l.b16 %v1653
        %v1765 = vunpack.c.l.b16 %v1654
        %v1766 = vunpack.c.h.b16 %v1654
        %v1767 = vunpack.c.l.b16 %v1655
        %v1768 = vunpack.c.l.b16 %v1656
        %v1769 = vunpack.c.h.b16 %v1656
        %v1770 = vunpack.c.l.b16 %v1657
        %v1771 = vunpack.c.l.b16 %v1658
        %v1772 = vunpack.c.h.b16 %v1658
        %v1773 = vunpack.c.l.b16 %v1659
        %v1774 = vunpack.c.l.b16 %v1660
        %v1775 = vunpack.c.h.b16 %v1660
        %v1776 = vunpack.c.l.b16 %v1661
        %v1777 = vunpack.c.l.b16 %v1662
        %v1778 = vunpack.c.h.b16 %v1662
        %v1779 = vunpack.c.l.b16 %v1663
        %v1780 = vpack.c.b16 %v1735, %v1732
        %v1781 = vpack.c.b16 %v1736, %v1733
        %v1782 = vpack.c.b16 %v1737, %v1734
        %v1783 = vpack.c.b16 %v1741, %v1738
        %v1784 = vpack.c.b16 %v1742, %v1739
        %v1785 = vpack.c.b16 %v1743, %v1740
        %v1786 = vpack.c.b16 %v1747, %v1744
        %v1787 = vpack.c.b16 %v1748, %v1745
        %v1788 = vpack.c.b16 %v1749, %v1746
        %v1789 = vpack.c.b16 %v1753, %v1750
        %v1790 = vpack.c.b16 %v1754, %v1751
        %v1791 = vpack.c.b16 %v1755, %v1752
        %v1792 = vpack.c.b16 %v1759, %v1756
        %v1793 = vpack.c.b16 %v1760, %v1757
        %v1794 = vpack.c.b16 %v1761, %v1758
        %v1795 = vpack.c.b16 %v1765, %v1762
        %v1796 = vpack.c.b16 %v1766, %v1763
        %v1797 = vpack.c.b16 %v1767, %v1764
        %v1798 = vpack.c.b16 %v1771, %v1768
        %v1799 = vpack.c.b16 %v1772, %v1769
        %v1800 = vpack.c.b16 %v1773, %v1770
        %v1801 = vpack.c.b16 %v1777, %v1774
        %v1802 = vpack.c.b16 %v1778, %v1775
        %v1803 = vpack.c.b16 %v1779, %v1776
        %1828 = vmatprep.subr.bf16.mxu0 %v1781
        %1829 = vmatpush1.bf16.msra.mxu0 %v1780
        %1830 = vmatprep.subr.bf16.mxu0 %v1784
        %1831 = vmatpush1.bf16.msra.mxu0 %v1783
        %1832 = vmatprep.subr.bf16.mxu0 %v1787
        %1833 = vmatpush1.bf16.msra.mxu0 %v1786
        %1834 = vmatprep.subr.bf16.mxu0 %v1790
        %1835 = vmatpush1.bf16.msra.mxu0 %v1789
        %1836 = vmatprep.subr.bf16.mxu0 %v1793
        %1837 = vmatpush1.bf16.msra.mxu0 %v1792
        %1838 = vmatprep.subr.bf16.mxu0 %v1796
        %1839 = vmatpush1.bf16.msra.mxu0 %v1795
        %1840 = vmatprep.subr.bf16.mxu0 %v1799
        %1841 = vmatpush1.bf16.msra.mxu0 %v1798
        %1842 = vmatprep.subr.bf16.mxu0 %v1802
        %1843 = vmatpush1.bf16.msra.mxu0 %v1801
        %1844 = vmatprep.subr.bf16.mxu0 0
        %1845 = vmatpush1.bf16.msra.mxu0 0
        %1846 = vmatprep.subr.bf16.mxu0 0
        %1847 = vmatpush1.bf16.msra.mxu0 0
        %1848 = vmatprep.subr.bf16.mxu0 0
        %1849 = vmatpush1.bf16.msra.mxu0 0
        %1850 = vmatprep.subr.bf16.mxu0 0
        %1851 = vmatpush1.bf16.msra.mxu0 0
        %1852 = vmatprep.subr.bf16.mxu0 0
        %1853 = vmatpush1.bf16.msra.mxu0 0
        %1854 = vmatprep.subr.bf16.mxu0 0
        %1855 = vmatpush1.bf16.msra.mxu0 0
        %1856 = vmatprep.subr.bf16.mxu0 0
        %1857 = vmatpush1.bf16.msra.mxu0 0
        %1858 = vmatprep.subr.bf16.mxu0 0
        %1859 = vmatpush1.bf16.msra.mxu0 0
        %1860 = vmatprep.mubr.bf16.mxu0 0
        %1861 = vmatmul.mubr.bf16.gmra.mrb[0].mxu0 %v1682
        %v1862 = vpop.f32.mrb[0].mxu0
        %v1863 = vadd.f32 %v1688, %v1862
        %v1864 = vpop.f32.mrb[0].mxu0
        %v1865 = vadd.f32 %v1692, %v1864
        %v1866 = vpop.f32.mrb[0].mxu0
        %v1867 = vadd.f32 %v1688, %v1866
        %v1868 = vpop.f32.mrb[0].mxu0
        %v1869 = vadd.f32 %v1692, %v1868
        %1870 = vmatprep.mubr.bf16.mxu0 0
        %1871 = vmatmul.mubr.bf16.gmra.mrb[0].mxu0 %v1683
        %v1872 = vpop.f32.mrb[0].mxu0
        %v1873 = vadd.f32 %v1688, %v1872
        %v1874 = vpop.f32.mrb[0].mxu0
        %v1875 = vadd.f32 %v1692, %v1874
        %v1876 = vpop.f32.mrb[0].mxu0
        %v1877 = vadd.f32 %v1688, %v1876
        %v1878 = vpop.f32.mrb[0].mxu0
        %v1879 = vadd.f32 %v1692, %v1878
        %1880 = vdwg.mxu0
        %1881 = vmatprep.subr.bf16.mxu0 0
        %1882 = vmatpush1.bf16.msra.mxu0 %v1782
        %1883 = vmatprep.subr.bf16.mxu0 0
        %1884 = vmatpush1.bf16.msra.mxu0 %v1785
        %1885 = vmatprep.subr.bf16.mxu0 0
        %1886 = vmatpush1.bf16.msra.mxu0 %v1788
        %1887 = vmatprep.subr.bf16.mxu0 0
        %1888 = vmatpush1.bf16.msra.mxu0 %v1791
        %1889 = vmatprep.subr.bf16.mxu0 0
        %1890 = vmatpush1.bf16.msra.mxu0 %v1794
        %1891 = vmatprep.subr.bf16.mxu0 0
        %1892 = vmatpush1.bf16.msra.mxu0 %v1797
        %1893 = vmatprep.subr.bf16.mxu0 0
        %1894 = vmatpush1.bf16.msra.mxu0 %v1800
        %1895 = vmatprep.subr.bf16.mxu0 0
        %1896 = vmatpush1.bf16.msra.mxu0 %v1803
        %1897 = vmatprep.subr.bf16.mxu0 0
        %1898 = vmatpush1.bf16.msra.mxu0 0
        %1899 = vmatprep.subr.bf16.mxu0 0
        %1900 = vmatpush1.bf16.msra.mxu0 0
        %1901 = vmatprep.subr.bf16.mxu0 0
        %1902 = vmatpush1.bf16.msra.mxu0 0
        %1903 = vmatprep.subr.bf16.mxu0 0
        %1904 = vmatpush1.bf16.msra.mxu0 0
        %1905 = vmatprep.subr.bf16.mxu0 0
        %1906 = vmatpush1.bf16.msra.mxu0 0
        %1907 = vmatprep.subr.bf16.mxu0 0
        %1908 = vmatpush1.bf16.msra.mxu0 0
        %1909 = vmatprep.subr.bf16.mxu0 0
        %1910 = vmatpush1.bf16.msra.mxu0 0
        %1911 = vmatprep.subr.bf16.mxu0 0
        %1912 = vmatpush1.bf16.msra.mxu0 0
        %1913 = vmatprep.mubr.bf16.mxu0 0
        %1914 = vmatmul.mubr.bf16.gmra.mrb[0].mxu0 %v1682
        %v1915 = vpop.f32.mrb[0].mxu0
        %v1916 = vadd.f32 %v1696, %v1915
        %v1917 = vpop.f32.mrb[0].mxu0
        %v1918 = vpop.f32.mrb[0].mxu0
        %v1919 = vadd.f32 %v1696, %v1918
        %v1920 = vpop.f32.mrb[0].mxu0
        %1921 = vmatprep.mubr.bf16.mxu0 0
        %1922 = vmatmul.mubr.bf16.gmra.mrb[0].mxu0 %v1683
        %v1923 = vpop.f32.mrb[0].mxu0
        %v1924 = vadd.f32 %v1696, %v1923
        %v1925 = vpop.f32.mrb[0].mxu0
        %v1926 = vpop.f32.mrb[0].mxu0
        %v1927 = vadd.f32 %v1696, %v1926
        %v1928 = vpop.f32.mrb[0].mxu0
        %1929 = vdwg.mxu0
        %v1930 = vmax.f32 %v1865, %v1869
        %v1931 = vmax.f32 %v1875, %v1879
        %v1932 = vmax.f32 %v1930, %v1931
        %v1933 = vrot.slane %v1932, 4
        %v1934 = vmax.f32 %v1932, %v1933
        %v1935 = vrot.slane %v1934, 2
        %v1936 = vmax.f32 %v1934, %v1935
        %v1937 = vrot.slane %v1936, 1
        %v1938 = vmax.f32 %v1936, %v1937
        %v1939 = vsub.f32 %v1865, %v1938
        %v1940 = vsub.f32 %v1869, %v1938
        %v1941 = vsub.f32 %v1875, %v1938
        %v1942 = vsub.f32 %v1879, %v1938
        %v1943 = vmul.f32 %v1939, 1.442695
        %v1944 = vpow.pop %v1943
        %v1945 = vmul.f32 %v1940, 1.442695
        %v1946 = vpow.pop %v1945
        %v1947 = vmul.f32 %v1941, 1.442695
        %v1948 = vpow.pop %v1947
        %v1949 = vmul.f32 %v1942, 1.442695
        %v1950 = vpow.pop %v1949
        %v1951 = vadd.f32 %v1944, %v1946
        %v1952 = vadd.f32 %v1951, %v1948
        %v1953 = vadd.f32 %v1952, %v1950
        %v1954 = vrot.slane %v1953, 4
        %v1955 = vadd.f32 %v1953, %v1954
        %v1956 = vrot.slane %v1955, 2
        %v1957 = vadd.f32 %v1955, %v1956
        %v1958 = vrot.slane %v1957, 1
        %v1959 = vadd.f32 %v1957, %v1958
        %v1960 = vrcp.pop %v1959
        %v1961 = vmul.f32 %v1944, %v1960
        %v1962 = vmul.f32 %v1946, %v1960
        %v1963 = vmul.f32 %v1948, %v1960
        %v1964 = vmul.f32 %v1950, %v1960
        %1965 = vmax.xlane.f32.xlu0 %v1863
        %v1966 = vpop.xlane.xlu0 %1965
        %1967 = vmax.xlane.f32.xlu0 %v1867
        %v1968 = vpop.xlane.xlu0 %1967
        %1969 = vmax.xlane.f32.xlu0 %v1873
        %v1970 = vpop.xlane.xlu0 %1969
        %1971 = vmax.xlane.f32.xlu0 %v1877
        %v1972 = vpop.xlane.xlu0 %1971
        %v1973 = vsub.f32 %v1863, %v1966
        %v1974 = vsub.f32 %v1867, %v1968
        %v1975 = vsub.f32 %v1873, %v1970
        %v1976 = vsub.f32 %v1877, %v1972
        %v1977 = vmul.f32 %v1973, 1.442695
        %v1978 = vpow.pop %v1977
        %v1979 = vmul.f32 %v1974, 1.442695
        %v1980 = vpow.pop %v1979
        %v1981 = vmul.f32 %v1975, 1.442695
        %v1982 = vpow.pop %v1981
        %v1983 = vmul.f32 %v1976, 1.442695
        %v1984 = vpow.pop %v1983
        %v1985 = vpack.c.bf16 %v1980, %v1978
        %v1986 = vpack.c.bf16 %v1984, %v1982
        %1987 = vmatprep.subr.bf16.mxu0 0
        %1988 = vmatpush1.bf16.msra.mxu0 %v878
        %1989 = vmatprep.subr.bf16.mxu0 0
        %1990 = vmatpush1.bf16.msra.mxu0 %v879
        %1991 = vmatprep.subr.bf16.mxu0 0
        %1992 = vmatpush1.bf16.msra.mxu0 %v880
        %1993 = vmatprep.subr.bf16.mxu0 0
        %1994 = vmatpush1.bf16.msra.mxu0 %v881
        %1995 = vmatprep.subr.bf16.mxu0 0
        %1996 = vmatpush1.bf16.msra.mxu0 %v882
        %1997 = vmatprep.subr.bf16.mxu0 0
        %1998 = vmatpush1.bf16.msra.mxu0 %v883
        %1999 = vmatprep.subr.bf16.mxu0 0
        %2000 = vmatpush1.bf16.msra.mxu0 %v884
        %2001 = vmatprep.subr.bf16.mxu0 0
        %2002 = vmatpush1.bf16.msra.mxu0 %v885
        %2003 = vmatprep.subr.bf16.mxu0 0
        %2004 = vmatpush1.bf16.msra.mxu0 0
        %2005 = vmatprep.subr.bf16.mxu0 0
        %2006 = vmatpush1.bf16.msra.mxu0 0
        %2007 = vmatprep.subr.bf16.mxu0 0
        %2008 = vmatpush1.bf16.msra.mxu0 0
        %2009 = vmatprep.subr.bf16.mxu0 0
        %2010 = vmatpush1.bf16.msra.mxu0 0
        %2011 = vmatprep.subr.bf16.mxu0 0
        %2012 = vmatpush1.bf16.msra.mxu0 0
        %2013 = vmatprep.subr.bf16.mxu0 0
        %2014 = vmatpush1.bf16.msra.mxu0 0
        %2015 = vmatprep.subr.bf16.mxu0 0
        %2016 = vmatpush1.bf16.msra.mxu0 0
        %2017 = vmatprep.subr.bf16.mxu0 0
        %2018 = vmatpush1.bf16.msra.mxu0 0
        %2019 = vmatprep.mubr.bf16.mxu0 0
        %2020 = vmatmul.mubr.bf16.gmra.mrb[0].mxu0 %v1985
        %v2021 = vpop.f32.mrb[0].mxu0
        %v2022 = vadd.f32 0.0, %v2021
        %v2023 = vpop.f32.mrb[0].mxu0
        %v2024 = vpop.f32.mrb[0].mxu0
        %v2025 = vadd.f32 0.0, %v2024
        %v2026 = vpop.f32.mrb[0].mxu0
        %2027 = vmatprep.mubr.bf16.mxu0 0
        %2028 = vmatmul.mubr.bf16.gmra.mrb[0].mxu0 %v1986
        %v2029 = vpop.f32.mrb[0].mxu0
        %v2030 = vadd.f32 0.0, %v2029
        %v2031 = vpop.f32.mrb[0].mxu0
        %v2032 = vpop.f32.mrb[0].mxu0
        %v2033 = vadd.f32 0.0, %v2032
        %v2034 = vpop.f32.mrb[0].mxu0
        %2035 = vdwg.mxu0
        %v2036 = vrcp.pop %v2022
        %v2037 = vrcp.pop %v2025
        %v2038 = vrcp.pop %v2030
        %v2039 = vrcp.pop %v2033
        %v2040 = vmul.f32 %v1978, %v2036
        %v2041 = vmul.f32 %v1980, %v2037
        %v2042 = vmul.f32 %v1982, %v2038
        %v2043 = vmul.f32 %v1984, %v2039
        %v2044 = vpack.c.bf16 %v1962, %v1961
        %v2045 = vpack.c.bf16 %v1964, %v1963
        %v2046 = vpack.c.bf16 %v1919, %v1916
        %v2047 = vpack.c.bf16 %v1927, %v1924
        %2048 = vxpose.xlu0.c.b16.start [1/8] %v2044, 128
        %2049 = vxpose.xlu0.c.b16.cont [2/8] %v2045, 128
        %2050 = vxpose.xlu0.c.b16.cont [3/8] 0, 128
        %2051 = vxpose.xlu0.c.b16.cont [4/8] 0, 128
        %2052 = vxpose.xlu0.c.b16.cont [5/8] 0, 128
        %2053 = vxpose.xlu0.c.b16.cont [6/8] 0, 128
        %2054 = vxpose.xlu0.c.b16.cont [7/8] 0, 128
        %2055 = vxpose.xlu0.c.b16.end [8/8] 0, 128
        %v2056 = vpop.trf.xlu0
        %v2057 = vpop.trf.xlu0
        %v2058 = vpop.trf.xlu0
        %v2059 = vpop.trf.xlu0
        %v2060 = vpop.trf.xlu0
        %v2061 = vpop.trf.xlu0
        %v2062 = vpop.trf.xlu0
        %v2063 = vpop.trf.xlu0
        %v2065 = vsel %vm1326, %v2056, 0
        %v2068 = vsel %vm1326, %v2057, 0
        %v2071 = vsel %vm1326, %v2058, 0
        %v2074 = vsel %vm1326, %v2059, 0
        %v2077 = vsel %vm1326, %v2060, 0
        %v2080 = vsel %vm1326, %v2061, 0
        %v2083 = vsel %vm1326, %v2062, 0
        %v2086 = vsel %vm1326, %v2063, 0
        %2088 = vmatprep.subr.bf16.mxu0 0
        %2089 = vmatpush1.bf16.msra.mxu0 %v2046
        %2090 = vmatprep.subr.bf16.mxu0 0
        %2091 = vmatpush1.bf16.msra.mxu0 %v2047
        %2092 = vmatprep.subr.bf16.mxu0 0
        %2093 = vmatpush1.bf16.msra.mxu0 0
        %2094 = vmatprep.subr.bf16.mxu0 0
        %2095 = vmatpush1.bf16.msra.mxu0 0
        %2096 = vmatprep.subr.bf16.mxu0 0
        %2097 = vmatpush1.bf16.msra.mxu0 0
        %2098 = vmatprep.subr.bf16.mxu0 0
        %2099 = vmatpush1.bf16.msra.mxu0 0
        %2100 = vmatprep.subr.bf16.mxu0 0
        %2101 = vmatpush1.bf16.msra.mxu0 0
        %2102 = vmatprep.subr.bf16.mxu0 0
        %2103 = vmatpush1.bf16.msra.mxu0 0
        %2104 = vmatprep.subr.bf16.mxu0 0
        %2105 = vmatpush1.bf16.msra.mxu0 0
        %2106 = vmatprep.subr.bf16.mxu0 0
        %2107 = vmatpush1.bf16.msra.mxu0 0
        %2108 = vmatprep.subr.bf16.mxu0 0
        %2109 = vmatpush1.bf16.msra.mxu0 0
        %2110 = vmatprep.subr.bf16.mxu0 0
        %2111 = vmatpush1.bf16.msra.mxu0 0
        %2112 = vmatprep.subr.bf16.mxu0 0
        %2113 = vmatpush1.bf16.msra.mxu0 0
        %2114 = vmatprep.subr.bf16.mxu0 0
        %2115 = vmatpush1.bf16.msra.mxu0 0
        %2116 = vmatprep.subr.bf16.mxu0 0
        %2117 = vmatpush1.bf16.msra.mxu0 0
        %2118 = vmatprep.subr.bf16.mxu0 0
        %2119 = vmatpush1.bf16.msra.mxu0 0
        %2120 = vmatprep.mubr.bf16.mxu0 0
        %2121 = vmatmul.mubr.bf16.gmra.mrb[0].mxu0 %v2065
        %v2122 = vpop.f32.mrb[0].mxu0
        %v2123 = vadd.f32 0.0, %v2122
        %v2124 = vpop.f32.mrb[0].mxu0
        %v2125 = vpop.f32.mrb[0].mxu0
        %v2126 = vadd.f32 0.0, %v2125
        %v2127 = vpop.f32.mrb[0].mxu0
        %2128 = vmatprep.mubr.bf16.mxu0 0
        %2129 = vmatmul.mubr.bf16.gmra.mrb[0].mxu0 %v2068
        %v2130 = vpop.f32.mrb[0].mxu0
        %v2131 = vadd.f32 0.0, %v2130
        %v2132 = vpop.f32.mrb[0].mxu0
        %v2133 = vpop.f32.mrb[0].mxu0
        %v2134 = vadd.f32 0.0, %v2133
        %v2135 = vpop.f32.mrb[0].mxu0
        %2136 = vmatprep.mubr.bf16.mxu0 0
        %2137 = vmatmul.mubr.bf16.gmra.mrb[0].mxu0 %v2071
        %v2138 = vpop.f32.mrb[0].mxu0
        %v2139 = vadd.f32 0.0, %v2138
        %v2140 = vpop.f32.mrb[0].mxu0
        %v2141 = vpop.f32.mrb[0].mxu0
        %v2142 = vadd.f32 0.0, %v2141
        %v2143 = vpop.f32.mrb[0].mxu0
        %2144 = vmatprep.mubr.bf16.mxu0 0
        %2145 = vmatmul.mubr.bf16.gmra.mrb[0].mxu0 %v2074
        %v2146 = vpop.f32.mrb[0].mxu0
        %v2147 = vadd.f32 0.0, %v2146
        %v2148 = vpop.f32.mrb[0].mxu0
        %v2149 = vpop.f32.mrb[0].mxu0
        %v2150 = vadd.f32 0.0, %v2149
        %v2151 = vpop.f32.mrb[0].mxu0
        %2152 = vmatprep.mubr.bf16.mxu0 0
        %2153 = vmatmul.mubr.bf16.gmra.mrb[0].mxu0 %v2077
        %v2154 = vpop.f32.mrb[0].mxu0
        %v2155 = vadd.f32 0.0, %v2154
        %v2156 = vpop.f32.mrb[0].mxu0
        %v2157 = vpop.f32.mrb[0].mxu0
        %v2158 = vadd.f32 0.0, %v2157
        %v2159 = vpop.f32.mrb[0].mxu0
        %2160 = vmatprep.mubr.bf16.mxu0 0
        %2161 = vmatmul.mubr.bf16.gmra.mrb[0].mxu0 %v2080
        %v2162 = vpop.f32.mrb[0].mxu0
        %v2163 = vadd.f32 0.0, %v2162
        %v2164 = vpop.f32.mrb[0].mxu0
        %v2165 = vpop.f32.mrb[0].mxu0
        %v2166 = vadd.f32 0.0, %v2165
        %v2167 = vpop.f32.mrb[0].mxu0
        %2168 = vmatprep.mubr.bf16.mxu0 0
        %2169 = vmatmul.mubr.bf16.gmra.mrb[0].mxu0 %v2083
        %v2170 = vpop.f32.mrb[0].mxu0
        %v2171 = vadd.f32 0.0, %v2170
        %v2172 = vpop.f32.mrb[0].mxu0
        %v2173 = vpop.f32.mrb[0].mxu0
        %v2174 = vadd.f32 0.0, %v2173
        %v2175 = vpop.f32.mrb[0].mxu0
        %2176 = vmatprep.mubr.bf16.mxu0 0
        %2177 = vmatmul.mubr.bf16.gmra.mrb[0].mxu0 %v2086
        %v2178 = vpop.f32.mrb[0].mxu0
        %v2179 = vadd.f32 0.0, %v2178
        %v2180 = vpop.f32.mrb[0].mxu0
        %v2181 = vpop.f32.mrb[0].mxu0
        %v2182 = vadd.f32 0.0, %v2181
        %v2183 = vpop.f32.mrb[0].mxu0
        %2184 = vdwg.mxu0
        %v2185 = vmul.f32 %v2123, %v862
        %v2186 = vmul.f32 %v2126, %v863
        %v2187 = vmul.f32 %v2131, %v864
        %v2188 = vmul.f32 %v2134, %v865
        %v2189 = vmul.f32 %v2139, %v866
        %v2190 = vmul.f32 %v2142, %v867
        %v2191 = vmul.f32 %v2147, %v868
        %v2192 = vmul.f32 %v2150, %v869
        %v2193 = vmul.f32 %v2155, %v870
        %v2194 = vmul.f32 %v2158, %v871
        %v2195 = vmul.f32 %v2163, %v872
        %v2196 = vmul.f32 %v2166, %v873
        %v2197 = vmul.f32 %v2171, %v874
        %v2198 = vmul.f32 %v2174, %v875
        %v2199 = vmul.f32 %v2179, %v876
        %v2200 = vmul.f32 %v2182, %v877
        %v2201 = vpack.c.bf16 %v2041, %v2040
        %v2202 = vpack.c.bf16 %v2043, %v2042
        %v2203 = vpack.c.bf16 %v2186, %v2185
        %v2204 = vpack.c.bf16 %v2188, %v2187
        %v2205 = vpack.c.bf16 %v2190, %v2189
        %v2206 = vpack.c.bf16 %v2192, %v2191
        %v2207 = vpack.c.bf16 %v2194, %v2193
        %v2208 = vpack.c.bf16 %v2196, %v2195
        %v2209 = vpack.c.bf16 %v2198, %v2197
        %v2210 = vpack.c.bf16 %v2200, %v2199
        %2211 = vmatprep.subr.bf16.mxu0 0
        %2212 = vmatpush1.bf16.msra.mxu0 %v2203
        %2213 = vmatprep.subr.bf16.mxu0 0
        %2214 = vmatpush1.bf16.msra.mxu0 %v2204
        %2215 = vmatprep.subr.bf16.mxu0 0
        %2216 = vmatpush1.bf16.msra.mxu0 %v2205
        %2217 = vmatprep.subr.bf16.mxu0 0
        %2218 = vmatpush1.bf16.msra.mxu0 %v2206
        %2219 = vmatprep.subr.bf16.mxu0 0
        %2220 = vmatpush1.bf16.msra.mxu0 %v2207
        %2221 = vmatprep.subr.bf16.mxu0 0
        %2222 = vmatpush1.bf16.msra.mxu0 %v2208
        %2223 = vmatprep.subr.bf16.mxu0 0
        %2224 = vmatpush1.bf16.msra.mxu0 %v2209
        %2225 = vmatprep.subr.bf16.mxu0 0
        %2226 = vmatpush1.bf16.msra.mxu0 %v2210
        %2227 = vmatprep.subr.bf16.mxu0 0
        %2228 = vmatpush1.bf16.msra.mxu0 0
        %2229 = vmatprep.subr.bf16.mxu0 0
        %2230 = vmatpush1.bf16.msra.mxu0 0
        %2231 = vmatprep.subr.bf16.mxu0 0
        %2232 = vmatpush1.bf16.msra.mxu0 0
        %2233 = vmatprep.subr.bf16.mxu0 0
        %2234 = vmatpush1.bf16.msra.mxu0 0
        %2235 = vmatprep.subr.bf16.mxu0 0
        %2236 = vmatpush1.bf16.msra.mxu0 0
        %2237 = vmatprep.subr.bf16.mxu0 0
        %2238 = vmatpush1.bf16.msra.mxu0 0
        %2239 = vmatprep.subr.bf16.mxu0 0
        %2240 = vmatpush1.bf16.msra.mxu0 0
        %2241 = vmatprep.subr.bf16.mxu0 0
        %2242 = vmatpush1.bf16.msra.mxu0 0
        %2243 = vmatprep.mubr.bf16.mxu0 0
        %2244 = vmatmul.mubr.bf16.gmra.mrb[0].mxu0 %v2201
        %v2245 = vpop.f32.mrb[0].mxu0
        %v2246 = vadd.f32 0.0, %v2245
        %v2247 = vpop.f32.mrb[0].mxu0
        %v2248 = vpop.f32.mrb[0].mxu0
        %v2249 = vadd.f32 0.0, %v2248
        %v2250 = vpop.f32.mrb[0].mxu0
        %2251 = vmatprep.mubr.bf16.mxu0 0
        %2252 = vmatmul.mubr.bf16.gmra.mrb[0].mxu0 %v2202
        %v2253 = vpop.f32.mrb[0].mxu0
        %v2254 = vadd.f32 0.0, %v2253
        %v2255 = vpop.f32.mrb[0].mxu0
        %v2256 = vpop.f32.mrb[0].mxu0
        %v2257 = vadd.f32 0.0, %v2256
        %v2258 = vpop.f32.mrb[0].mxu0
        %2259 = vdwg.mxu0
        %v2260 = vpack.c.bf16 %v2249, %v2246
        %v2261 = vpack.c.bf16 %v2257, %v2254
        %v2263 = vlaneseq
        %v2264 = vshrl.u32 %v2263, 7
        %v2265 = vsub.s32 0, %v2264
        %v2266 = vrot.slane %v1681, %v2265
        %v2284 = vunpack.c.l.b16 %v1665
        %v2285 = vunpack.c.l.b16 %v1666
        %v2286 = vunpack.c.l.b16 %v1667
        %v2287 = vunpack.c.l.b16 %v1668
        %v2288 = vunpack.c.l.b16 %v1669
        %v2289 = vunpack.c.l.b16 %v1670
        %v2290 = vunpack.c.l.b16 %v1671
        %v2291 = vunpack.c.l.b16 %v1672
        %v2292 = vunpack.c.l.b16 %v1673
        %v2293 = vunpack.c.l.b16 %v1674
        %v2294 = vunpack.c.l.b16 %v1675
        %v2295 = vunpack.c.l.b16 %v1676
        %v2296 = vunpack.c.l.b16 %v1677
        %v2297 = vunpack.c.l.b16 %v1678
        %v2298 = vunpack.c.l.b16 %v1679
        %v2299 = vunpack.c.l.b16 %v1680
        %v2300 = vpack.c.b16 %v2285, %v2284
        %v2301 = vpack.c.b16 %v2287, %v2286
        %v2302 = vpack.c.b16 %v2289, %v2288
        %v2303 = vpack.c.b16 %v2291, %v2290
        %v2304 = vpack.c.b16 %v2293, %v2292
        %v2305 = vpack.c.b16 %v2295, %v2294
        %v2306 = vpack.c.b16 %v2297, %v2296
        %v2307 = vpack.c.b16 %v2299, %v2298
        %2316 = vmatprep.subr.bf16.mxu0 0
        %2317 = vmatpush1.bf16.msra.mxu0 %v2300
        %2318 = vmatprep.subr.bf16.mxu0 0
        %2319 = vmatpush1.bf16.msra.mxu0 %v2301
        %2320 = vmatprep.subr.bf16.mxu0 0
        %2321 = vmatpush1.bf16.msra.mxu0 %v2302
        %2322 = vmatprep.subr.bf16.mxu0 0
        %2323 = vmatpush1.bf16.msra.mxu0 %v2303
        %2324 = vmatprep.subr.bf16.mxu0 0
        %2325 = vmatpush1.bf16.msra.mxu0 %v2304
        %2326 = vmatprep.subr.bf16.mxu0 0
        %2327 = vmatpush1.bf16.msra.mxu0 %v2305
        %2328 = vmatprep.subr.bf16.mxu0 0
        %2329 = vmatpush1.bf16.msra.mxu0 %v2306
        %2330 = vmatprep.subr.bf16.mxu0 0
        %2331 = vmatpush1.bf16.msra.mxu0 %v2307
        %2332 = vmatprep.subr.bf16.mxu0 0
        %2333 = vmatpush1.bf16.msra.mxu0 0
        %2334 = vmatprep.subr.bf16.mxu0 0
        %2335 = vmatpush1.bf16.msra.mxu0 0
        %2336 = vmatprep.subr.bf16.mxu0 0
        %2337 = vmatpush1.bf16.msra.mxu0 0
        %2338 = vmatprep.subr.bf16.mxu0 0
        %2339 = vmatpush1.bf16.msra.mxu0 0
        %2340 = vmatprep.subr.bf16.mxu0 0
        %2341 = vmatpush1.bf16.msra.mxu0 0
        %2342 = vmatprep.subr.bf16.mxu0 0
        %2343 = vmatpush1.bf16.msra.mxu0 0
        %2344 = vmatprep.subr.bf16.mxu0 0
        %2345 = vmatpush1.bf16.msra.mxu0 0
        %2346 = vmatprep.subr.bf16.mxu0 0
        %2347 = vmatpush1.bf16.msra.mxu0 0
        %2348 = vmatprep.mubr.bf16.mxu0 0
        %2349 = vmatmul.mubr.bf16.gmra.mrb[0].mxu0 %v2260
        %v2350 = vpop.f32.mrb[0].mxu0
        %v2351 = vadd.f32 %v2266, %v2350
        %v2352 = vpop.f32.mrb[0].mxu0
        %v2353 = vpop.f32.mrb[0].mxu0
        %v2354 = vadd.f32 %v2266, %v2353
        %v2355 = vpop.f32.mrb[0].mxu0
        %2356 = vmatprep.mubr.bf16.mxu0 0
        %2357 = vmatmul.mubr.bf16.gmra.mrb[0].mxu0 %v2261
        %v2358 = vpop.f32.mrb[0].mxu0
        %v2359 = vadd.f32 %v2266, %v2358
        %v2360 = vpop.f32.mrb[0].mxu0
        %v2361 = vpop.f32.mrb[0].mxu0
        %v2362 = vadd.f32 %v2266, %v2361
        %v2363 = vpop.f32.mrb[0].mxu0
        %2364 = vdwg.mxu0
        %v2365 = vadd.f32 %v2351, %v890
        %v2366 = vadd.f32 %v2354, %v891
        %v2367 = vadd.f32 %v2359, %v892
        %v2368 = vadd.f32 %v2362, %v893
        %v2369 = vadd.f32 %v1628, %v2365
        %v2370 = vadd.f32 %v1629, %v2366
        %v2371 = vadd.f32 %v1630, %v2367
        %v2372 = vadd.f32 %v1631, %v2368
        %v2373 = vpack.c.bf16 %v2370, %v2369
        %v2374 = vpack.c.bf16 %v2372, %v2371
        %v2375 = vld [vmem:[#allocation20] sm:$0xf]
        %v2376 = vld [vmem:[#allocation20 + $0x4] sm:$0xf]
        %v2377 = vld [vmem:[#allocation20 + $0x8] sm:$0xf]
        %v2378 = vld [vmem:[#allocation20 + $0xc] sm:$0xf]
        %v2379 = vld [vmem:[#allocation20 + $0x10] sm:$0xf]
        %v2380 = vld [vmem:[#allocation20 + $0x14] sm:$0xf]
        %v2381 = vld [vmem:[#allocation20 + $0x18] sm:$0xf]
        %v2382 = vld [vmem:[#allocation20 + $0x1c] sm:$0xf]
        %v2383 = vld [vmem:[#allocation20 + $0x20] sm:$0xf]
        %v2384 = vld [vmem:[#allocation20 + $0x24] sm:$0xf]
        %v2385 = vld [vmem:[#allocation20 + $0x28] sm:$0xf]
        %v2386 = vld [vmem:[#allocation20 + $0x2c] sm:$0xf]
        %v2387 = vld [vmem:[#allocation20 + $0x30] sm:$0xf]
        %v2388 = vld [vmem:[#allocation20 + $0x34] sm:$0xf]
        %v2389 = vld [vmem:[#allocation20 + $0x38] sm:$0xf]
        %v2390 = vld [vmem:[#allocation20 + $0x3c] sm:$0xf]
        %v2391 = vld [vmem:[#allocation22] sm:$0x1]
        %v2393 = vlaneseq
        %v2394 = vshrl.u32 %v2393, 7
        %v2395 = vsub.s32 0, %v2394
        %v2396 = vrot.slane %v2391, %v2395
        %v2414 = vunpack.c.l.b16 %v2375
        %v2415 = vunpack.c.l.b16 %v2376
        %v2416 = vunpack.c.l.b16 %v2377
        %v2417 = vunpack.c.l.b16 %v2378
        %v2418 = vunpack.c.l.b16 %v2379
        %v2419 = vunpack.c.l.b16 %v2380
        %v2420 = vunpack.c.l.b16 %v2381
        %v2421 = vunpack.c.l.b16 %v2382
        %v2422 = vunpack.c.l.b16 %v2383
        %v2423 = vunpack.c.l.b16 %v2384
        %v2424 = vunpack.c.l.b16 %v2385
        %v2425 = vunpack.c.l.b16 %v2386
        %v2426 = vunpack.c.l.b16 %v2387
        %v2427 = vunpack.c.l.b16 %v2388
        %v2428 = vunpack.c.l.b16 %v2389
        %v2429 = vunpack.c.l.b16 %v2390
        %v2430 = vpack.c.b16 %v2415, %v2414
        %v2431 = vpack.c.b16 %v2417, %v2416
        %v2432 = vpack.c.b16 %v2419, %v2418
        %v2433 = vpack.c.b16 %v2421, %v2420
        %v2434 = vpack.c.b16 %v2423, %v2422
        %v2435 = vpack.c.b16 %v2425, %v2424
        %v2436 = vpack.c.b16 %v2427, %v2426
        %v2437 = vpack.c.b16 %v2429, %v2428
        %2446 = vmatprep.subr.bf16.mxu0 0
        %2447 = vmatpush1.bf16.msra.mxu0 %v2430
        %2448 = vmatprep.subr.bf16.mxu0 0
        %2449 = vmatpush1.bf16.msra.mxu0 %v2431
        %2450 = vmatprep.subr.bf16.mxu0 0
        %2451 = vmatpush1.bf16.msra.mxu0 %v2432
        %2452 = vmatprep.subr.bf16.mxu0 0
        %2453 = vmatpush1.bf16.msra.mxu0 %v2433
        %2454 = vmatprep.subr.bf16.mxu0 0
        %2455 = vmatpush1.bf16.msra.mxu0 %v2434
        %2456 = vmatprep.subr.bf16.mxu0 0
        %2457 = vmatpush1.bf16.msra.mxu0 %v2435
        %2458 = vmatprep.subr.bf16.mxu0 0
        %2459 = vmatpush1.bf16.msra.mxu0 %v2436
        %2460 = vmatprep.subr.bf16.mxu0 0
        %2461 = vmatpush1.bf16.msra.mxu0 %v2437
        %2462 = vmatprep.subr.bf16.mxu0 0
        %2463 = vmatpush1.bf16.msra.mxu0 0
        %2464 = vmatprep.subr.bf16.mxu0 0
        %2465 = vmatpush1.bf16.msra.mxu0 0
        %2466 = vmatprep.subr.bf16.mxu0 0
        %2467 = vmatpush1.bf16.msra.mxu0 0
        %2468 = vmatprep.subr.bf16.mxu0 0
        %2469 = vmatpush1.bf16.msra.mxu0 0
        %2470 = vmatprep.subr.bf16.mxu0 0
        %2471 = vmatpush1.bf16.msra.mxu0 0
        %2472 = vmatprep.subr.bf16.mxu0 0
        %2473 = vmatpush1.bf16.msra.mxu0 0
        %2474 = vmatprep.subr.bf16.mxu0 0
        %2475 = vmatpush1.bf16.msra.mxu0 0
        %2476 = vmatprep.subr.bf16.mxu0 0
        %2477 = vmatpush1.bf16.msra.mxu0 0
        %2478 = vmatprep.mubr.bf16.mxu0 0
        %2479 = vmatmul.mubr.bf16.gmra.mrb[0].mxu0 %v2373
        %v2480 = vpop.f32.mrb[0].mxu0
        %v2481 = vadd.f32 %v2396, %v2480
        %v2482 = vpop.f32.mrb[0].mxu0
        %v2483 = vpop.f32.mrb[0].mxu0
        %v2484 = vadd.f32 %v2396, %v2483
        %v2485 = vpop.f32.mrb[0].mxu0
        %2486 = vmatprep.mubr.bf16.mxu0 0
        %2487 = vmatmul.mubr.bf16.gmra.mrb[0].mxu0 %v2374
        %v2488 = vpop.f32.mrb[0].mxu0
        %v2489 = vadd.f32 %v2396, %v2488
        %v2490 = vpop.f32.mrb[0].mxu0
        %v2491 = vpop.f32.mrb[0].mxu0
        %v2492 = vadd.f32 %v2396, %v2491
        %v2493 = vpop.f32.mrb[0].mxu0
        %2494 = vdwg.mxu0
        %v2495 = vmax.f32 %v2481, 0.0
        %v2496 = vmax.f32 %v2484, 0.0
        %v2497 = vmax.f32 %v2489, 0.0
        %v2498 = vmax.f32 %v2492, 0.0
        %v2499 = vpack.c.bf16 %v2496, %v2495
        %v2500 = vpack.c.bf16 %v2498, %v2497
        %v2501 = vld [vmem:[#allocation23] sm:$0xf]
        %v2502 = vld [vmem:[#allocation23 + $0x4] sm:$0xf]
        %v2503 = vld [vmem:[#allocation23 + $0x8] sm:$0xf]
        %v2504 = vld [vmem:[#allocation23 + $0xc] sm:$0xf]
        %v2505 = vld [vmem:[#allocation23 + $0x10] sm:$0xf]
        %v2506 = vld [vmem:[#allocation23 + $0x14] sm:$0xf]
        %v2507 = vld [vmem:[#allocation23 + $0x18] sm:$0xf]
        %v2508 = vld [vmem:[#allocation23 + $0x1c] sm:$0xf]
        %v2509 = vld [vmem:[#allocation23 + $0x20] sm:$0xf]
        %v2510 = vld [vmem:[#allocation23 + $0x24] sm:$0xf]
        %v2511 = vld [vmem:[#allocation23 + $0x28] sm:$0xf]
        %v2512 = vld [vmem:[#allocation23 + $0x2c] sm:$0xf]
        %v2513 = vld [vmem:[#allocation23 + $0x30] sm:$0xf]
        %v2514 = vld [vmem:[#allocation23 + $0x34] sm:$0xf]
        %v2515 = vld [vmem:[#allocation23 + $0x38] sm:$0xf]
        %v2516 = vld [vmem:[#allocation23 + $0x3c] sm:$0xf]
        %v2517 = vld [vmem:[#allocation25] sm:$0x1]
        %v2519 = vlaneseq
        %v2520 = vshrl.u32 %v2519, 7
        %v2521 = vsub.s32 0, %v2520
        %v2522 = vrot.slane %v2517, %v2521
        %v2540 = vunpack.c.l.b16 %v2501
        %v2541 = vunpack.c.l.b16 %v2502
        %v2542 = vunpack.c.l.b16 %v2503
        %v2543 = vunpack.c.l.b16 %v2504
        %v2544 = vunpack.c.l.b16 %v2505
        %v2545 = vunpack.c.l.b16 %v2506
        %v2546 = vunpack.c.l.b16 %v2507
        %v2547 = vunpack.c.l.b16 %v2508
        %v2548 = vunpack.c.l.b16 %v2509
        %v2549 = vunpack.c.l.b16 %v2510
        %v2550 = vunpack.c.l.b16 %v2511
        %v2551 = vunpack.c.l.b16 %v2512
        %v2552 = vunpack.c.l.b16 %v2513
        %v2553 = vunpack.c.l.b16 %v2514
        %v2554 = vunpack.c.l.b16 %v2515
        %v2555 = vunpack.c.l.b16 %v2516
        %v2556 = vpack.c.b16 %v2541, %v2540
        %v2557 = vpack.c.b16 %v2543, %v2542
        %v2558 = vpack.c.b16 %v2545, %v2544
        %v2559 = vpack.c.b16 %v2547, %v2546
        %v2560 = vpack.c.b16 %v2549, %v2548
        %v2561 = vpack.c.b16 %v2551, %v2550
        %v2562 = vpack.c.b16 %v2553, %v2552
        %v2563 = vpack.c.b16 %v2555, %v2554
        %2572 = vmatprep.subr.bf16.mxu0 0
        %2573 = vmatpush1.bf16.msra.mxu0 %v2556
        %2574 = vmatprep.subr.bf16.mxu0 0
        %2575 = vmatpush1.bf16.msra.mxu0 %v2557
        %2576 = vmatprep.subr.bf16.mxu0 0
        %2577 = vmatpush1.bf16.msra.mxu0 %v2558
        %2578 = vmatprep.subr.bf16.mxu0 0
        %2579 = vmatpush1.bf16.msra.mxu0 %v2559
        %2580 = vmatprep.subr.bf16.mxu0 0
        %2581 = vmatpush1.bf16.msra.mxu0 %v2560
        %2582 = vmatprep.subr.bf16.mxu0 0
        %2583 = vmatpush1.bf16.msra.mxu0 %v2561
        %2584 = vmatprep.subr.bf16.mxu0 0
        %2585 = vmatpush1.bf16.msra.mxu0 %v2562
        %2586 = vmatprep.subr.bf16.mxu0 0
        %2587 = vmatpush1.bf16.msra.mxu0 %v2563
        %2588 = vmatprep.subr.bf16.mxu0 0
        %2589 = vmatpush1.bf16.msra.mxu0 0
        %2590 = vmatprep.subr.bf16.mxu0 0
        %2591 = vmatpush1.bf16.msra.mxu0 0
        %2592 = vmatprep.subr.bf16.mxu0 0
        %2593 = vmatpush1.bf16.msra.mxu0 0
        %2594 = vmatprep.subr.bf16.mxu0 0
        %2595 = vmatpush1.bf16.msra.mxu0 0
        %2596 = vmatprep.subr.bf16.mxu0 0
        %2597 = vmatpush1.bf16.msra.mxu0 0
        %2598 = vmatprep.subr.bf16.mxu0 0
        %2599 = vmatpush1.bf16.msra.mxu0 0
        %2600 = vmatprep.subr.bf16.mxu0 0
        %2601 = vmatpush1.bf16.msra.mxu0 0
        %2602 = vmatprep.subr.bf16.mxu0 0
        %2603 = vmatpush1.bf16.msra.mxu0 0
        %2604 = vmatprep.mubr.bf16.mxu0 0
        %2605 = vmatmul.mubr.bf16.gmra.mrb[0].mxu0 %v2499
        %v2606 = vpop.f32.mrb[0].mxu0
        %v2607 = vadd.f32 %v2522, %v2606
        %v2608 = vpop.f32.mrb[0].mxu0
        %v2609 = vpop.f32.mrb[0].mxu0
        %v2610 = vadd.f32 %v2522, %v2609
        %v2611 = vpop.f32.mrb[0].mxu0
        %2612 = vmatprep.mubr.bf16.mxu0 0
        %2613 = vmatmul.mubr.bf16.gmra.mrb[0].mxu0 %v2500
        %v2614 = vpop.f32.mrb[0].mxu0
        %v2615 = vadd.f32 %v2522, %v2614
        %v2616 = vpop.f32.mrb[0].mxu0
        %v2617 = vpop.f32.mrb[0].mxu0
        %v2618 = vadd.f32 %v2522, %v2617
        %v2619 = vpop.f32.mrb[0].mxu0
        %2620 = vdwg.mxu0
        %v2621 = vadd.f32 %v2607, %v2369
        %v2622 = vadd.f32 %v2610, %v2370
        %v2623 = vadd.f32 %v2615, %v2371
        %v2624 = vadd.f32 %v2618, %v2372
        %2625 = vadd.xlane.f32.xlu0 %v2621
        %v2626 = vpop.xlane.xlu0 %2625
        %2627 = vadd.xlane.f32.xlu0 %v2622
        %v2628 = vpop.xlane.xlu0 %2627
        %2629 = vadd.xlane.f32.xlu0 %v2623
        %v2630 = vpop.xlane.xlu0 %2629
        %2631 = vadd.xlane.f32.xlu0 %v2624
        %v2632 = vpop.xlane.xlu0 %2631
        %v2633 = vmul.f32 %v2626, 0.0078125
        %v2634 = vmul.f32 %v2628, 0.0078125
        %v2635 = vmul.f32 %v2630, 0.0078125
        %v2636 = vmul.f32 %v2632, 0.0078125
        %v2637 = vsub.f32 %v2621, %v2633
        %v2638 = vsub.f32 %v2622, %v2634
        %v2639 = vsub.f32 %v2623, %v2635
        %v2640 = vsub.f32 %v2624, %v2636
        %v2641 = vmul.f32 %v2637, %v2637
        %v2642 = vmul.f32 %v2638, %v2638
        %v2643 = vmul.f32 %v2639, %v2639
        %v2644 = vmul.f32 %v2640, %v2640
        %2645 = vadd.xlane.f32.xlu0 %v2641
        %v2646 = vpop.xlane.xlu0 %2645
        %2647 = vadd.xlane.f32.xlu0 %v2642
        %v2648 = vpop.xlane.xlu0 %2647
        %2649 = vadd.xlane.f32.xlu0 %v2643
        %v2650 = vpop.xlane.xlu0 %2649
        %2651 = vadd.xlane.f32.xlu0 %v2644
        %v2652 = vpop.xlane.xlu0 %2651
        %v2653 = vmul.f32 %v2646, 0.0078125
        %v2654 = vmul.f32 %v2648, 0.0078125
        %v2655 = vmul.f32 %v2650, 0.0078125
        %v2656 = vmul.f32 %v2652, 0.0078125
        %v2657 = vadd.f32 %v2653, 1e-05
        %v2658 = vadd.f32 %v2654, 1e-05
        %v2659 = vadd.f32 %v2655, 1e-05
        %v2660 = vadd.f32 %v2656, 1e-05
        %v2661 = vrsqrt.pop %v2657
        %v2662 = vrsqrt.pop %v2658
        %v2663 = vrsqrt.pop %v2659
        %v2664 = vrsqrt.pop %v2660
        %v2665 = vmul.f32 %v2637, %v2661
        %v2666 = vmul.f32 %v2638, %v2662
        %v2667 = vmul.f32 %v2639, %v2663
        %v2668 = vmul.f32 %v2640, %v2664
        %v2669 = vld [vmem:[#allocation26] sm:$0x1]
        %v2671 = vlaneseq
        %v2672 = vshrl.u32 %v2671, 7
        %v2673 = vsub.s32 0, %v2672
        %v2674 = vrot.slane %v2669, %v2673
        %v2676 = vmul.f32 %v2665, %v2674
        %v2677 = vmul.f32 %v2666, %v2674
        %v2678 = vmul.f32 %v2667, %v2674
        %v2679 = vmul.f32 %v2668, %v2674
        %v2680 = vld [vmem:[#allocation28] sm:$0x1]
        %v2682 = vlaneseq
        %v2683 = vshrl.u32 %v2682, 7
        %v2684 = vsub.s32 0, %v2683
        %v2685 = vrot.slane %v2680, %v2684
        %v2687 = vadd.f32 %v2676, %v2685
        %v2688 = vadd.f32 %v2677, %v2685
        %v2689 = vadd.f32 %v2678, %v2685
        %v2690 = vadd.f32 %v2679, %v2685
        %v2691 = vadd.f32 %v2687, %v2688
        %v2692 = vadd.f32 %v2691, %v2689
        %v2693 = vadd.f32 %v2692, %v2690
        %v2694 = vrot.slane %v2693, 4
        %v2695 = vadd.f32 %v2693, %v2694
        %v2696 = vrot.slane %v2695, 2
        %v2697 = vadd.f32 %v2695, %v2696
        %v2698 = vrot.slane %v2697, 1
        %v2699 = vadd.f32 %v2697, %v2698
        %v2700 = vmul.f32 %v2699, 0.03125
        %v2701 = vpack.c.bf16 %v2700, %v2700
        %v2702 = vld [vmem:[%s17] sm:$0xf]
        %v2703 = vld [vmem:[%s17 + $0x4] sm:$0xf]
        %v2704 = vld [vmem:[%s17 + $0x8] sm:$0xf]
        %v2705 = vld [vmem:[%s17 + $0xc] sm:$0xf]
        %v2706 = vld [vmem:[%s17 + $0x10] sm:$0xf]
        %v2707 = vld [vmem:[%s17 + $0x14] sm:$0xf]
        %v2708 = vld [vmem:[%s17 + $0x18] sm:$0xf]
        %v2709 = vld [vmem:[%s17 + $0x1c] sm:$0xf]
        %v2710 = vld [vmem:[%s17 + $0x20] sm:$0xf]
        %v2711 = vld [vmem:[%s17 + $0x24] sm:$0xf]
        %v2712 = vld [vmem:[%s17 + $0x28] sm:$0xf]
        %v2713 = vld [vmem:[%s17 + $0x2c] sm:$0xf]
        %v2714 = vld [vmem:[%s17 + $0x30] sm:$0xf]
        %v2715 = vld [vmem:[%s17 + $0x34] sm:$0xf]
        %v2716 = vld [vmem:[%s17 + $0x38] sm:$0xf]
        %v2717 = vld [vmem:[%s17 + $0x3c] sm:$0xf]
        %v2718 = vld [vmem:[%s18] sm:$0x1]
        %v2735 = vunpack.c.l.b16 %v2702
        %v2736 = vunpack.c.l.b16 %v2703
        %v2737 = vunpack.c.l.b16 %v2704
        %v2738 = vunpack.c.l.b16 %v2705
        %v2739 = vunpack.c.l.b16 %v2706
        %v2740 = vunpack.c.l.b16 %v2707
        %v2741 = vunpack.c.l.b16 %v2708
        %v2742 = vunpack.c.l.b16 %v2709
        %v2743 = vunpack.c.l.b16 %v2710
        %v2744 = vunpack.c.l.b16 %v2711
        %v2745 = vunpack.c.l.b16 %v2712
        %v2746 = vunpack.c.l.b16 %v2713
        %v2747 = vunpack.c.l.b16 %v2714
        %v2748 = vunpack.c.l.b16 %v2715
        %v2749 = vunpack.c.l.b16 %v2716
        %v2750 = vunpack.c.l.b16 %v2717
        %v2751 = vpack.c.b16 %v2736, %v2735
        %v2752 = vpack.c.b16 %v2738, %v2737
        %v2753 = vpack.c.b16 %v2740, %v2739
        %v2754 = vpack.c.b16 %v2742, %v2741
        %v2755 = vpack.c.b16 %v2744, %v2743
        %v2756 = vpack.c.b16 %v2746, %v2745
        %v2757 = vpack.c.b16 %v2748, %v2747
        %v2758 = vpack.c.b16 %v2750, %v2749
        %2767 = vmatprep.subr.bf16.mxu0 0
        %2768 = vmatpush1.bf16.msra.mxu0 %v2751
        %2769 = vmatprep.subr.bf16.mxu0 0
        %2770 = vmatpush1.bf16.msra.mxu0 %v2752
        %2771 = vmatprep.subr.bf16.mxu0 0
        %2772 = vmatpush1.bf16.msra.mxu0 %v2753
        %2773 = vmatprep.subr.bf16.mxu0 0
        %2774 = vmatpush1.bf16.msra.mxu0 %v2754
        %2775 = vmatprep.subr.bf16.mxu0 0
        %2776 = vmatpush1.bf16.msra.mxu0 %v2755
        %2777 = vmatprep.subr.bf16.mxu0 0
        %2778 = vmatpush1.bf16.msra.mxu0 %v2756
        %2779 = vmatprep.subr.bf16.mxu0 0
        %2780 = vmatpush1.bf16.msra.mxu0 %v2757
        %2781 = vmatprep.subr.bf16.mxu0 0
        %2782 = vmatpush1.bf16.msra.mxu0 %v2758
        %2783 = vmatprep.subr.bf16.mxu0 0
        %2784 = vmatpush1.bf16.msra.mxu0 0
        %2785 = vmatprep.subr.bf16.mxu0 0
        %2786 = vmatpush1.bf16.msra.mxu0 0
        %2787 = vmatprep.subr.bf16.mxu0 0
        %2788 = vmatpush1.bf16.msra.mxu0 0
        %2789 = vmatprep.subr.bf16.mxu0 0
        %2790 = vmatpush1.bf16.msra.mxu0 0
        %2791 = vmatprep.subr.bf16.mxu0 0
        %2792 = vmatpush1.bf16.msra.mxu0 0
        %2793 = vmatprep.subr.bf16.mxu0 0
        %2794 = vmatpush1.bf16.msra.mxu0 0
        %2795 = vmatprep.subr.bf16.mxu0 0
        %2796 = vmatpush1.bf16.msra.mxu0 0
        %2797 = vmatprep.subr.bf16.mxu0 0
        %2798 = vmatpush1.bf16.msra.mxu0 0
        %2799 = vmatprep.mubr.bf16.mxu0 0
        %2800 = vmatmul.mubr.bf16.gmra.mrb[0].mxu0 %v2701
        %v2801 = vpop.f32.mrb[0].mxu0
        %v2802 = vadd.f32 %v2718, %v2801
        %v2803 = vpop.f32.mrb[0].mxu0
        %v2804 = vpop.f32.mrb[0].mxu0
        %v2805 = vpop.f32.mrb[0].mxu0
        %2806 = vdwg.mxu0
        %2807 = vst [vmem:[%s860] sm:$0x1] %v2802
        %s2808 = sand.u32 %s463, 1
        %s2809 = scalar_lea.sflag [#allocation4], %s2808
        %s2810 = sand.u32 %s463, 1
        %s2811 = scalar_lea.vmem [#allocation29], %s2810
        // Predicated region
        $region165: #{tpu_custom_call.1} parent=95 // pred_check
          %p2812 = pneg %p473
        $region166: #{tpu_custom_call.1} parent=95 // pred_check_branch
          %2814 = sbr.rel (%p2812) target = $region168
        $region167: #{tpu_custom_call.1} parent=95 // pred_region
          %s2816 = ssub.s32 16, 16
          %2817 = vsyncadd %s2809, %s2816
          %s2818 = smul.addr %s46, 16
          %s2819 = scalar_lea.hbm %s19, %s2818
          %s2821 = sshll.u32 %s2811, 4
          %s2822 = int_to_ptr.vmem [resolvable:$true] %s2821
          %2824 = dma.vmem_to_hbm [thread:$0]  %s2822, 16, %s2819, %s2809
        $region168: #{tpu_custom_call.1} parent=95 // pred_fallthru
          _
      $region96: #{tpu_custom_call.1} parent=5 // pred_fallthru
        _
      %p2825 = scmp.le.s32.totalorder 2, %s41
      // Predicated region
      $region169: #{tpu_custom_call.1} parent=5 // pred_check
        %p2826 = pneg %p2825
      $region170: #{tpu_custom_call.1} parent=5 // pred_check_branch
        %2828 = sbr.rel (%p2826) target = $region172
      $region171: #{tpu_custom_call.1} parent=5 // pred_region
        %s2829 = ssub.s32 %s41, 2
        // Predicated region
        $region173: #{tpu_custom_call.1} parent=171 // pred_check
          %p2830 = pneg %p479
        $region174: #{tpu_custom_call.1} parent=171 // pred_check_branch
          %2832 = sbr.rel (%p2830) target = $region176
        $region175: #{tpu_custom_call.1} parent=171 // pred_region
          %s2833 = sand.u32 %s464, 1
          %s2834 = scalar_lea.sflag [#allocation4], %s2833
          %s2835 = sand.u32 %s464, 1
          %s2836 = scalar_lea.vmem [#allocation29], %s2835
          %2837 = dma.done %s2834, 16
        $region176: #{tpu_custom_call.1} parent=171 // pred_fallthru
          _
      $region172: #{tpu_custom_call.1} parent=5 // pred_fallthru
        _
    $region6: #{tpu_custom_call.1} parent=1 // loop_footer
      %s45 = sadd.s32 1, %s41
    $region7: #{tpu_custom_call.1} parent=1 // loop_footer_branch
      %40 = sbr.rel target = $region3
    $region8: #{tpu_custom_call.1} parent=1 // loop_exit
      _
    %2838 = vsyncpa [#allocation3], 1
    %s2839 = scalar_lea.sflag [#allocation3], 1
    %2840 = vsyncpa %s2839, 1
    %2841 = vsyncpa [#allocation6], 1
    %s2842 = scalar_lea.sflag [#allocation6], 1
    %2843 = vsyncpa %s2842, 1
    %2844 = vsyncpa [#allocation9], 1
    %2845 = vsyncpa [#allocation12], 1
    %2846 = vsyncpa [#allocation15], 1
    %2847 = vsyncpa [#allocation18], 1
    %2848 = vsyncpa [#allocation21], 1
    %2849 = vsyncpa [#allocation24], 1
    %2850 = vsyncpa [#allocation27], 1
    %2851 = vsyncpa [#allocation4], 1
    %s2852 = scalar_lea.sflag [#allocation4], 1
    %2853 = vsyncpa %s2852, 1

</llo_original>
